<compile_context>
chip_gen: v7x
topology: tpu7x:2x2x1
jax: 0.10.0
libtpu: 0.0.40
codegen_flags: <defaults>
</compile_context>

<pallas_src>
import functools

import jax
import jax.numpy as jnp
from jax.experimental import pallas as pl
from jax.experimental.pallas import tpu as pltpu

LN_EPS = 1e-5


def _ffn_kernel(x_ref, w1_ref, b1_ref, w2_ref, b2_ref, gamma_ref, beta_ref,
                o_ref):
    # x_ref: (tile_rows, model_dim) block of flattened tokens (input dtype).
    x = x_ref[...]
    x_f32 = x.astype(jnp.float32)

    # First linear + ReLU: bf16 MXU matmul, f32 accumulation; bias/ReLU in f32.
    h = jnp.dot(x.astype(jnp.bfloat16), w1_ref[...],
                preferred_element_type=jnp.float32)
    h = jnp.maximum(h + b1_ref[...], 0.0)

    # Second linear: hidden activation kept bf16 into the MXU (halves vreg /
    # spill pressure, native MXU precision), accumulate in f32.
    y = jnp.dot(h.astype(jnp.bfloat16), w2_ref[...],
                preferred_element_type=jnp.float32)

    # Bias + residual add in f32.
    y = y + b2_ref[...] + x_f32

    # LayerNorm over the last axis (model_dim), matching nn.LayerNorm (f32).
    mean = jnp.mean(y, axis=-1, keepdims=True)
    centered = y - mean
    var = jnp.mean(centered * centered, axis=-1, keepdims=True)
    out = centered * jax.lax.rsqrt(var + LN_EPS)
    out = out * gamma_ref[...] + beta_ref[...]

    o_ref[...] = out.astype(o_ref.dtype)


@functools.partial(jax.jit, static_argnames=("tile_rows",))
def positionwise_feed_forward(x, w1, b1, w2, b2, gamma, beta, *,
                              tile_rows=256):
    """x: (batch, seq, model_dim). Returns same shape/dtype."""
    batch, seq, model_dim = x.shape
    ffn_dim = w1.shape[1]
    rows = batch * seq

    # bf16 weights: native MXU dtype on v5e/v6e/v7x, halves weight DMA bytes
    # and VMEM footprint of the (double-buffered) invariant weight slabs.
    w1_bf = w1.astype(jnp.bfloat16)
    w2_bf = w2.astype(jnp.bfloat16)

    x2d = x.reshape(rows, model_dim)
    # Pad the row count to a multiple of tile_rows; padded rows are discarded.
    rows_padded = ((rows + tile_rows - 1) // tile_rows) * tile_rows
    if rows_padded != rows:
        x2d = jnp.pad(x2d, ((0, rows_padded - rows), (0, 0)))

    # Biases / scale / shift as (1, dim) f32 rows (TPU-friendly, f32 epilogue).
    b1_2d = b1.reshape(1, ffn_dim).astype(jnp.float32)
    b2_2d = b2.reshape(1, model_dim).astype(jnp.float32)
    gamma_2d = gamma.reshape(1, model_dim).astype(jnp.float32)
    beta_2d = beta.reshape(1, model_dim).astype(jnp.float32)

    grid = (rows_padded // tile_rows,)

    # Advisory cost estimate (two GEMMs) for XLA scheduling.
    flops = 4 * rows_padded * model_dim * ffn_dim
    bytes_accessed = (2 * rows_padded * model_dim * x.dtype.itemsize
                      + 2 * (model_dim * ffn_dim + ffn_dim * model_dim))

    # VMEM budget: double-buffered x/out f32 tiles + double-buffered bf16
    # weight slabs + headroom for the f32 hidden-activation slab.
    vmem_bytes = (2 * 2 * tile_rows * model_dim * 4
                  + 2 * 2 * (model_dim * ffn_dim + ffn_dim * model_dim)
                  + 2 * tile_rows * ffn_dim * 4)
    vmem_limit = int(min(max(2 * vmem_bytes, 32 * 1024 * 1024),
                         64 * 1024 * 1024))

    out2d = pl.pallas_call(
        _ffn_kernel,
        out_shape=jax.ShapeDtypeStruct((rows_padded, model_dim), x.dtype),
        grid_spec=pltpu.PrefetchScalarGridSpec(
            num_scalar_prefetch=0,
            grid=grid,
            in_specs=[
                pl.BlockSpec((tile_rows, model_dim), lambda i: (i, 0)),  # x
                pl.BlockSpec((model_dim, ffn_dim), lambda i: (0, 0)),    # w1
                pl.BlockSpec((1, ffn_dim), lambda i: (0, 0)),            # b1
                pl.BlockSpec((ffn_dim, model_dim), lambda i: (0, 0)),    # w2
                pl.BlockSpec((1, model_dim), lambda i: (0, 0)),          # b2
                pl.BlockSpec((1, model_dim), lambda i: (0, 0)),          # gamma
                pl.BlockSpec((1, model_dim), lambda i: (0, 0)),          # beta
            ],
            out_specs=pl.BlockSpec((tile_rows, model_dim), lambda i: (i, 0)),
        ),
        compiler_params=pltpu.CompilerParams(
            dimension_semantics=("parallel",),
            vmem_limit_bytes=vmem_limit),
        cost_estimate=pl.CostEstimate(
            flops=flops,
            transcendentals=rows_padded,
            bytes_accessed=bytes_accessed),
    )(x2d, w1_bf, b1_2d, w2_bf, b2_2d, gamma_2d, beta_2d)

    if rows_padded != rows:
        out2d = out2d[:rows]
    return out2d.reshape(batch, seq, model_dim)


def _init_params(key, model_dim, ffn_dim, dtype=jnp.float32):
    """Deterministic init mimicking nn.Linear defaults (uniform +/- 1/sqrt(fan_in))."""
    k1, k2, k3, k4 = jax.random.split(key, 4)
    bound1 = 1.0 / (model_dim ** 0.5)
    bound2 = 1.0 / (ffn_dim ** 0.5)
    # Stored as (in, out) so the kernel computes x @ W (equivalent to
    # PyTorch's x @ weight.T with weight of shape (out, in)).
    w1 = jax.random.uniform(k1, (model_dim, ffn_dim), dtype, -bound1, bound1)
    b1 = jax.random.uniform(k2, (ffn_dim,), dtype, -bound1, bound1)
    w2 = jax.random.uniform(k3, (ffn_dim, model_dim), dtype, -bound2, bound2)
    b2 = jax.random.uniform(k4, (model_dim,), dtype, -bound2, bound2)
    gamma = jnp.ones((model_dim,), dtype)   # nn.LayerNorm weight
    beta = jnp.zeros((model_dim,), dtype)   # nn.LayerNorm bias
    return w1, b1, w2, b2, gamma, beta


def _layer_norm(y, gamma, beta):
    mean = jnp.mean(y, axis=-1, keepdims=True)
    var = jnp.mean((y - mean) ** 2, axis=-1, keepdims=True)
    return (y - mean) / jnp.sqrt(var + LN_EPS) * gamma + beta


def _reference_bf16(x, w1, b1, w2, b2, gamma, beta):
    """Emulates the kernel's bf16-matmul / f32-accumulate numerics."""
    xb = x.astype(jnp.bfloat16).astype(jnp.float32)
    w1b = w1.astype(jnp.bfloat16).astype(jnp.float32)
    w2b = w2.astype(jnp.bfloat16).astype(jnp.float32)
    h = jnp.maximum(jnp.einsum("bsd,df->bsf", xb, w1b,
                               preferred_element_type=jnp.float32) + b1, 0.0)
    hb = h.astype(jnp.bfloat16).astype(jnp.float32)
    y = jnp.einsum("bsf,fd->bsd", hb, w2b,
                   preferred_element_type=jnp.float32) + b2 + x
    return _layer_norm(y, gamma, beta)


def _reference_f32(x, w1, b1, w2, b2, gamma, beta):
    """Full-f32 module semantics (loose sanity check vs bf16 matmuls)."""
    h = jnp.maximum(jnp.einsum("bsd,df->bsf", x, w1) + b1, 0.0)
    y = jnp.einsum("bsf,fd->bsd", h, w2) + b2 + x
    return _layer_norm(y, gamma, beta)


if __name__ == "__main__":
    # Small, shape-consistent instantiation of PositionwiseFeedForward.
    # rows = 2*192 = 384 -> padded to 512 with tile_rows=256 (2 grid steps),
    # exercising both the padding path and multi-step pipelining.
    batch, seq = 2, 192
    model_dim, ffn_dim = 256, 1024

    key = jax.random.PRNGKey(0)
    kx, kp = jax.random.split(key)

    x = jax.random.normal(kx, (batch, seq, model_dim), jnp.float32)
    params = _init_params(kp, model_dim, ffn_dim)

    out = positionwise_feed_forward(x, *params)
    out = jax.block_until_ready(out)

    assert out.shape == x.shape and out.dtype == x.dtype

    ref_bf16 = _reference_bf16(x, *params)
    err = float(jnp.max(jnp.abs(out - ref_bf16)))
    assert jnp.allclose(out, ref_bf16, atol=2e-3, rtol=2e-3), err

    ref_f32 = _reference_f32(x, *params)
    err32 = float(jnp.max(jnp.abs(out - ref_f32)))
    assert jnp.allclose(out, ref_f32, atol=5e-2, rtol=5e-2), err32

    print("KERNEL_OK")
</pallas_src>

<mosaic_0001>
module attributes {stable_mosaic.version = 11 : i64} {
  func.func @_ffn_kernel(%arg0: i32, %arg1: memref<256x256xf32, #tpu.memory_space<vmem>>, %arg2: memref<256x1024xbf16, #tpu.memory_space<vmem>>, %arg3: memref<1x1024xf32, #tpu.memory_space<vmem>>, %arg4: memref<1024x256xbf16, #tpu.memory_space<vmem>>, %arg5: memref<1x256xf32, #tpu.memory_space<vmem>>, %arg6: memref<1x256xf32, #tpu.memory_space<vmem>>, %arg7: memref<1x256xf32, #tpu.memory_space<vmem>>, %arg8: memref<256x256xf32, #tpu.memory_space<vmem>>) attributes {dimension_semantics = [#tpu.dimension_semantics<parallel>], iteration_bounds = array<i64: 2>, scalar_prefetch = 0 : i64, scratch_operands = 0 : i64, tpu.core_type = #tpu.core_type<tc>, window_params = [{transform_indices = @transform_0, window_bounds = array<i64: 256, 256>}, {pipeline_mode = #tpu.pipeline_mode<synchronous>, transform_indices = @transform_1, window_bounds = array<i64: 256, 1024>}, {pipeline_mode = #tpu.pipeline_mode<synchronous>, transform_indices = @transform_2, window_bounds = array<i64: 1, 1024>}, {pipeline_mode = #tpu.pipeline_mode<synchronous>, transform_indices = @transform_3, window_bounds = array<i64: 1024, 256>}, {pipeline_mode = #tpu.pipeline_mode<synchronous>, transform_indices = @transform_4, window_bounds = array<i64: 1, 256>}, {pipeline_mode = #tpu.pipeline_mode<synchronous>, transform_indices = @transform_5, window_bounds = array<i64: 1, 256>}, {pipeline_mode = #tpu.pipeline_mode<synchronous>, transform_indices = @transform_6, window_bounds = array<i64: 1, 256>}, {transform_indices = @transform_7, window_bounds = array<i64: 256, 256>}]} {
    %c0 = arith.constant 0 : index
    %c0_0 = arith.constant 0 : index
    %0 = vector.load %arg1[%c0, %c0_0] : memref<256x256xf32, #tpu.memory_space<vmem>>, vector<256x256xf32>
    %1 = arith.truncf %0 : vector<256x256xf32> to vector<256x256xbf16>
    %c0_1 = arith.constant 0 : index
    %c0_2 = arith.constant 0 : index
    %2 = vector.load %arg2[%c0_1, %c0_2] : memref<256x1024xbf16, #tpu.memory_space<vmem>>, vector<256x1024xbf16>
    %cst = arith.constant dense<0.000000e+00> : vector<256x1024xf32>
    %3 = tpu.matmul %1, %2, %cst {dimension_numbers = #tpu.dot_dimension_numbers<[1], [0], [0], [1], [0, 0, 1, 1], [], []>} : vector<256x256xbf16>, vector<256x1024xbf16>, vector<256x1024xf32> -> vector<256x1024xf32>
    %c0_3 = arith.constant 0 : index
    %c0_4 = arith.constant 0 : index
    %4 = vector.load %arg3[%c0_3, %c0_4] : memref<1x1024xf32, #tpu.memory_space<vmem>>, vector<1x1024xf32>
    %5 = vector.broadcast %4 : vector<1x1024xf32> to vector<256x1024xf32>
    %6 = arith.addf %3, %5 : vector<256x1024xf32>
    %cst_5 = arith.constant 0.000000e+00 : f32
    %7 = vector.broadcast %cst_5 : f32 to vector<256x1024xf32>
    %8 = arith.maximumf %6, %7 : vector<256x1024xf32>
    %9 = arith.truncf %8 : vector<256x1024xf32> to vector<256x1024xbf16>
    %c0_6 = arith.constant 0 : index
    %c0_7 = arith.constant 0 : index
    %10 = vector.load %arg4[%c0_6, %c0_7] : memref<1024x256xbf16, #tpu.memory_space<vmem>>, vector<1024x256xbf16>
    %cst_8 = arith.constant dense<0.000000e+00> : vector<256x256xf32>
    %11 = tpu.matmul %9, %10, %cst_8 {dimension_numbers = #tpu.dot_dimension_numbers<[1], [0], [0], [1], [0, 0, 1, 1], [], []>} : vector<256x1024xbf16>, vector<1024x256xbf16>, vector<256x256xf32> -> vector<256x256xf32>
    %c0_9 = arith.constant 0 : index
    %c0_10 = arith.constant 0 : index
    %12 = vector.load %arg5[%c0_9, %c0_10] : memref<1x256xf32, #tpu.memory_space<vmem>>, vector<1x256xf32>
    %13 = vector.broadcast %12 : vector<1x256xf32> to vector<256x256xf32>
    %14 = arith.addf %11, %13 : vector<256x256xf32>
    %15 = arith.addf %14, %0 : vector<256x256xf32>
    %cst_11 = arith.constant dense<0.000000e+00> : vector<256xf32>
    %16 = vector.multi_reduction <add>, %15, %cst_11 [1] : vector<256x256xf32> to vector<256xf32>
    %17 = vector.shape_cast %16 : vector<256xf32> to vector<256x1xf32>
    %cst_12 = arith.constant 2.560000e+02 : f32
    %18 = vector.broadcast %cst_12 : f32 to vector<256x1xf32>
    %19 = arith.divf %17, %18 : vector<256x1xf32>
    %20 = vector.broadcast %19 : vector<256x1xf32> to vector<256x256xf32>
    %21 = arith.subf %15, %20 : vector<256x256xf32>
    %22 = arith.mulf %21, %21 : vector<256x256xf32>
    %cst_13 = arith.constant dense<0.000000e+00> : vector<256xf32>
    %23 = vector.multi_reduction <add>, %22, %cst_13 [1] : vector<256x256xf32> to vector<256xf32>
    %24 = vector.shape_cast %23 : vector<256xf32> to vector<256x1xf32>
    %cst_14 = arith.constant 2.560000e+02 : f32
    %25 = vector.broadcast %cst_14 : f32 to vector<256x1xf32>
    %26 = arith.divf %24, %25 : vector<256x1xf32>
    %cst_15 = arith.constant 9.99999974E-6 : f32
    %27 = vector.broadcast %cst_15 : f32 to vector<256x1xf32>
    %28 = arith.addf %26, %27 : vector<256x1xf32>
    %29 = math.rsqrt %28 : vector<256x1xf32>
    %30 = vector.broadcast %29 : vector<256x1xf32> to vector<256x256xf32>
    %31 = arith.mulf %21, %30 : vector<256x256xf32>
    %c0_16 = arith.constant 0 : index
    %c0_17 = arith.constant 0 : index
    %32 = vector.load %arg6[%c0_16, %c0_17] : memref<1x256xf32, #tpu.memory_space<vmem>>, vector<1x256xf32>
    %33 = vector.broadcast %32 : vector<1x256xf32> to vector<256x256xf32>
    %34 = arith.mulf %31, %33 : vector<256x256xf32>
    %c0_18 = arith.constant 0 : index
    %c0_19 = arith.constant 0 : index
    %35 = vector.load %arg7[%c0_18, %c0_19] : memref<1x256xf32, #tpu.memory_space<vmem>>, vector<1x256xf32>
    %36 = vector.broadcast %35 : vector<1x256xf32> to vector<256x256xf32>
    %37 = arith.addf %34, %36 : vector<256x256xf32>
    %c0_20 = arith.constant 0 : index
    %c0_21 = arith.constant 0 : index
    %38 = vector.load %arg8[%c0_20, %c0_21] : memref<256x256xf32, #tpu.memory_space<vmem>>, vector<256x256xf32>
    tpu.vector_store %arg8[%c0_20, %c0_21], %37 {strides = array<i32>} : memref<256x256xf32, #tpu.memory_space<vmem>>, vector<256x256xf32>,
    return
  }
  func.func @transform_0(%arg0: i32) -> (i32, i32) {
    %c0_i32 = arith.constant 0 : i32
    %c0_i32_0 = arith.constant 0 : i32
    return %arg0, %c0_i32 : i32, i32
  }
  func.func @transform_1(%arg0: i32) -> (i32, i32) {
    %c0_i32 = arith.constant 0 : i32
    %c0_i32_0 = arith.constant 0 : i32
    %c0_i32_1 = arith.constant 0 : i32
    return %c0_i32, %c0_i32_0 : i32, i32
  }
  func.func @transform_2(%arg0: i32) -> (i32, i32) {
    %c0_i32 = arith.constant 0 : i32
    %c0_i32_0 = arith.constant 0 : i32
    %c0_i32_1 = arith.constant 0 : i32
    return %c0_i32, %c0_i32_0 : i32, i32
  }
  func.func @transform_3(%arg0: i32) -> (i32, i32) {
    %c0_i32 = arith.constant 0 : i32
    %c0_i32_0 = arith.constant 0 : i32
    %c0_i32_1 = arith.constant 0 : i32
    return %c0_i32, %c0_i32_0 : i32, i32
  }
  func.func @transform_4(%arg0: i32) -> (i32, i32) {
    %c0_i32 = arith.constant 0 : i32
    %c0_i32_0 = arith.constant 0 : i32
    %c0_i32_1 = arith.constant 0 : i32
    return %c0_i32, %c0_i32_0 : i32, i32
  }
  func.func @transform_5(%arg0: i32) -> (i32, i32) {
    %c0_i32 = arith.constant 0 : i32
    %c0_i32_0 = arith.constant 0 : i32
    %c0_i32_1 = arith.constant 0 : i32
    return %c0_i32, %c0_i32_0 : i32, i32
  }
  func.func @transform_6(%arg0: i32) -> (i32, i32) {
    %c0_i32 = arith.constant 0 : i32
    %c0_i32_0 = arith.constant 0 : i32
    %c0_i32_1 = arith.constant 0 : i32
    return %c0_i32, %c0_i32_0 : i32, i32
  }
  func.func @transform_7(%arg0: i32) -> (i32, i32) {
    %c0_i32 = arith.constant 0 : i32
    %c0_i32_0 = arith.constant 0 : i32
    return %arg0, %c0_i32 : i32, i32
  }
}

</mosaic_0001>

<llo_original>
// kernel: positionwise_feed_forward.1
$region0: #{positionwise_feed_forward.1}
  #allocation0 [shape = 'u32[]', space=smem, size = 0x4, offset = 0x4, fixed_abs, tag = 'smem constant byte address 0x4 - core index']
  #allocation1 [shape = 'u32[144,128]{1,0:T(1,128)}', space=vmem, size = 0x12000, scoped, tag = 'internal scratch']
  %s0 = inlined_call_operand.vmem [shape: f32[512,256], index: 0, kind: input, shape index: {}]
  %s1 = inlined_call_operand.vmem [shape: bf16[256,1024], index: 1, kind: input, shape index: {}]
  %s2 = inlined_call_operand.vmem [shape: f32[1,1024], index: 2, kind: input, shape index: {}]
  %s3 = inlined_call_operand.vmem [shape: bf16[1024,256], index: 3, kind: input, shape index: {}]
  %s4 = inlined_call_operand.vmem [shape: f32[1,256], index: 4, kind: input, shape index: {}]
  %s5 = inlined_call_operand.vmem [shape: f32[1,256], index: 5, kind: input, shape index: {}]
  %s6 = inlined_call_operand.vmem [shape: f32[1,256], index: 6, kind: input, shape index: {}]
  %s7 = inlined_call_operand.vmem [shape: f32[512,256], index: 7, kind: output, shape index: {}]
  %s8 = sld [smem:[#allocation0]]
  $region61: #{positionwise_feed_forward.1} parent=0
    _
  %s10 = ssub.s32 1, %s8
  %s11 = scalar_select 0, %s10, %s8
  loop: start=0, step=1, limit=4
  $region2: #{positionwise_feed_forward.1} parent=0 // loop_pre_header
    _
  $region3: #{positionwise_feed_forward.1} parent=0 // loop_header
    %s13 = sphi 0, %s17
    %p14 = scmp.ge.s32.totalorder %s13, 4
    %s23 = sphi 0, %s25
    %s26 = sphi 0, %s23
    %s27 = sphi 0, %s26
    %s43 = sphi 0, %s27
    %s47 = sphi 0, %s47
    %s49 = sphi 0, %s47
    %s50 = sphi 0, %s49
    %s64 = sphi 0, %s50
    %s68 = sphi 0, %s68
    %s70 = sphi 0, %s68
    %s71 = sphi 0, %s70
    %s85 = sphi 0, %s71
    %s89 = sphi 0, %s89
    %s91 = sphi 0, %s89
    %s92 = sphi 0, %s91
    %s106 = sphi 0, %s92
    %s110 = sphi 0, %s110
    %s112 = sphi 0, %s110
    %s113 = sphi 0, %s112
    %s127 = sphi 0, %s113
    %s131 = sphi 0, %s131
    %s133 = sphi 0, %s131
    %s134 = sphi 0, %s133
    %s148 = sphi 0, %s134
    %s152 = sphi 0, %s152
    %s154 = sphi 0, %s152
    %s155 = sphi 0, %s154
    %s169 = sphi 0, %s155
    %s175 = sphi 0, %s177
    %s178 = sphi 0, %s175
    %s179 = sphi 0, %s178
    %s195 = sphi 0, %s179
  $region4: #{positionwise_feed_forward.1} parent=0 // loop_header_branch
    %16 = sbr.rel (%p14) target = $region8
  $region5: #{positionwise_feed_forward.1} parent=0 // loop_body
    %s18 = ssub.s32 %s13, 1
    %s19 = ssub.s32 %s13, 2
    %s20 = sadd.s32 %s13, 1
    %s21 = ssub.s32 %s13, %s20
    %p22 = scmp.eq.s32.totalorder %s21, 0
    %s24 = sadd.s32 %s23, 1
    %s25 = scalar_select %p22, %s23, %s24
    %p28 = pneg %p22
    %p29 = scmp.eq.s32.totalorder %s13, 1
    %p30 = por %p28, %p29
    %p31 = scmp.ne.s32.totalorder %s23, %s26
    %p32 = scmp.eq.s32.totalorder %s13, 0
    %p33 = por %p31, %p32
    %p34 = scmp.ne.s32.totalorder %s23, %s26
    %p35 = scmp.eq.s32.totalorder %s18, 1
    %p36 = por %p34, %p35
    %p37 = scmp.ne.s32.totalorder %s26, %s27
    %p38 = scmp.eq.s32.totalorder %s18, 0
    %p39 = por %p37, %p38
    %p40 = scmp.ne.s32.totalorder %s26, %s27
    %p41 = scmp.eq.s32.totalorder %s19, 1
    %p42 = por %p40, %p41
    %p44 = scmp.ne.s32.totalorder %s27, %s43
    %p45 = scmp.eq.s32.totalorder %s19, 0
    %p46 = por %p44, %p45
    %s48 = sadd.s32 %s47, 1
    %p51 = scmp.eq.s32.totalorder %s13, 1
    %p52 = scmp.ne.s32.totalorder %s47, %s49
    %p53 = scmp.eq.s32.totalorder %s13, 0
    %p54 = por %p52, %p53
    %p55 = scmp.ne.s32.totalorder %s47, %s49
    %p56 = scmp.eq.s32.totalorder %s18, 1
    %p57 = por %p55, %p56
    %p58 = scmp.ne.s32.totalorder %s49, %s50
    %p59 = scmp.eq.s32.totalorder %s18, 0
    %p60 = por %p58, %p59
    %p61 = scmp.ne.s32.totalorder %s49, %s50
    %p62 = scmp.eq.s32.totalorder %s19, 1
    %p63 = por %p61, %p62
    %p65 = scmp.ne.s32.totalorder %s50, %s64
    %p66 = scmp.eq.s32.totalorder %s19, 0
    %p67 = por %p65, %p66
    %s69 = sadd.s32 %s68, 1
    %p72 = scmp.eq.s32.totalorder %s13, 1
    %p73 = scmp.ne.s32.totalorder %s68, %s70
    %p74 = scmp.eq.s32.totalorder %s13, 0
    %p75 = por %p73, %p74
    %p76 = scmp.ne.s32.totalorder %s68, %s70
    %p77 = scmp.eq.s32.totalorder %s18, 1
    %p78 = por %p76, %p77
    %p79 = scmp.ne.s32.totalorder %s70, %s71
    %p80 = scmp.eq.s32.totalorder %s18, 0
    %p81 = por %p79, %p80
    %p82 = scmp.ne.s32.totalorder %s70, %s71
    %p83 = scmp.eq.s32.totalorder %s19, 1
    %p84 = por %p82, %p83
    %p86 = scmp.ne.s32.totalorder %s71, %s85
    %p87 = scmp.eq.s32.totalorder %s19, 0
    %p88 = por %p86, %p87
    %s90 = sadd.s32 %s89, 1
    %p93 = scmp.eq.s32.totalorder %s13, 1
    %p94 = scmp.ne.s32.totalorder %s89, %s91
    %p95 = scmp.eq.s32.totalorder %s13, 0
    %p96 = por %p94, %p95
    %p97 = scmp.ne.s32.totalorder %s89, %s91
    %p98 = scmp.eq.s32.totalorder %s18, 1
    %p99 = por %p97, %p98
    %p100 = scmp.ne.s32.totalorder %s91, %s92
    %p101 = scmp.eq.s32.totalorder %s18, 0
    %p102 = por %p100, %p101
    %p103 = scmp.ne.s32.totalorder %s91, %s92
    %p104 = scmp.eq.s32.totalorder %s19, 1
    %p105 = por %p103, %p104
    %p107 = scmp.ne.s32.totalorder %s92, %s106
    %p108 = scmp.eq.s32.totalorder %s19, 0
    %p109 = por %p107, %p108
    %s111 = sadd.s32 %s110, 1
    %p114 = scmp.eq.s32.totalorder %s13, 1
    %p115 = scmp.ne.s32.totalorder %s110, %s112
    %p116 = scmp.eq.s32.totalorder %s13, 0
    %p117 = por %p115, %p116
    %p118 = scmp.ne.s32.totalorder %s110, %s112
    %p119 = scmp.eq.s32.totalorder %s18, 1
    %p120 = por %p118, %p119
    %p121 = scmp.ne.s32.totalorder %s112, %s113
    %p122 = scmp.eq.s32.totalorder %s18, 0
    %p123 = por %p121, %p122
    %p124 = scmp.ne.s32.totalorder %s112, %s113
    %p125 = scmp.eq.s32.totalorder %s19, 1
    %p126 = por %p124, %p125
    %p128 = scmp.ne.s32.totalorder %s113, %s127
    %p129 = scmp.eq.s32.totalorder %s19, 0
    %p130 = por %p128, %p129
    %s132 = sadd.s32 %s131, 1
    %p135 = scmp.eq.s32.totalorder %s13, 1
    %p136 = scmp.ne.s32.totalorder %s131, %s133
    %p137 = scmp.eq.s32.totalorder %s13, 0
    %p138 = por %p136, %p137
    %p139 = scmp.ne.s32.totalorder %s131, %s133
    %p140 = scmp.eq.s32.totalorder %s18, 1
    %p141 = por %p139, %p140
    %p142 = scmp.ne.s32.totalorder %s133, %s134
    %p143 = scmp.eq.s32.totalorder %s18, 0
    %p144 = por %p142, %p143
    %p145 = scmp.ne.s32.totalorder %s133, %s134
    %p146 = scmp.eq.s32.totalorder %s19, 1
    %p147 = por %p145, %p146
    %p149 = scmp.ne.s32.totalorder %s134, %s148
    %p150 = scmp.eq.s32.totalorder %s19, 0
    %p151 = por %p149, %p150
    %s153 = sadd.s32 %s152, 1
    %p156 = scmp.eq.s32.totalorder %s13, 1
    %p157 = scmp.ne.s32.totalorder %s152, %s154
    %p158 = scmp.eq.s32.totalorder %s13, 0
    %p159 = por %p157, %p158
    %p160 = scmp.ne.s32.totalorder %s152, %s154
    %p161 = scmp.eq.s32.totalorder %s18, 1
    %p162 = por %p160, %p161
    %p163 = scmp.ne.s32.totalorder %s154, %s155
    %p164 = scmp.eq.s32.totalorder %s18, 0
    %p165 = por %p163, %p164
    %p166 = scmp.ne.s32.totalorder %s154, %s155
    %p167 = scmp.eq.s32.totalorder %s19, 1
    %p168 = por %p166, %p167
    %p170 = scmp.ne.s32.totalorder %s155, %s169
    %p171 = scmp.eq.s32.totalorder %s19, 0
    %p172 = por %p170, %p171
    %s173 = ssub.s32 %s13, %s20
    %p174 = scmp.eq.s32.totalorder %s173, 0
    %s176 = sadd.s32 %s175, 1
    %s177 = scalar_select %p174, %s175, %s176
    %p180 = pneg %p174
    %p181 = scmp.eq.s32.totalorder %s13, 1
    %p182 = por %p180, %p181
    %p183 = scmp.ne.s32.totalorder %s175, %s178
    %p184 = scmp.eq.s32.totalorder %s13, 0
    %p185 = por %p183, %p184
    %p186 = scmp.ne.s32.totalorder %s175, %s178
    %p187 = scmp.eq.s32.totalorder %s18, 1
    %p188 = por %p186, %p187
    %p189 = scmp.ne.s32.totalorder %s178, %s179
    %p190 = scmp.eq.s32.totalorder %s18, 0
    %p191 = por %p189, %p190
    %p192 = scmp.ne.s32.totalorder %s178, %s179
    %p193 = scmp.eq.s32.totalorder %s19, 1
    %p194 = por %p192, %p193
    %p196 = scmp.ne.s32.totalorder %s179, %s195
    %p197 = scmp.eq.s32.totalorder %s19, 0
    %p198 = por %p196, %p197
    %p199 = scmp.le.s32.totalorder 1, %s13
    %p200 = scmp.lt.s32.totalorder %s13, 3
    %p201 = pnand %p199, %p200
    %p202 = pneg %p201
    // Predicated region
    $region9: #{positionwise_feed_forward.1} parent=5 // pred_check
      _
    $region10: #{positionwise_feed_forward.1} parent=5 // pred_check_branch
      %204 = sbr.rel (%p201) target = $region12
    $region11: #{positionwise_feed_forward.1} parent=5 // pred_region
      %s205 = ssub.s32 %s13, 1
      // Predicated region
      $region13: #{positionwise_feed_forward.1} parent=11 // pred_check
        %p206 = pneg %p60
      $region14: #{positionwise_feed_forward.1} parent=11 // pred_check_branch
        %208 = sbr.rel (%p206) target = $region16
      $region15: #{positionwise_feed_forward.1} parent=11 // pred_region
        _
      $region16: #{positionwise_feed_forward.1} parent=11 // pred_fallthru
        _
      // Predicated region
      $region17: #{positionwise_feed_forward.1} parent=11 // pred_check
        %p209 = pneg %p81
      $region18: #{positionwise_feed_forward.1} parent=11 // pred_check_branch
        %211 = sbr.rel (%p209) target = $region20
      $region19: #{positionwise_feed_forward.1} parent=11 // pred_region
        _
      $region20: #{positionwise_feed_forward.1} parent=11 // pred_fallthru
        _
      // Predicated region
      $region21: #{positionwise_feed_forward.1} parent=11 // pred_check
        %p212 = pneg %p102
      $region22: #{positionwise_feed_forward.1} parent=11 // pred_check_branch
        %214 = sbr.rel (%p212) target = $region24
      $region23: #{positionwise_feed_forward.1} parent=11 // pred_region
        _
      $region24: #{positionwise_feed_forward.1} parent=11 // pred_fallthru
        _
      // Predicated region
      $region25: #{positionwise_feed_forward.1} parent=11 // pred_check
        %p215 = pneg %p123
      $region26: #{positionwise_feed_forward.1} parent=11 // pred_check_branch
        %217 = sbr.rel (%p215) target = $region28
      $region27: #{positionwise_feed_forward.1} parent=11 // pred_region
        _
      $region28: #{positionwise_feed_forward.1} parent=11 // pred_fallthru
        _
      // Predicated region
      $region29: #{positionwise_feed_forward.1} parent=11 // pred_check
        %p218 = pneg %p144
      $region30: #{positionwise_feed_forward.1} parent=11 // pred_check_branch
        %220 = sbr.rel (%p218) target = $region32
      $region31: #{positionwise_feed_forward.1} parent=11 // pred_region
        _
      $region32: #{positionwise_feed_forward.1} parent=11 // pred_fallthru
        _
      // Predicated region
      $region33: #{positionwise_feed_forward.1} parent=11 // pred_check
        %p221 = pneg %p165
      $region34: #{positionwise_feed_forward.1} parent=11 // pred_check_branch
        %223 = sbr.rel (%p221) target = $region36
      $region35: #{positionwise_feed_forward.1} parent=11 // pred_region
        _
      $region36: #{positionwise_feed_forward.1} parent=11 // pred_fallthru
        _
    $region12: #{positionwise_feed_forward.1} parent=5 // pred_fallthru
      _
    %p224 = scmp.lt.s32.totalorder %s13, 2
    // Predicated region
    $region37: #{positionwise_feed_forward.1} parent=5 // pred_check
      %p225 = pneg %p224
    $region38: #{positionwise_feed_forward.1} parent=5 // pred_check_branch
      %227 = sbr.rel (%p225) target = $region40
    $region39: #{positionwise_feed_forward.1} parent=5 // pred_region
      // Predicated region
      $region41: #{positionwise_feed_forward.1} parent=39 // pred_check
        %p228 = pneg %p33
      $region42: #{positionwise_feed_forward.1} parent=39 // pred_check_branch
        %230 = sbr.rel (%p228) target = $region44
      $region43: #{positionwise_feed_forward.1} parent=39 // pred_region
        %s231 = smul.u32 32, %s13
        %p232 = scmp.lt.s32.totalorder %s231, 63
        %s233 = scalar_select %p232, %s231, 63
        %s234 = smul.addr %s233, 2
        %s235 = smul.addr %s234, 8
        %s236 = scalar_lea.vmem %s0, %s235
        %s237 = smul.u32 32, %s13
      $region44: #{positionwise_feed_forward.1} parent=39 // pred_fallthru
        _
    $region40: #{positionwise_feed_forward.1} parent=5 // pred_fallthru
      _
    %p238 = scmp.le.s32.totalorder 1, %s13
    %p239 = scmp.lt.s32.totalorder %s13, 3
    %p240 = pnand %p238, %p239
    %p241 = pneg %p240
    // Predicated region
    $region45: #{positionwise_feed_forward.1} parent=5 // pred_check
      _
    $region46: #{positionwise_feed_forward.1} parent=5 // pred_check_branch
      %243 = sbr.rel (%p240) target = $region48
    $region47: #{positionwise_feed_forward.1} parent=5 // pred_region
      %s244 = ssub.s32 %s13, 1
      %s245 = smul.u32 32, %s18
      %p246 = scmp.lt.s32.totalorder %s245, 63
      %s247 = scalar_select %p246, %s245, 63
      %s248 = smul.addr %s247, 2
      %s249 = smul.addr %s248, 8
      %s250 = scalar_lea.vmem %s0, %s249
      %p251 = pneg %p39
      %p252 = pneg %p36
      %p253 = pneg %p60
      %p254 = pneg %p57
      %p255 = pneg %p81
      %p256 = pneg %p78
      %p257 = pneg %p102
      %p258 = pneg %p99
      %p259 = pneg %p123
      %p260 = pneg %p120
      %p261 = pneg %p144
      %p262 = pneg %p141
      %p263 = pneg %p165
      %p264 = pneg %p162
      %p265 = pneg %p191
      %p266 = pneg %p188
      %s267 = smul.u32 32, %s18
      %p268 = scmp.lt.s32.totalorder %s267, 63
      %s269 = scalar_select %p268, %s267, 63
      %s270 = smul.addr %s269, 2
      %s271 = smul.addr %s270, 8
      %s272 = scalar_lea.vmem %s7, %s271
      %s273 = smul.u32 32, %s18
      %p274 = scmp.lt.s32.totalorder %s273, 63
      %s275 = scalar_select %p274, %s273, 63
      %s276 = smul.addr %s275, 2
      %s277 = smul.addr %s276, 8
      %s278 = scalar_lea.vmem %s0, %s277
      %s279 = smul.u32 32, %s18
      %s280 = smul.u32 32, %s18
      %p281 = scmp.lt.s32.totalorder %s280, 63
      %s282 = scalar_select %p281, %s280, 63
      %s283 = smul.addr %s282, 2
      %s284 = smul.addr %s283, 8
      %s285 = scalar_lea.vmem %s7, %s284
      %s286 = smul.u32 32, %s18
      %v287 = vld [vmem:[%s278] sm:$0xff]
      %v288 = vld [vmem:[%s278 + $0x8] sm:$0xff]
      %v289 = vld [vmem:[%s278 + $0x10] sm:$0xff]
      %v290 = vld [vmem:[%s278 + $0x18] sm:$0xff]
      %v291 = vld [vmem:[%s278 + $0x20] sm:$0xff]
      %v292 = vld [vmem:[%s278 + $0x28] sm:$0xff]
      %v293 = vld [vmem:[%s278 + $0x30] sm:$0xff]
      %v294 = vld [vmem:[%s278 + $0x38] sm:$0xff]
      %v295 = vld [vmem:[%s278 + $0x40] sm:$0xff]
      %v296 = vld [vmem:[%s278 + $0x48] sm:$0xff]
      %v297 = vld [vmem:[%s278 + $0x50] sm:$0xff]
      %v298 = vld [vmem:[%s278 + $0x58] sm:$0xff]
      %v299 = vld [vmem:[%s278 + $0x60] sm:$0xff]
      %v300 = vld [vmem:[%s278 + $0x68] sm:$0xff]
      %v301 = vld [vmem:[%s278 + $0x70] sm:$0xff]
      %v302 = vld [vmem:[%s278 + $0x78] sm:$0xff]
      %v303 = vld [vmem:[%s278 + $0x80] sm:$0xff]
      %v304 = vld [vmem:[%s278 + $0x88] sm:$0xff]
      %v305 = vld [vmem:[%s278 + $0x90] sm:$0xff]
      %v306 = vld [vmem:[%s278 + $0x98] sm:$0xff]
      %v307 = vld [vmem:[%s278 + $0xa0] sm:$0xff]
      %v308 = vld [vmem:[%s278 + $0xa8] sm:$0xff]
      %v309 = vld [vmem:[%s278 + $0xb0] sm:$0xff]
      %v310 = vld [vmem:[%s278 + $0xb8] sm:$0xff]
      %v311 = vld [vmem:[%s278 + $0xc0] sm:$0xff]
      %v312 = vld [vmem:[%s278 + $0xc8] sm:$0xff]
      %v313 = vld [vmem:[%s278 + $0xd0] sm:$0xff]
      %v314 = vld [vmem:[%s278 + $0xd8] sm:$0xff]
      %v315 = vld [vmem:[%s278 + $0xe0] sm:$0xff]
      %v316 = vld [vmem:[%s278 + $0xe8] sm:$0xff]
      %v317 = vld [vmem:[%s278 + $0xf0] sm:$0xff]
      %v318 = vld [vmem:[%s278 + $0xf8] sm:$0xff]
      %v319 = vld [vmem:[%s278 + $0x100] sm:$0xff]
      %v320 = vld [vmem:[%s278 + $0x108] sm:$0xff]
      %v321 = vld [vmem:[%s278 + $0x110] sm:$0xff]
      %v322 = vld [vmem:[%s278 + $0x118] sm:$0xff]
      %v323 = vld [vmem:[%s278 + $0x120] sm:$0xff]
      %v324 = vld [vmem:[%s278 + $0x128] sm:$0xff]
      %v325 = vld [vmem:[%s278 + $0x130] sm:$0xff]
      %v326 = vld [vmem:[%s278 + $0x138] sm:$0xff]
      %v327 = vld [vmem:[%s278 + $0x140] sm:$0xff]
      %v328 = vld [vmem:[%s278 + $0x148] sm:$0xff]
      %v329 = vld [vmem:[%s278 + $0x150] sm:$0xff]
      %v330 = vld [vmem:[%s278 + $0x158] sm:$0xff]
      %v331 = vld [vmem:[%s278 + $0x160] sm:$0xff]
      %v332 = vld [vmem:[%s278 + $0x168] sm:$0xff]
      %v333 = vld [vmem:[%s278 + $0x170] sm:$0xff]
      %v334 = vld [vmem:[%s278 + $0x178] sm:$0xff]
      %v335 = vld [vmem:[%s278 + $0x180] sm:$0xff]
      %v336 = vld [vmem:[%s278 + $0x188] sm:$0xff]
      %v337 = vld [vmem:[%s278 + $0x190] sm:$0xff]
      %v338 = vld [vmem:[%s278 + $0x198] sm:$0xff]
      %v339 = vld [vmem:[%s278 + $0x1a0] sm:$0xff]
      %v340 = vld [vmem:[%s278 + $0x1a8] sm:$0xff]
      %v341 = vld [vmem:[%s278 + $0x1b0] sm:$0xff]
      %v342 = vld [vmem:[%s278 + $0x1b8] sm:$0xff]
      %v343 = vld [vmem:[%s278 + $0x1c0] sm:$0xff]
      %v344 = vld [vmem:[%s278 + $0x1c8] sm:$0xff]
      %v345 = vld [vmem:[%s278 + $0x1d0] sm:$0xff]
      %v346 = vld [vmem:[%s278 + $0x1d8] sm:$0xff]
      %v347 = vld [vmem:[%s278 + $0x1e0] sm:$0xff]
      %v348 = vld [vmem:[%s278 + $0x1e8] sm:$0xff]
      %v349 = vld [vmem:[%s278 + $0x1f0] sm:$0xff]
      %v350 = vld [vmem:[%s278 + $0x1f8] sm:$0xff]
      %v351 = vpack.c.bf16 %v289, %v287
      %v352 = vpack.c.bf16 %v290, %v288
      %v353 = vpack.c.bf16 %v293, %v291
      %v354 = vpack.c.bf16 %v294, %v292
      %v355 = vpack.c.bf16 %v297, %v295
      %v356 = vpack.c.bf16 %v298, %v296
      %v357 = vpack.c.bf16 %v301, %v299
      %v358 = vpack.c.bf16 %v302, %v300
      %v359 = vpack.c.bf16 %v305, %v303
      %v360 = vpack.c.bf16 %v306, %v304
      %v361 = vpack.c.bf16 %v309, %v307
      %v362 = vpack.c.bf16 %v310, %v308
      %v363 = vpack.c.bf16 %v313, %v311
      %v364 = vpack.c.bf16 %v314, %v312
      %v365 = vpack.c.bf16 %v317, %v315
      %v366 = vpack.c.bf16 %v318, %v316
      %v367 = vpack.c.bf16 %v321, %v319
      %v368 = vpack.c.bf16 %v322, %v320
      %v369 = vpack.c.bf16 %v325, %v323
      %v370 = vpack.c.bf16 %v326, %v324
      %v371 = vpack.c.bf16 %v329, %v327
      %v372 = vpack.c.bf16 %v330, %v328
      %v373 = vpack.c.bf16 %v333, %v331
      %v374 = vpack.c.bf16 %v334, %v332
      %v375 = vpack.c.bf16 %v337, %v335
      %v376 = vpack.c.bf16 %v338, %v336
      %v377 = vpack.c.bf16 %v341, %v339
      %v378 = vpack.c.bf16 %v342, %v340
      %v379 = vpack.c.bf16 %v345, %v343
      %v380 = vpack.c.bf16 %v346, %v344
      %v381 = vpack.c.bf16 %v349, %v347
      %v382 = vpack.c.bf16 %v350, %v348
      %v383 = vld [vmem:[%s1] sm:$0xff]
      %v384 = vld [vmem:[%s1 + $0x8] sm:$0xff]
      %v385 = vld [vmem:[%s1 + $0x10] sm:$0xff]
      %v386 = vld [vmem:[%s1 + $0x18] sm:$0xff]
      %v387 = vld [vmem:[%s1 + $0x20] sm:$0xff]
      %v388 = vld [vmem:[%s1 + $0x28] sm:$0xff]
      %v389 = vld [vmem:[%s1 + $0x30] sm:$0xff]
      %v390 = vld [vmem:[%s1 + $0x38] sm:$0xff]
      %v391 = vld [vmem:[%s1 + $0x40] sm:$0xff]
      %v392 = vld [vmem:[%s1 + $0x48] sm:$0xff]
      %v393 = vld [vmem:[%s1 + $0x50] sm:$0xff]
      %v394 = vld [vmem:[%s1 + $0x58] sm:$0xff]
      %v395 = vld [vmem:[%s1 + $0x60] sm:$0xff]
      %v396 = vld [vmem:[%s1 + $0x68] sm:$0xff]
      %v397 = vld [vmem:[%s1 + $0x70] sm:$0xff]
      %v398 = vld [vmem:[%s1 + $0x78] sm:$0xff]
      %v399 = vld [vmem:[%s1 + $0x80] sm:$0xff]
      %v400 = vld [vmem:[%s1 + $0x88] sm:$0xff]
      %v401 = vld [vmem:[%s1 + $0x90] sm:$0xff]
      %v402 = vld [vmem:[%s1 + $0x98] sm:$0xff]
      %v403 = vld [vmem:[%s1 + $0xa0] sm:$0xff]
      %v404 = vld [vmem:[%s1 + $0xa8] sm:$0xff]
      %v405 = vld [vmem:[%s1 + $0xb0] sm:$0xff]
      %v406 = vld [vmem:[%s1 + $0xb8] sm:$0xff]
      %v407 = vld [vmem:[%s1 + $0xc0] sm:$0xff]
      %v408 = vld [vmem:[%s1 + $0xc8] sm:$0xff]
      %v409 = vld [vmem:[%s1 + $0xd0] sm:$0xff]
      %v410 = vld [vmem:[%s1 + $0xd8] sm:$0xff]
      %v411 = vld [vmem:[%s1 + $0xe0] sm:$0xff]
      %v412 = vld [vmem:[%s1 + $0xe8] sm:$0xff]
      %v413 = vld [vmem:[%s1 + $0xf0] sm:$0xff]
      %v414 = vld [vmem:[%s1 + $0xf8] sm:$0xff]
      %v415 = vld [vmem:[%s1 + $0x100] sm:$0xff]
      %v416 = vld [vmem:[%s1 + $0x108] sm:$0xff]
      %v417 = vld [vmem:[%s1 + $0x110] sm:$0xff]
      %v418 = vld [vmem:[%s1 + $0x118] sm:$0xff]
      %v419 = vld [vmem:[%s1 + $0x120] sm:$0xff]
      %v420 = vld [vmem:[%s1 + $0x128] sm:$0xff]
      %v421 = vld [vmem:[%s1 + $0x130] sm:$0xff]
      %v422 = vld [vmem:[%s1 + $0x138] sm:$0xff]
      %v423 = vld [vmem:[%s1 + $0x140] sm:$0xff]
      %v424 = vld [vmem:[%s1 + $0x148] sm:$0xff]
      %v425 = vld [vmem:[%s1 + $0x150] sm:$0xff]
      %v426 = vld [vmem:[%s1 + $0x158] sm:$0xff]
      %v427 = vld [vmem:[%s1 + $0x160] sm:$0xff]
      %v428 = vld [vmem:[%s1 + $0x168] sm:$0xff]
      %v429 = vld [vmem:[%s1 + $0x170] sm:$0xff]
      %v430 = vld [vmem:[%s1 + $0x178] sm:$0xff]
      %v431 = vld [vmem:[%s1 + $0x180] sm:$0xff]
      %v432 = vld [vmem:[%s1 + $0x188] sm:$0xff]
      %v433 = vld [vmem:[%s1 + $0x190] sm:$0xff]
      %v434 = vld [vmem:[%s1 + $0x198] sm:$0xff]
      %v435 = vld [vmem:[%s1 + $0x1a0] sm:$0xff]
      %v436 = vld [vmem:[%s1 + $0x1a8] sm:$0xff]
      %v437 = vld [vmem:[%s1 + $0x1b0] sm:$0xff]
      %v438 = vld [vmem:[%s1 + $0x1b8] sm:$0xff]
      %v439 = vld [vmem:[%s1 + $0x1c0] sm:$0xff]
      %v440 = vld [vmem:[%s1 + $0x1c8] sm:$0xff]
      %v441 = vld [vmem:[%s1 + $0x1d0] sm:$0xff]
      %v442 = vld [vmem:[%s1 + $0x1d8] sm:$0xff]
      %v443 = vld [vmem:[%s1 + $0x1e0] sm:$0xff]
      %v444 = vld [vmem:[%s1 + $0x1e8] sm:$0xff]
      %v445 = vld [vmem:[%s1 + $0x1f0] sm:$0xff]
      %v446 = vld [vmem:[%s1 + $0x1f8] sm:$0xff]
      %v447 = vld [vmem:[%s1 + $0x200] sm:$0xff]
      %v448 = vld [vmem:[%s1 + $0x208] sm:$0xff]
      %v449 = vld [vmem:[%s1 + $0x210] sm:$0xff]
      %v450 = vld [vmem:[%s1 + $0x218] sm:$0xff]
      %v451 = vld [vmem:[%s1 + $0x220] sm:$0xff]
      %v452 = vld [vmem:[%s1 + $0x228] sm:$0xff]
      %v453 = vld [vmem:[%s1 + $0x230] sm:$0xff]
      %v454 = vld [vmem:[%s1 + $0x238] sm:$0xff]
      %v455 = vld [vmem:[%s1 + $0x240] sm:$0xff]
      %v456 = vld [vmem:[%s1 + $0x248] sm:$0xff]
      %v457 = vld [vmem:[%s1 + $0x250] sm:$0xff]
      %v458 = vld [vmem:[%s1 + $0x258] sm:$0xff]
      %v459 = vld [vmem:[%s1 + $0x260] sm:$0xff]
      %v460 = vld [vmem:[%s1 + $0x268] sm:$0xff]
      %v461 = vld [vmem:[%s1 + $0x270] sm:$0xff]
      %v462 = vld [vmem:[%s1 + $0x278] sm:$0xff]
      %v463 = vld [vmem:[%s1 + $0x280] sm:$0xff]
      %v464 = vld [vmem:[%s1 + $0x288] sm:$0xff]
      %v465 = vld [vmem:[%s1 + $0x290] sm:$0xff]
      %v466 = vld [vmem:[%s1 + $0x298] sm:$0xff]
      %v467 = vld [vmem:[%s1 + $0x2a0] sm:$0xff]
      %v468 = vld [vmem:[%s1 + $0x2a8] sm:$0xff]
      %v469 = vld [vmem:[%s1 + $0x2b0] sm:$0xff]
      %v470 = vld [vmem:[%s1 + $0x2b8] sm:$0xff]
      %v471 = vld [vmem:[%s1 + $0x2c0] sm:$0xff]
      %v472 = vld [vmem:[%s1 + $0x2c8] sm:$0xff]
      %v473 = vld [vmem:[%s1 + $0x2d0] sm:$0xff]
      %v474 = vld [vmem:[%s1 + $0x2d8] sm:$0xff]
      %v475 = vld [vmem:[%s1 + $0x2e0] sm:$0xff]
      %v476 = vld [vmem:[%s1 + $0x2e8] sm:$0xff]
      %v477 = vld [vmem:[%s1 + $0x2f0] sm:$0xff]
      %v478 = vld [vmem:[%s1 + $0x2f8] sm:$0xff]
      %v479 = vld [vmem:[%s1 + $0x300] sm:$0xff]
      %v480 = vld [vmem:[%s1 + $0x308] sm:$0xff]
      %v481 = vld [vmem:[%s1 + $0x310] sm:$0xff]
      %v482 = vld [vmem:[%s1 + $0x318] sm:$0xff]
      %v483 = vld [vmem:[%s1 + $0x320] sm:$0xff]
      %v484 = vld [vmem:[%s1 + $0x328] sm:$0xff]
      %v485 = vld [vmem:[%s1 + $0x330] sm:$0xff]
      %v486 = vld [vmem:[%s1 + $0x338] sm:$0xff]
      %v487 = vld [vmem:[%s1 + $0x340] sm:$0xff]
      %v488 = vld [vmem:[%s1 + $0x348] sm:$0xff]
      %v489 = vld [vmem:[%s1 + $0x350] sm:$0xff]
      %v490 = vld [vmem:[%s1 + $0x358] sm:$0xff]
      %v491 = vld [vmem:[%s1 + $0x360] sm:$0xff]
      %v492 = vld [vmem:[%s1 + $0x368] sm:$0xff]
      %v493 = vld [vmem:[%s1 + $0x370] sm:$0xff]
      %v494 = vld [vmem:[%s1 + $0x378] sm:$0xff]
      %v495 = vld [vmem:[%s1 + $0x380] sm:$0xff]
      %v496 = vld [vmem:[%s1 + $0x388] sm:$0xff]
      %v497 = vld [vmem:[%s1 + $0x390] sm:$0xff]
      %v498 = vld [vmem:[%s1 + $0x398] sm:$0xff]
      %v499 = vld [vmem:[%s1 + $0x3a0] sm:$0xff]
      %v500 = vld [vmem:[%s1 + $0x3a8] sm:$0xff]
      %v501 = vld [vmem:[%s1 + $0x3b0] sm:$0xff]
      %v502 = vld [vmem:[%s1 + $0x3b8] sm:$0xff]
      %v503 = vld [vmem:[%s1 + $0x3c0] sm:$0xff]
      %v504 = vld [vmem:[%s1 + $0x3c8] sm:$0xff]
      %v505 = vld [vmem:[%s1 + $0x3d0] sm:$0xff]
      %v506 = vld [vmem:[%s1 + $0x3d8] sm:$0xff]
      %v507 = vld [vmem:[%s1 + $0x3e0] sm:$0xff]
      %v508 = vld [vmem:[%s1 + $0x3e8] sm:$0xff]
      %v509 = vld [vmem:[%s1 + $0x3f0] sm:$0xff]
      %v510 = vld [vmem:[%s1 + $0x3f8] sm:$0xff]
      %v511 = vld [vmem:[%s2] sm:$0xff]
      %v513 = vlaneseq
      %v514 = vshrl.u32 %v513, 7
      %v515 = vsub.s32 0, %v514
      %v516 = vrot.slane %v511, %v515
      %v517 = vlaneseq
      %v518 = vshrl.u32 %v517, 7
      %v519 = vsub.s32 1, %v518
      %v520 = vrot.slane %v511, %v519
      %v521 = vlaneseq
      %v522 = vshrl.u32 %v521, 7
      %v523 = vsub.s32 2, %v522
      %v524 = vrot.slane %v511, %v523
      %v525 = vlaneseq
      %v526 = vshrl.u32 %v525, 7
      %v527 = vsub.s32 3, %v526
      %v528 = vrot.slane %v511, %v527
      %v529 = vlaneseq
      %v530 = vshrl.u32 %v529, 7
      %v531 = vsub.s32 4, %v530
      %v532 = vrot.slane %v511, %v531
      %v533 = vlaneseq
      %v534 = vshrl.u32 %v533, 7
      %v535 = vsub.s32 5, %v534
      %v536 = vrot.slane %v511, %v535
      %v537 = vlaneseq
      %v538 = vshrl.u32 %v537, 7
      %v539 = vsub.s32 6, %v538
      %v540 = vrot.slane %v511, %v539
      %v541 = vlaneseq
      %v542 = vshrl.u32 %v541, 7
      %v543 = vsub.s32 7, %v542
      %v544 = vrot.slane %v511, %v543
      %v681 = vunpack.c.l.b16 %v383
      %v682 = vunpack.c.h.b16 %v383
      %v683 = vunpack.c.l.b16 %v384
      %v684 = vunpack.c.h.b16 %v384
      %v685 = vunpack.c.l.b16 %v385
      %v686 = vunpack.c.h.b16 %v385
      %v687 = vunpack.c.l.b16 %v386
      %v688 = vunpack.c.h.b16 %v386
      %v689 = vunpack.c.l.b16 %v387
      %v690 = vunpack.c.h.b16 %v387
      %v691 = vunpack.c.l.b16 %v388
      %v692 = vunpack.c.h.b16 %v388
      %v693 = vunpack.c.l.b16 %v389
      %v694 = vunpack.c.h.b16 %v389
      %v695 = vunpack.c.l.b16 %v390
      %v696 = vunpack.c.h.b16 %v390
      %v697 = vunpack.c.l.b16 %v391
      %v698 = vunpack.c.h.b16 %v391
      %v699 = vunpack.c.l.b16 %v392
      %v700 = vunpack.c.h.b16 %v392
      %v701 = vunpack.c.l.b16 %v393
      %v702 = vunpack.c.h.b16 %v393
      %v703 = vunpack.c.l.b16 %v394
      %v704 = vunpack.c.h.b16 %v394
      %v705 = vunpack.c.l.b16 %v395
      %v706 = vunpack.c.h.b16 %v395
      %v707 = vunpack.c.l.b16 %v396
      %v708 = vunpack.c.h.b16 %v396
      %v709 = vunpack.c.l.b16 %v397
      %v710 = vunpack.c.h.b16 %v397
      %v711 = vunpack.c.l.b16 %v398
      %v712 = vunpack.c.h.b16 %v398
      %v713 = vunpack.c.l.b16 %v399
      %v714 = vunpack.c.h.b16 %v399
      %v715 = vunpack.c.l.b16 %v400
      %v716 = vunpack.c.h.b16 %v400
      %v717 = vunpack.c.l.b16 %v401
      %v718 = vunpack.c.h.b16 %v401
      %v719 = vunpack.c.l.b16 %v402
      %v720 = vunpack.c.h.b16 %v402
      %v721 = vunpack.c.l.b16 %v403
      %v722 = vunpack.c.h.b16 %v403
      %v723 = vunpack.c.l.b16 %v404
      %v724 = vunpack.c.h.b16 %v404
      %v725 = vunpack.c.l.b16 %v405
      %v726 = vunpack.c.h.b16 %v405
      %v727 = vunpack.c.l.b16 %v406
      %v728 = vunpack.c.h.b16 %v406
      %v729 = vunpack.c.l.b16 %v407
      %v730 = vunpack.c.h.b16 %v407
      %v731 = vunpack.c.l.b16 %v408
      %v732 = vunpack.c.h.b16 %v408
      %v733 = vunpack.c.l.b16 %v409
      %v734 = vunpack.c.h.b16 %v409
      %v735 = vunpack.c.l.b16 %v410
      %v736 = vunpack.c.h.b16 %v410
      %v737 = vunpack.c.l.b16 %v411
      %v738 = vunpack.c.h.b16 %v411
      %v739 = vunpack.c.l.b16 %v412
      %v740 = vunpack.c.h.b16 %v412
      %v741 = vunpack.c.l.b16 %v413
      %v742 = vunpack.c.h.b16 %v413
      %v743 = vunpack.c.l.b16 %v414
      %v744 = vunpack.c.h.b16 %v414
      %v745 = vunpack.c.l.b16 %v415
      %v746 = vunpack.c.h.b16 %v415
      %v747 = vunpack.c.l.b16 %v416
      %v748 = vunpack.c.h.b16 %v416
      %v749 = vunpack.c.l.b16 %v417
      %v750 = vunpack.c.h.b16 %v417
      %v751 = vunpack.c.l.b16 %v418
      %v752 = vunpack.c.h.b16 %v418
      %v753 = vunpack.c.l.b16 %v419
      %v754 = vunpack.c.h.b16 %v419
      %v755 = vunpack.c.l.b16 %v420
      %v756 = vunpack.c.h.b16 %v420
      %v757 = vunpack.c.l.b16 %v421
      %v758 = vunpack.c.h.b16 %v421
      %v759 = vunpack.c.l.b16 %v422
      %v760 = vunpack.c.h.b16 %v422
      %v761 = vunpack.c.l.b16 %v423
      %v762 = vunpack.c.h.b16 %v423
      %v763 = vunpack.c.l.b16 %v424
      %v764 = vunpack.c.h.b16 %v424
      %v765 = vunpack.c.l.b16 %v425
      %v766 = vunpack.c.h.b16 %v425
      %v767 = vunpack.c.l.b16 %v426
      %v768 = vunpack.c.h.b16 %v426
      %v769 = vunpack.c.l.b16 %v427
      %v770 = vunpack.c.h.b16 %v427
      %v771 = vunpack.c.l.b16 %v428
      %v772 = vunpack.c.h.b16 %v428
      %v773 = vunpack.c.l.b16 %v429
      %v774 = vunpack.c.h.b16 %v429
      %v775 = vunpack.c.l.b16 %v430
      %v776 = vunpack.c.h.b16 %v430
      %v777 = vunpack.c.l.b16 %v431
      %v778 = vunpack.c.h.b16 %v431
      %v779 = vunpack.c.l.b16 %v432
      %v780 = vunpack.c.h.b16 %v432
      %v781 = vunpack.c.l.b16 %v433
      %v782 = vunpack.c.h.b16 %v433
      %v783 = vunpack.c.l.b16 %v434
      %v784 = vunpack.c.h.b16 %v434
      %v785 = vunpack.c.l.b16 %v435
      %v786 = vunpack.c.h.b16 %v435
      %v787 = vunpack.c.l.b16 %v436
      %v788 = vunpack.c.h.b16 %v436
      %v789 = vunpack.c.l.b16 %v437
      %v790 = vunpack.c.h.b16 %v437
      %v791 = vunpack.c.l.b16 %v438
      %v792 = vunpack.c.h.b16 %v438
      %v793 = vunpack.c.l.b16 %v439
      %v794 = vunpack.c.h.b16 %v439
      %v795 = vunpack.c.l.b16 %v440
      %v796 = vunpack.c.h.b16 %v440
      %v797 = vunpack.c.l.b16 %v441
      %v798 = vunpack.c.h.b16 %v441
      %v799 = vunpack.c.l.b16 %v442
      %v800 = vunpack.c.h.b16 %v442
      %v801 = vunpack.c.l.b16 %v443
      %v802 = vunpack.c.h.b16 %v443
      %v803 = vunpack.c.l.b16 %v444
      %v804 = vunpack.c.h.b16 %v444
      %v805 = vunpack.c.l.b16 %v445
      %v806 = vunpack.c.h.b16 %v445
      %v807 = vunpack.c.l.b16 %v446
      %v808 = vunpack.c.h.b16 %v446
      %v809 = vunpack.c.l.b16 %v447
      %v810 = vunpack.c.h.b16 %v447
      %v811 = vunpack.c.l.b16 %v448
      %v812 = vunpack.c.h.b16 %v448
      %v813 = vunpack.c.l.b16 %v449
      %v814 = vunpack.c.h.b16 %v449
      %v815 = vunpack.c.l.b16 %v450
      %v816 = vunpack.c.h.b16 %v450
      %v817 = vunpack.c.l.b16 %v451
      %v818 = vunpack.c.h.b16 %v451
      %v819 = vunpack.c.l.b16 %v452
      %v820 = vunpack.c.h.b16 %v452
      %v821 = vunpack.c.l.b16 %v453
      %v822 = vunpack.c.h.b16 %v453
      %v823 = vunpack.c.l.b16 %v454
      %v824 = vunpack.c.h.b16 %v454
      %v825 = vunpack.c.l.b16 %v455
      %v826 = vunpack.c.h.b16 %v455
      %v827 = vunpack.c.l.b16 %v456
      %v828 = vunpack.c.h.b16 %v456
      %v829 = vunpack.c.l.b16 %v457
      %v830 = vunpack.c.h.b16 %v457
      %v831 = vunpack.c.l.b16 %v458
      %v832 = vunpack.c.h.b16 %v458
      %v833 = vunpack.c.l.b16 %v459
      %v834 = vunpack.c.h.b16 %v459
      %v835 = vunpack.c.l.b16 %v460
      %v836 = vunpack.c.h.b16 %v460
      %v837 = vunpack.c.l.b16 %v461
      %v838 = vunpack.c.h.b16 %v461
      %v839 = vunpack.c.l.b16 %v462
      %v840 = vunpack.c.h.b16 %v462
      %v841 = vunpack.c.l.b16 %v463
      %v842 = vunpack.c.h.b16 %v463
      %v843 = vunpack.c.l.b16 %v464
      %v844 = vunpack.c.h.b16 %v464
      %v845 = vunpack.c.l.b16 %v465
      %v846 = vunpack.c.h.b16 %v465
      %v847 = vunpack.c.l.b16 %v466
      %v848 = vunpack.c.h.b16 %v466
      %v849 = vunpack.c.l.b16 %v467
      %v850 = vunpack.c.h.b16 %v467
      %v851 = vunpack.c.l.b16 %v468
      %v852 = vunpack.c.h.b16 %v468
      %v853 = vunpack.c.l.b16 %v469
      %v854 = vunpack.c.h.b16 %v469
      %v855 = vunpack.c.l.b16 %v470
      %v856 = vunpack.c.h.b16 %v470
      %v857 = vunpack.c.l.b16 %v471
      %v858 = vunpack.c.h.b16 %v471
      %v859 = vunpack.c.l.b16 %v472
      %v860 = vunpack.c.h.b16 %v472
      %v861 = vunpack.c.l.b16 %v473
      %v862 = vunpack.c.h.b16 %v473
      %v863 = vunpack.c.l.b16 %v474
      %v864 = vunpack.c.h.b16 %v474
      %v865 = vunpack.c.l.b16 %v475
      %v866 = vunpack.c.h.b16 %v475
      %v867 = vunpack.c.l.b16 %v476
      %v868 = vunpack.c.h.b16 %v476
      %v869 = vunpack.c.l.b16 %v477
      %v870 = vunpack.c.h.b16 %v477
      %v871 = vunpack.c.l.b16 %v478
      %v872 = vunpack.c.h.b16 %v478
      %v873 = vunpack.c.l.b16 %v479
      %v874 = vunpack.c.h.b16 %v479
      %v875 = vunpack.c.l.b16 %v480
      %v876 = vunpack.c.h.b16 %v480
      %v877 = vunpack.c.l.b16 %v481
      %v878 = vunpack.c.h.b16 %v481
      %v879 = vunpack.c.l.b16 %v482
      %v880 = vunpack.c.h.b16 %v482
      %v881 = vunpack.c.l.b16 %v483
      %v882 = vunpack.c.h.b16 %v483
      %v883 = vunpack.c.l.b16 %v484
      %v884 = vunpack.c.h.b16 %v484
      %v885 = vunpack.c.l.b16 %v485
      %v886 = vunpack.c.h.b16 %v485
      %v887 = vunpack.c.l.b16 %v486
      %v888 = vunpack.c.h.b16 %v486
      %v889 = vunpack.c.l.b16 %v487
      %v890 = vunpack.c.h.b16 %v487
      %v891 = vunpack.c.l.b16 %v488
      %v892 = vunpack.c.h.b16 %v488
      %v893 = vunpack.c.l.b16 %v489
      %v894 = vunpack.c.h.b16 %v489
      %v895 = vunpack.c.l.b16 %v490
      %v896 = vunpack.c.h.b16 %v490
      %v897 = vunpack.c.l.b16 %v491
      %v898 = vunpack.c.h.b16 %v491
      %v899 = vunpack.c.l.b16 %v492
      %v900 = vunpack.c.h.b16 %v492
      %v901 = vunpack.c.l.b16 %v493
      %v902 = vunpack.c.h.b16 %v493
      %v903 = vunpack.c.l.b16 %v494
      %v904 = vunpack.c.h.b16 %v494
      %v905 = vunpack.c.l.b16 %v495
      %v906 = vunpack.c.h.b16 %v495
      %v907 = vunpack.c.l.b16 %v496
      %v908 = vunpack.c.h.b16 %v496
      %v909 = vunpack.c.l.b16 %v497
      %v910 = vunpack.c.h.b16 %v497
      %v911 = vunpack.c.l.b16 %v498
      %v912 = vunpack.c.h.b16 %v498
      %v913 = vunpack.c.l.b16 %v499
      %v914 = vunpack.c.h.b16 %v499
      %v915 = vunpack.c.l.b16 %v500
      %v916 = vunpack.c.h.b16 %v500
      %v917 = vunpack.c.l.b16 %v501
      %v918 = vunpack.c.h.b16 %v501
      %v919 = vunpack.c.l.b16 %v502
      %v920 = vunpack.c.h.b16 %v502
      %v921 = vunpack.c.l.b16 %v503
      %v922 = vunpack.c.h.b16 %v503
      %v923 = vunpack.c.l.b16 %v504
      %v924 = vunpack.c.h.b16 %v504
      %v925 = vunpack.c.l.b16 %v505
      %v926 = vunpack.c.h.b16 %v505
      %v927 = vunpack.c.l.b16 %v506
      %v928 = vunpack.c.h.b16 %v506
      %v929 = vunpack.c.l.b16 %v507
      %v930 = vunpack.c.h.b16 %v507
      %v931 = vunpack.c.l.b16 %v508
      %v932 = vunpack.c.h.b16 %v508
      %v933 = vunpack.c.l.b16 %v509
      %v934 = vunpack.c.h.b16 %v509
      %v935 = vunpack.c.l.b16 %v510
      %v936 = vunpack.c.h.b16 %v510
      %v937 = vpack.c.b16 %v689, %v681
      %v938 = vpack.c.b16 %v690, %v682
      %v939 = vpack.c.b16 %v691, %v683
      %v940 = vpack.c.b16 %v692, %v684
      %v941 = vpack.c.b16 %v693, %v685
      %v942 = vpack.c.b16 %v694, %v686
      %v943 = vpack.c.b16 %v695, %v687
      %v944 = vpack.c.b16 %v696, %v688
      %v945 = vpack.c.b16 %v705, %v697
      %v946 = vpack.c.b16 %v706, %v698
      %v947 = vpack.c.b16 %v707, %v699
      %v948 = vpack.c.b16 %v708, %v700
      %v949 = vpack.c.b16 %v709, %v701
      %v950 = vpack.c.b16 %v710, %v702
      %v951 = vpack.c.b16 %v711, %v703
      %v952 = vpack.c.b16 %v712, %v704
      %v953 = vpack.c.b16 %v721, %v713
      %v954 = vpack.c.b16 %v722, %v714
      %v955 = vpack.c.b16 %v723, %v715
      %v956 = vpack.c.b16 %v724, %v716
      %v957 = vpack.c.b16 %v725, %v717
      %v958 = vpack.c.b16 %v726, %v718
      %v959 = vpack.c.b16 %v727, %v719
      %v960 = vpack.c.b16 %v728, %v720
      %v961 = vpack.c.b16 %v737, %v729
      %v962 = vpack.c.b16 %v738, %v730
      %v963 = vpack.c.b16 %v739, %v731
      %v964 = vpack.c.b16 %v740, %v732
      %v965 = vpack.c.b16 %v741, %v733
      %v966 = vpack.c.b16 %v742, %v734
      %v967 = vpack.c.b16 %v743, %v735
      %v968 = vpack.c.b16 %v744, %v736
      %v969 = vpack.c.b16 %v753, %v745
      %v970 = vpack.c.b16 %v754, %v746
      %v971 = vpack.c.b16 %v755, %v747
      %v972 = vpack.c.b16 %v756, %v748
      %v973 = vpack.c.b16 %v757, %v749
      %v974 = vpack.c.b16 %v758, %v750
      %v975 = vpack.c.b16 %v759, %v751
      %v976 = vpack.c.b16 %v760, %v752
      %v977 = vpack.c.b16 %v769, %v761
      %v978 = vpack.c.b16 %v770, %v762
      %v979 = vpack.c.b16 %v771, %v763
      %v980 = vpack.c.b16 %v772, %v764
      %v981 = vpack.c.b16 %v773, %v765
      %v982 = vpack.c.b16 %v774, %v766
      %v983 = vpack.c.b16 %v775, %v767
      %v984 = vpack.c.b16 %v776, %v768
      %v985 = vpack.c.b16 %v785, %v777
      %v986 = vpack.c.b16 %v786, %v778
      %v987 = vpack.c.b16 %v787, %v779
      %v988 = vpack.c.b16 %v788, %v780
      %v989 = vpack.c.b16 %v789, %v781
      %v990 = vpack.c.b16 %v790, %v782
      %v991 = vpack.c.b16 %v791, %v783
      %v992 = vpack.c.b16 %v792, %v784
      %v993 = vpack.c.b16 %v801, %v793
      %v994 = vpack.c.b16 %v802, %v794
      %v995 = vpack.c.b16 %v803, %v795
      %v996 = vpack.c.b16 %v804, %v796
      %v997 = vpack.c.b16 %v805, %v797
      %v998 = vpack.c.b16 %v806, %v798
      %v999 = vpack.c.b16 %v807, %v799
      %v1000 = vpack.c.b16 %v808, %v800
      %v1001 = vpack.c.b16 %v817, %v809
      %v1002 = vpack.c.b16 %v818, %v810
      %v1003 = vpack.c.b16 %v819, %v811
      %v1004 = vpack.c.b16 %v820, %v812
      %v1005 = vpack.c.b16 %v821, %v813
      %v1006 = vpack.c.b16 %v822, %v814
      %v1007 = vpack.c.b16 %v823, %v815
      %v1008 = vpack.c.b16 %v824, %v816
      %v1009 = vpack.c.b16 %v833, %v825
      %v1010 = vpack.c.b16 %v834, %v826
      %v1011 = vpack.c.b16 %v835, %v827
      %v1012 = vpack.c.b16 %v836, %v828
      %v1013 = vpack.c.b16 %v837, %v829
      %v1014 = vpack.c.b16 %v838, %v830
      %v1015 = vpack.c.b16 %v839, %v831
      %v1016 = vpack.c.b16 %v840, %v832
      %v1017 = vpack.c.b16 %v849, %v841
      %v1018 = vpack.c.b16 %v850, %v842
      %v1019 = vpack.c.b16 %v851, %v843
      %v1020 = vpack.c.b16 %v852, %v844
      %v1021 = vpack.c.b16 %v853, %v845
      %v1022 = vpack.c.b16 %v854, %v846
      %v1023 = vpack.c.b16 %v855, %v847
      %v1024 = vpack.c.b16 %v856, %v848
      %v1025 = vpack.c.b16 %v865, %v857
      %v1026 = vpack.c.b16 %v866, %v858
      %v1027 = vpack.c.b16 %v867, %v859
      %v1028 = vpack.c.b16 %v868, %v860
      %v1029 = vpack.c.b16 %v869, %v861
      %v1030 = vpack.c.b16 %v870, %v862
      %v1031 = vpack.c.b16 %v871, %v863
      %v1032 = vpack.c.b16 %v872, %v864
      %v1033 = vpack.c.b16 %v881, %v873
      %v1034 = vpack.c.b16 %v882, %v874
      %v1035 = vpack.c.b16 %v883, %v875
      %v1036 = vpack.c.b16 %v884, %v876
      %v1037 = vpack.c.b16 %v885, %v877
      %v1038 = vpack.c.b16 %v886, %v878
      %v1039 = vpack.c.b16 %v887, %v879
      %v1040 = vpack.c.b16 %v888, %v880
      %v1041 = vpack.c.b16 %v897, %v889
      %v1042 = vpack.c.b16 %v898, %v890
      %v1043 = vpack.c.b16 %v899, %v891
      %v1044 = vpack.c.b16 %v900, %v892
      %v1045 = vpack.c.b16 %v901, %v893
      %v1046 = vpack.c.b16 %v902, %v894
      %v1047 = vpack.c.b16 %v903, %v895
      %v1048 = vpack.c.b16 %v904, %v896
      %v1049 = vpack.c.b16 %v913, %v905
      %v1050 = vpack.c.b16 %v914, %v906
      %v1051 = vpack.c.b16 %v915, %v907
      %v1052 = vpack.c.b16 %v916, %v908
      %v1053 = vpack.c.b16 %v917, %v909
      %v1054 = vpack.c.b16 %v918, %v910
      %v1055 = vpack.c.b16 %v919, %v911
      %v1056 = vpack.c.b16 %v920, %v912
      %v1057 = vpack.c.b16 %v929, %v921
      %v1058 = vpack.c.b16 %v930, %v922
      %v1059 = vpack.c.b16 %v931, %v923
      %v1060 = vpack.c.b16 %v932, %v924
      %v1061 = vpack.c.b16 %v933, %v925
      %v1062 = vpack.c.b16 %v934, %v926
      %v1063 = vpack.c.b16 %v935, %v927
      %v1064 = vpack.c.b16 %v936, %v928
      %1193 = vmatprep.subr.bf16.mxu0 %v938
      %1194 = vmatpush1.bf16.msra.mxu0 %v937
      %1195 = vmatprep.subr.bf16.mxu0 %v946
      %1196 = vmatpush1.bf16.msra.mxu0 %v945
      %1197 = vmatprep.subr.bf16.mxu0 %v954
      %1198 = vmatpush1.bf16.msra.mxu0 %v953
      %1199 = vmatprep.subr.bf16.mxu0 %v962
      %1200 = vmatpush1.bf16.msra.mxu0 %v961
      %1201 = vmatprep.subr.bf16.mxu0 %v970
      %1202 = vmatpush1.bf16.msra.mxu0 %v969
      %1203 = vmatprep.subr.bf16.mxu0 %v978
      %1204 = vmatpush1.bf16.msra.mxu0 %v977
      %1205 = vmatprep.subr.bf16.mxu0 %v986
      %1206 = vmatpush1.bf16.msra.mxu0 %v985
      %1207 = vmatprep.subr.bf16.mxu0 %v994
      %1208 = vmatpush1.bf16.msra.mxu0 %v993
      %1209 = vmatprep.subr.bf16.mxu0 %v1002
      %1210 = vmatpush1.bf16.msra.mxu0 %v1001
      %1211 = vmatprep.subr.bf16.mxu0 %v1010
      %1212 = vmatpush1.bf16.msra.mxu0 %v1009
      %1213 = vmatprep.subr.bf16.mxu0 %v1018
      %1214 = vmatpush1.bf16.msra.mxu0 %v1017
      %1215 = vmatprep.subr.bf16.mxu0 %v1026
      %1216 = vmatpush1.bf16.msra.mxu0 %v1025
      %1217 = vmatprep.subr.bf16.mxu0 %v1034
      %1218 = vmatpush1.bf16.msra.mxu0 %v1033
      %1219 = vmatprep.subr.bf16.mxu0 %v1042
      %1220 = vmatpush1.bf16.msra.mxu0 %v1041
      %1221 = vmatprep.subr.bf16.mxu0 %v1050
      %1222 = vmatpush1.bf16.msra.mxu0 %v1049
      %1223 = vmatprep.subr.bf16.mxu0 %v1058
      %1224 = vmatpush1.bf16.msra.mxu0 %v1057
      %1225 = vmatprep.mubr.bf16.mxu0 %v352
      %1226 = vmatmul.mubr.bf16.gmra.mrb[0].mxu0 %v351
      %v1227 = vpop.f32.mrb[0].mxu0
      %v1228 = vadd.f32 %v516, %v1227
      %v1229 = vpop.f32.mrb[0].mxu0
      %v1230 = vadd.f32 %v520, %v1229
      %v1231 = vpop.f32.mrb[0].mxu0
      %v1232 = vadd.f32 %v516, %v1231
      %v1233 = vpop.f32.mrb[0].mxu0
      %v1234 = vadd.f32 %v520, %v1233
      %1235 = vmatprep.mubr.bf16.mxu0 %v354
      %1236 = vmatmul.mubr.bf16.gmra.mrb[0].mxu0 %v353
      %v1237 = vpop.f32.mrb[0].mxu0
      %v1238 = vadd.f32 %v516, %v1237
      %v1239 = vpop.f32.mrb[0].mxu0
      %v1240 = vadd.f32 %v520, %v1239
      %v1241 = vpop.f32.mrb[0].mxu0
      %v1242 = vadd.f32 %v516, %v1241
      %v1243 = vpop.f32.mrb[0].mxu0
      %v1244 = vadd.f32 %v520, %v1243
      %1245 = vmatprep.mubr.bf16.mxu0 %v356
      %1246 = vmatmul.mubr.bf16.gmra.mrb[0].mxu0 %v355
      %v1247 = vpop.f32.mrb[0].mxu0
      %v1248 = vadd.f32 %v516, %v1247
      %v1249 = vpop.f32.mrb[0].mxu0
      %v1250 = vadd.f32 %v520, %v1249
      %v1251 = vpop.f32.mrb[0].mxu0
      %v1252 = vadd.f32 %v516, %v1251
      %v1253 = vpop.f32.mrb[0].mxu0
      %v1254 = vadd.f32 %v520, %v1253
      %1255 = vmatprep.mubr.bf16.mxu0 %v358
      %1256 = vmatmul.mubr.bf16.gmra.mrb[0].mxu0 %v357
      %v1257 = vpop.f32.mrb[0].mxu0
      %v1258 = vadd.f32 %v516, %v1257
      %v1259 = vpop.f32.mrb[0].mxu0
      %v1260 = vadd.f32 %v520, %v1259
      %v1261 = vpop.f32.mrb[0].mxu0
      %v1262 = vadd.f32 %v516, %v1261
      %v1263 = vpop.f32.mrb[0].mxu0
      %v1264 = vadd.f32 %v520, %v1263
      %1265 = vmatprep.mubr.bf16.mxu0 %v360
      %1266 = vmatmul.mubr.bf16.gmra.mrb[0].mxu0 %v359
      %v1267 = vpop.f32.mrb[0].mxu0
      %v1268 = vadd.f32 %v516, %v1267
      %v1269 = vpop.f32.mrb[0].mxu0
      %v1270 = vadd.f32 %v520, %v1269
      %v1271 = vpop.f32.mrb[0].mxu0
      %v1272 = vadd.f32 %v516, %v1271
      %v1273 = vpop.f32.mrb[0].mxu0
      %v1274 = vadd.f32 %v520, %v1273
      %1275 = vmatprep.mubr.bf16.mxu0 %v362
      %1276 = vmatmul.mubr.bf16.gmra.mrb[0].mxu0 %v361
      %v1277 = vpop.f32.mrb[0].mxu0
      %v1278 = vadd.f32 %v516, %v1277
      %v1279 = vpop.f32.mrb[0].mxu0
      %v1280 = vadd.f32 %v520, %v1279
      %v1281 = vpop.f32.mrb[0].mxu0
      %v1282 = vadd.f32 %v516, %v1281
      %v1283 = vpop.f32.mrb[0].mxu0
      %v1284 = vadd.f32 %v520, %v1283
      %1285 = vmatprep.mubr.bf16.mxu0 %v364
      %1286 = vmatmul.mubr.bf16.gmra.mrb[0].mxu0 %v363
      %v1287 = vpop.f32.mrb[0].mxu0
      %v1288 = vadd.f32 %v516, %v1287
      %v1289 = vpop.f32.mrb[0].mxu0
      %v1290 = vadd.f32 %v520, %v1289
      %v1291 = vpop.f32.mrb[0].mxu0
      %v1292 = vadd.f32 %v516, %v1291
      %v1293 = vpop.f32.mrb[0].mxu0
      %v1294 = vadd.f32 %v520, %v1293
      %1295 = vmatprep.mubr.bf16.mxu0 %v366
      %1296 = vmatmul.mubr.bf16.gmra.mrb[0].mxu0 %v365
      %v1297 = vpop.f32.mrb[0].mxu0
      %v1298 = vadd.f32 %v516, %v1297
      %v1299 = vpop.f32.mrb[0].mxu0
      %v1300 = vadd.f32 %v520, %v1299
      %v1301 = vpop.f32.mrb[0].mxu0
      %v1302 = vadd.f32 %v516, %v1301
      %v1303 = vpop.f32.mrb[0].mxu0
      %v1304 = vadd.f32 %v520, %v1303
      %1305 = vmatprep.mubr.bf16.mxu0 %v368
      %1306 = vmatmul.mubr.bf16.gmra.mrb[0].mxu0 %v367
      %v1307 = vpop.f32.mrb[0].mxu0
      %v1308 = vadd.f32 %v516, %v1307
      %v1309 = vpop.f32.mrb[0].mxu0
      %v1310 = vadd.f32 %v520, %v1309
      %v1311 = vpop.f32.mrb[0].mxu0
      %v1312 = vadd.f32 %v516, %v1311
      %v1313 = vpop.f32.mrb[0].mxu0
      %v1314 = vadd.f32 %v520, %v1313
      %1315 = vmatprep.mubr.bf16.mxu0 %v370
      %1316 = vmatmul.mubr.bf16.gmra.mrb[0].mxu0 %v369
      %v1317 = vpop.f32.mrb[0].mxu0
      %v1318 = vadd.f32 %v516, %v1317
      %v1319 = vpop.f32.mrb[0].mxu0
      %v1320 = vadd.f32 %v520, %v1319
      %v1321 = vpop.f32.mrb[0].mxu0
      %v1322 = vadd.f32 %v516, %v1321
      %v1323 = vpop.f32.mrb[0].mxu0
      %v1324 = vadd.f32 %v520, %v1323
      %1325 = vmatprep.mubr.bf16.mxu0 %v372
      %1326 = vmatmul.mubr.bf16.gmra.mrb[0].mxu0 %v371
      %v1327 = vpop.f32.mrb[0].mxu0
      %v1328 = vadd.f32 %v516, %v1327
      %v1329 = vpop.f32.mrb[0].mxu0
      %v1330 = vadd.f32 %v520, %v1329
      %v1331 = vpop.f32.mrb[0].mxu0
      %v1332 = vadd.f32 %v516, %v1331
      %v1333 = vpop.f32.mrb[0].mxu0
      %v1334 = vadd.f32 %v520, %v1333
      %1335 = vmatprep.mubr.bf16.mxu0 %v374
      %1336 = vmatmul.mubr.bf16.gmra.mrb[0].mxu0 %v373
      %v1337 = vpop.f32.mrb[0].mxu0
      %v1338 = vadd.f32 %v516, %v1337
      %v1339 = vpop.f32.mrb[0].mxu0
      %v1340 = vadd.f32 %v520, %v1339
      %v1341 = vpop.f32.mrb[0].mxu0
      %v1342 = vadd.f32 %v516, %v1341
      %v1343 = vpop.f32.mrb[0].mxu0
      %v1344 = vadd.f32 %v520, %v1343
      %1345 = vmatprep.mubr.bf16.mxu0 %v376
      %1346 = vmatmul.mubr.bf16.gmra.mrb[0].mxu0 %v375
      %v1347 = vpop.f32.mrb[0].mxu0
      %v1348 = vadd.f32 %v516, %v1347
      %v1349 = vpop.f32.mrb[0].mxu0
      %v1350 = vadd.f32 %v520, %v1349
      %v1351 = vpop.f32.mrb[0].mxu0
      %v1352 = vadd.f32 %v516, %v1351
      %v1353 = vpop.f32.mrb[0].mxu0
      %v1354 = vadd.f32 %v520, %v1353
      %1355 = vmatprep.mubr.bf16.mxu0 %v378
      %1356 = vmatmul.mubr.bf16.gmra.mrb[0].mxu0 %v377
      %v1357 = vpop.f32.mrb[0].mxu0
      %v1358 = vadd.f32 %v516, %v1357
      %v1359 = vpop.f32.mrb[0].mxu0
      %v1360 = vadd.f32 %v520, %v1359
      %v1361 = vpop.f32.mrb[0].mxu0
      %v1362 = vadd.f32 %v516, %v1361
      %v1363 = vpop.f32.mrb[0].mxu0
      %v1364 = vadd.f32 %v520, %v1363
      %1365 = vmatprep.mubr.bf16.mxu0 %v380
      %1366 = vmatmul.mubr.bf16.gmra.mrb[0].mxu0 %v379
      %v1367 = vpop.f32.mrb[0].mxu0
      %v1368 = vadd.f32 %v516, %v1367
      %v1369 = vpop.f32.mrb[0].mxu0
      %v1370 = vadd.f32 %v520, %v1369
      %v1371 = vpop.f32.mrb[0].mxu0
      %v1372 = vadd.f32 %v516, %v1371
      %v1373 = vpop.f32.mrb[0].mxu0
      %v1374 = vadd.f32 %v520, %v1373
      %1375 = vmatprep.mubr.bf16.mxu0 %v382
      %1376 = vmatmul.mubr.bf16.gmra.mrb[0].mxu0 %v381
      %v1377 = vpop.f32.mrb[0].mxu0
      %v1378 = vadd.f32 %v516, %v1377
      %v1379 = vpop.f32.mrb[0].mxu0
      %v1380 = vadd.f32 %v520, %v1379
      %v1381 = vpop.f32.mrb[0].mxu0
      %v1382 = vadd.f32 %v516, %v1381
      %v1383 = vpop.f32.mrb[0].mxu0
      %v1384 = vadd.f32 %v520, %v1383
      %1385 = vdwg.mxu0
      %1386 = vmatprep.subr.bf16.mxu0 %v940
      %1387 = vmatpush1.bf16.msra.mxu0 %v939
      %1388 = vmatprep.subr.bf16.mxu0 %v948
      %1389 = vmatpush1.bf16.msra.mxu0 %v947
      %1390 = vmatprep.subr.bf16.mxu0 %v956
      %1391 = vmatpush1.bf16.msra.mxu0 %v955
      %1392 = vmatprep.subr.bf16.mxu0 %v964
      %1393 = vmatpush1.bf16.msra.mxu0 %v963
      %1394 = vmatprep.subr.bf16.mxu0 %v972
      %1395 = vmatpush1.bf16.msra.mxu0 %v971
      %1396 = vmatprep.subr.bf16.mxu0 %v980
      %1397 = vmatpush1.bf16.msra.mxu0 %v979
      %1398 = vmatprep.subr.bf16.mxu0 %v988
      %1399 = vmatpush1.bf16.msra.mxu0 %v987
      %1400 = vmatprep.subr.bf16.mxu0 %v996
      %1401 = vmatpush1.bf16.msra.mxu0 %v995
      %1402 = vmatprep.subr.bf16.mxu0 %v1004
      %1403 = vmatpush1.bf16.msra.mxu0 %v1003
      %1404 = vmatprep.subr.bf16.mxu0 %v1012
      %1405 = vmatpush1.bf16.msra.mxu0 %v1011
      %1406 = vmatprep.subr.bf16.mxu0 %v1020
      %1407 = vmatpush1.bf16.msra.mxu0 %v1019
      %1408 = vmatprep.subr.bf16.mxu0 %v1028
      %1409 = vmatpush1.bf16.msra.mxu0 %v1027
      %1410 = vmatprep.subr.bf16.mxu0 %v1036
      %1411 = vmatpush1.bf16.msra.mxu0 %v1035
      %1412 = vmatprep.subr.bf16.mxu0 %v1044
      %1413 = vmatpush1.bf16.msra.mxu0 %v1043
      %1414 = vmatprep.subr.bf16.mxu0 %v1052
      %1415 = vmatpush1.bf16.msra.mxu0 %v1051
      %1416 = vmatprep.subr.bf16.mxu0 %v1060
      %1417 = vmatpush1.bf16.msra.mxu0 %v1059
      %1418 = vmatprep.mubr.bf16.mxu0 %v352
      %1419 = vmatmul.mubr.bf16.gmra.mrb[0].mxu0 %v351
      %v1420 = vpop.f32.mrb[0].mxu0
      %v1421 = vadd.f32 %v524, %v1420
      %v1422 = vpop.f32.mrb[0].mxu0
      %v1423 = vadd.f32 %v528, %v1422
      %v1424 = vpop.f32.mrb[0].mxu0
      %v1425 = vadd.f32 %v524, %v1424
      %v1426 = vpop.f32.mrb[0].mxu0
      %v1427 = vadd.f32 %v528, %v1426
      %1428 = vmatprep.mubr.bf16.mxu0 %v354
      %1429 = vmatmul.mubr.bf16.gmra.mrb[0].mxu0 %v353
      %v1430 = vpop.f32.mrb[0].mxu0
      %v1431 = vadd.f32 %v524, %v1430
      %v1432 = vpop.f32.mrb[0].mxu0
      %v1433 = vadd.f32 %v528, %v1432
      %v1434 = vpop.f32.mrb[0].mxu0
      %v1435 = vadd.f32 %v524, %v1434
      %v1436 = vpop.f32.mrb[0].mxu0
      %v1437 = vadd.f32 %v528, %v1436
      %1438 = vmatprep.mubr.bf16.mxu0 %v356
      %1439 = vmatmul.mubr.bf16.gmra.mrb[0].mxu0 %v355
      %v1440 = vpop.f32.mrb[0].mxu0
      %v1441 = vadd.f32 %v524, %v1440
      %v1442 = vpop.f32.mrb[0].mxu0
      %v1443 = vadd.f32 %v528, %v1442
      %v1444 = vpop.f32.mrb[0].mxu0
      %v1445 = vadd.f32 %v524, %v1444
      %v1446 = vpop.f32.mrb[0].mxu0
      %v1447 = vadd.f32 %v528, %v1446
      %1448 = vmatprep.mubr.bf16.mxu0 %v358
      %1449 = vmatmul.mubr.bf16.gmra.mrb[0].mxu0 %v357
      %v1450 = vpop.f32.mrb[0].mxu0
      %v1451 = vadd.f32 %v524, %v1450
      %v1452 = vpop.f32.mrb[0].mxu0
      %v1453 = vadd.f32 %v528, %v1452
      %v1454 = vpop.f32.mrb[0].mxu0
      %v1455 = vadd.f32 %v524, %v1454
      %v1456 = vpop.f32.mrb[0].mxu0
      %v1457 = vadd.f32 %v528, %v1456
      %1458 = vmatprep.mubr.bf16.mxu0 %v360
      %1459 = vmatmul.mubr.bf16.gmra.mrb[0].mxu0 %v359
      %v1460 = vpop.f32.mrb[0].mxu0
      %v1461 = vadd.f32 %v524, %v1460
      %v1462 = vpop.f32.mrb[0].mxu0
      %v1463 = vadd.f32 %v528, %v1462
      %v1464 = vpop.f32.mrb[0].mxu0
      %v1465 = vadd.f32 %v524, %v1464
      %v1466 = vpop.f32.mrb[0].mxu0
      %v1467 = vadd.f32 %v528, %v1466
      %1468 = vmatprep.mubr.bf16.mxu0 %v362
      %1469 = vmatmul.mubr.bf16.gmra.mrb[0].mxu0 %v361
      %v1470 = vpop.f32.mrb[0].mxu0
      %v1471 = vadd.f32 %v524, %v1470
      %v1472 = vpop.f32.mrb[0].mxu0
      %v1473 = vadd.f32 %v528, %v1472
      %v1474 = vpop.f32.mrb[0].mxu0
      %v1475 = vadd.f32 %v524, %v1474
      %v1476 = vpop.f32.mrb[0].mxu0
      %v1477 = vadd.f32 %v528, %v1476
      %1478 = vmatprep.mubr.bf16.mxu0 %v364
      %1479 = vmatmul.mubr.bf16.gmra.mrb[0].mxu0 %v363
      %v1480 = vpop.f32.mrb[0].mxu0
      %v1481 = vadd.f32 %v524, %v1480
      %v1482 = vpop.f32.mrb[0].mxu0
      %v1483 = vadd.f32 %v528, %v1482
      %v1484 = vpop.f32.mrb[0].mxu0
      %v1485 = vadd.f32 %v524, %v1484
      %v1486 = vpop.f32.mrb[0].mxu0
      %v1487 = vadd.f32 %v528, %v1486
      %1488 = vmatprep.mubr.bf16.mxu0 %v366
      %1489 = vmatmul.mubr.bf16.gmra.mrb[0].mxu0 %v365
      %v1490 = vpop.f32.mrb[0].mxu0
      %v1491 = vadd.f32 %v524, %v1490
      %v1492 = vpop.f32.mrb[0].mxu0
      %v1493 = vadd.f32 %v528, %v1492
      %v1494 = vpop.f32.mrb[0].mxu0
      %v1495 = vadd.f32 %v524, %v1494
      %v1496 = vpop.f32.mrb[0].mxu0
      %v1497 = vadd.f32 %v528, %v1496
      %1498 = vmatprep.mubr.bf16.mxu0 %v368
      %1499 = vmatmul.mubr.bf16.gmra.mrb[0].mxu0 %v367
      %v1500 = vpop.f32.mrb[0].mxu0
      %v1501 = vadd.f32 %v524, %v1500
      %v1502 = vpop.f32.mrb[0].mxu0
      %v1503 = vadd.f32 %v528, %v1502
      %v1504 = vpop.f32.mrb[0].mxu0
      %v1505 = vadd.f32 %v524, %v1504
      %v1506 = vpop.f32.mrb[0].mxu0
      %v1507 = vadd.f32 %v528, %v1506
      %1508 = vmatprep.mubr.bf16.mxu0 %v370
      %1509 = vmatmul.mubr.bf16.gmra.mrb[0].mxu0 %v369
      %v1510 = vpop.f32.mrb[0].mxu0
      %v1511 = vadd.f32 %v524, %v1510
      %v1512 = vpop.f32.mrb[0].mxu0
      %v1513 = vadd.f32 %v528, %v1512
      %v1514 = vpop.f32.mrb[0].mxu0
      %v1515 = vadd.f32 %v524, %v1514
      %v1516 = vpop.f32.mrb[0].mxu0
      %v1517 = vadd.f32 %v528, %v1516
      %1518 = vmatprep.mubr.bf16.mxu0 %v372
      %1519 = vmatmul.mubr.bf16.gmra.mrb[0].mxu0 %v371
      %v1520 = vpop.f32.mrb[0].mxu0
      %v1521 = vadd.f32 %v524, %v1520
      %v1522 = vpop.f32.mrb[0].mxu0
      %v1523 = vadd.f32 %v528, %v1522
      %v1524 = vpop.f32.mrb[0].mxu0
      %v1525 = vadd.f32 %v524, %v1524
      %v1526 = vpop.f32.mrb[0].mxu0
      %v1527 = vadd.f32 %v528, %v1526
      %1528 = vmatprep.mubr.bf16.mxu0 %v374
      %1529 = vmatmul.mubr.bf16.gmra.mrb[0].mxu0 %v373
      %v1530 = vpop.f32.mrb[0].mxu0
      %v1531 = vadd.f32 %v524, %v1530
      %v1532 = vpop.f32.mrb[0].mxu0
      %v1533 = vadd.f32 %v528, %v1532
      %v1534 = vpop.f32.mrb[0].mxu0
      %v1535 = vadd.f32 %v524, %v1534
      %v1536 = vpop.f32.mrb[0].mxu0
      %v1537 = vadd.f32 %v528, %v1536
      %1538 = vmatprep.mubr.bf16.mxu0 %v376
      %1539 = vmatmul.mubr.bf16.gmra.mrb[0].mxu0 %v375
      %v1540 = vpop.f32.mrb[0].mxu0
      %v1541 = vadd.f32 %v524, %v1540
      %v1542 = vpop.f32.mrb[0].mxu0
      %v1543 = vadd.f32 %v528, %v1542
      %v1544 = vpop.f32.mrb[0].mxu0
      %v1545 = vadd.f32 %v524, %v1544
      %v1546 = vpop.f32.mrb[0].mxu0
      %v1547 = vadd.f32 %v528, %v1546
      %1548 = vmatprep.mubr.bf16.mxu0 %v378
      %1549 = vmatmul.mubr.bf16.gmra.mrb[0].mxu0 %v377
      %v1550 = vpop.f32.mrb[0].mxu0
      %v1551 = vadd.f32 %v524, %v1550
      %v1552 = vpop.f32.mrb[0].mxu0
      %v1553 = vadd.f32 %v528, %v1552
      %v1554 = vpop.f32.mrb[0].mxu0
      %v1555 = vadd.f32 %v524, %v1554
      %v1556 = vpop.f32.mrb[0].mxu0
      %v1557 = vadd.f32 %v528, %v1556
      %1558 = vmatprep.mubr.bf16.mxu0 %v380
      %1559 = vmatmul.mubr.bf16.gmra.mrb[0].mxu0 %v379
      %v1560 = vpop.f32.mrb[0].mxu0
      %v1561 = vadd.f32 %v524, %v1560
      %v1562 = vpop.f32.mrb[0].mxu0
      %v1563 = vadd.f32 %v528, %v1562
      %v1564 = vpop.f32.mrb[0].mxu0
      %v1565 = vadd.f32 %v524, %v1564
      %v1566 = vpop.f32.mrb[0].mxu0
      %v1567 = vadd.f32 %v528, %v1566
      %1568 = vmatprep.mubr.bf16.mxu0 %v382
      %1569 = vmatmul.mubr.bf16.gmra.mrb[0].mxu0 %v381
      %v1570 = vpop.f32.mrb[0].mxu0
      %v1571 = vadd.f32 %v524, %v1570
      %v1572 = vpop.f32.mrb[0].mxu0
      %v1573 = vadd.f32 %v528, %v1572
      %v1574 = vpop.f32.mrb[0].mxu0
      %v1575 = vadd.f32 %v524, %v1574
      %v1576 = vpop.f32.mrb[0].mxu0
      %v1577 = vadd.f32 %v528, %v1576
      %1578 = vdwg.mxu0
      %1579 = vmatprep.subr.bf16.mxu0 %v942
      %1580 = vmatpush1.bf16.msra.mxu0 %v941
      %1581 = vmatprep.subr.bf16.mxu0 %v950
      %1582 = vmatpush1.bf16.msra.mxu0 %v949
      %1583 = vmatprep.subr.bf16.mxu0 %v958
      %1584 = vmatpush1.bf16.msra.mxu0 %v957
      %1585 = vmatprep.subr.bf16.mxu0 %v966
      %1586 = vmatpush1.bf16.msra.mxu0 %v965
      %1587 = vmatprep.subr.bf16.mxu0 %v974
      %1588 = vmatpush1.bf16.msra.mxu0 %v973
      %1589 = vmatprep.subr.bf16.mxu0 %v982
      %1590 = vmatpush1.bf16.msra.mxu0 %v981
      %1591 = vmatprep.subr.bf16.mxu0 %v990
      %1592 = vmatpush1.bf16.msra.mxu0 %v989
      %1593 = vmatprep.subr.bf16.mxu0 %v998
      %1594 = vmatpush1.bf16.msra.mxu0 %v997
      %1595 = vmatprep.subr.bf16.mxu0 %v1006
      %1596 = vmatpush1.bf16.msra.mxu0 %v1005
      %1597 = vmatprep.subr.bf16.mxu0 %v1014
      %1598 = vmatpush1.bf16.msra.mxu0 %v1013
      %1599 = vmatprep.subr.bf16.mxu0 %v1022
      %1600 = vmatpush1.bf16.msra.mxu0 %v1021
      %1601 = vmatprep.subr.bf16.mxu0 %v1030
      %1602 = vmatpush1.bf16.msra.mxu0 %v1029
      %1603 = vmatprep.subr.bf16.mxu0 %v1038
      %1604 = vmatpush1.bf16.msra.mxu0 %v1037
      %1605 = vmatprep.subr.bf16.mxu0 %v1046
      %1606 = vmatpush1.bf16.msra.mxu0 %v1045
      %1607 = vmatprep.subr.bf16.mxu0 %v1054
      %1608 = vmatpush1.bf16.msra.mxu0 %v1053
      %1609 = vmatprep.subr.bf16.mxu0 %v1062
      %1610 = vmatpush1.bf16.msra.mxu0 %v1061
      %1611 = vmatprep.mubr.bf16.mxu0 %v352
      %1612 = vmatmul.mubr.bf16.gmra.mrb[0].mxu0 %v351
      %v1613 = vpop.f32.mrb[0].mxu0
      %v1614 = vadd.f32 %v532, %v1613
      %v1615 = vpop.f32.mrb[0].mxu0
      %v1616 = vadd.f32 %v536, %v1615
      %v1617 = vpop.f32.mrb[0].mxu0
      %v1618 = vadd.f32 %v532, %v1617
      %v1619 = vpop.f32.mrb[0].mxu0
      %v1620 = vadd.f32 %v536, %v1619
      %1621 = vmatprep.mubr.bf16.mxu0 %v354
      %1622 = vmatmul.mubr.bf16.gmra.mrb[0].mxu0 %v353
      %v1623 = vpop.f32.mrb[0].mxu0
      %v1624 = vadd.f32 %v532, %v1623
      %v1625 = vpop.f32.mrb[0].mxu0
      %v1626 = vadd.f32 %v536, %v1625
      %v1627 = vpop.f32.mrb[0].mxu0
      %v1628 = vadd.f32 %v532, %v1627
      %v1629 = vpop.f32.mrb[0].mxu0
      %v1630 = vadd.f32 %v536, %v1629
      %1631 = vmatprep.mubr.bf16.mxu0 %v356
      %1632 = vmatmul.mubr.bf16.gmra.mrb[0].mxu0 %v355
      %v1633 = vpop.f32.mrb[0].mxu0
      %v1634 = vadd.f32 %v532, %v1633
      %v1635 = vpop.f32.mrb[0].mxu0
      %v1636 = vadd.f32 %v536, %v1635
      %v1637 = vpop.f32.mrb[0].mxu0
      %v1638 = vadd.f32 %v532, %v1637
      %v1639 = vpop.f32.mrb[0].mxu0
      %v1640 = vadd.f32 %v536, %v1639
      %1641 = vmatprep.mubr.bf16.mxu0 %v358
      %1642 = vmatmul.mubr.bf16.gmra.mrb[0].mxu0 %v357
      %v1643 = vpop.f32.mrb[0].mxu0
      %v1644 = vadd.f32 %v532, %v1643
      %v1645 = vpop.f32.mrb[0].mxu0
      %v1646 = vadd.f32 %v536, %v1645
      %v1647 = vpop.f32.mrb[0].mxu0
      %v1648 = vadd.f32 %v532, %v1647
      %v1649 = vpop.f32.mrb[0].mxu0
      %v1650 = vadd.f32 %v536, %v1649
      %1651 = vmatprep.mubr.bf16.mxu0 %v360
      %1652 = vmatmul.mubr.bf16.gmra.mrb[0].mxu0 %v359
      %v1653 = vpop.f32.mrb[0].mxu0
      %v1654 = vadd.f32 %v532, %v1653
      %v1655 = vpop.f32.mrb[0].mxu0
      %v1656 = vadd.f32 %v536, %v1655
      %v1657 = vpop.f32.mrb[0].mxu0
      %v1658 = vadd.f32 %v532, %v1657
      %v1659 = vpop.f32.mrb[0].mxu0
      %v1660 = vadd.f32 %v536, %v1659
      %1661 = vmatprep.mubr.bf16.mxu0 %v362
      %1662 = vmatmul.mubr.bf16.gmra.mrb[0].mxu0 %v361
      %v1663 = vpop.f32.mrb[0].mxu0
      %v1664 = vadd.f32 %v532, %v1663
      %v1665 = vpop.f32.mrb[0].mxu0
      %v1666 = vadd.f32 %v536, %v1665
      %v1667 = vpop.f32.mrb[0].mxu0
      %v1668 = vadd.f32 %v532, %v1667
      %v1669 = vpop.f32.mrb[0].mxu0
      %v1670 = vadd.f32 %v536, %v1669
      %1671 = vmatprep.mubr.bf16.mxu0 %v364
      %1672 = vmatmul.mubr.bf16.gmra.mrb[0].mxu0 %v363
      %v1673 = vpop.f32.mrb[0].mxu0
      %v1674 = vadd.f32 %v532, %v1673
      %v1675 = vpop.f32.mrb[0].mxu0
      %v1676 = vadd.f32 %v536, %v1675
      %v1677 = vpop.f32.mrb[0].mxu0
      %v1678 = vadd.f32 %v532, %v1677
      %v1679 = vpop.f32.mrb[0].mxu0
      %v1680 = vadd.f32 %v536, %v1679
      %1681 = vmatprep.mubr.bf16.mxu0 %v366
      %1682 = vmatmul.mubr.bf16.gmra.mrb[0].mxu0 %v365
      %v1683 = vpop.f32.mrb[0].mxu0
      %v1684 = vadd.f32 %v532, %v1683
      %v1685 = vpop.f32.mrb[0].mxu0
      %v1686 = vadd.f32 %v536, %v1685
      %v1687 = vpop.f32.mrb[0].mxu0
      %v1688 = vadd.f32 %v532, %v1687
      %v1689 = vpop.f32.mrb[0].mxu0
      %v1690 = vadd.f32 %v536, %v1689
      %1691 = vmatprep.mubr.bf16.mxu0 %v368
      %1692 = vmatmul.mubr.bf16.gmra.mrb[0].mxu0 %v367
      %v1693 = vpop.f32.mrb[0].mxu0
      %v1694 = vadd.f32 %v532, %v1693
      %v1695 = vpop.f32.mrb[0].mxu0
      %v1696 = vadd.f32 %v536, %v1695
      %v1697 = vpop.f32.mrb[0].mxu0
      %v1698 = vadd.f32 %v532, %v1697
      %v1699 = vpop.f32.mrb[0].mxu0
      %v1700 = vadd.f32 %v536, %v1699
      %1701 = vmatprep.mubr.bf16.mxu0 %v370
      %1702 = vmatmul.mubr.bf16.gmra.mrb[0].mxu0 %v369
      %v1703 = vpop.f32.mrb[0].mxu0
      %v1704 = vadd.f32 %v532, %v1703
      %v1705 = vpop.f32.mrb[0].mxu0
      %v1706 = vadd.f32 %v536, %v1705
      %v1707 = vpop.f32.mrb[0].mxu0
      %v1708 = vadd.f32 %v532, %v1707
      %v1709 = vpop.f32.mrb[0].mxu0
      %v1710 = vadd.f32 %v536, %v1709
      %1711 = vmatprep.mubr.bf16.mxu0 %v372
      %1712 = vmatmul.mubr.bf16.gmra.mrb[0].mxu0 %v371
      %v1713 = vpop.f32.mrb[0].mxu0
      %v1714 = vadd.f32 %v532, %v1713
      %v1715 = vpop.f32.mrb[0].mxu0
      %v1716 = vadd.f32 %v536, %v1715
      %v1717 = vpop.f32.mrb[0].mxu0
      %v1718 = vadd.f32 %v532, %v1717
      %v1719 = vpop.f32.mrb[0].mxu0
      %v1720 = vadd.f32 %v536, %v1719
      %1721 = vmatprep.mubr.bf16.mxu0 %v374
      %1722 = vmatmul.mubr.bf16.gmra.mrb[0].mxu0 %v373
      %v1723 = vpop.f32.mrb[0].mxu0
      %v1724 = vadd.f32 %v532, %v1723
      %v1725 = vpop.f32.mrb[0].mxu0
      %v1726 = vadd.f32 %v536, %v1725
      %v1727 = vpop.f32.mrb[0].mxu0
      %v1728 = vadd.f32 %v532, %v1727
      %v1729 = vpop.f32.mrb[0].mxu0
      %v1730 = vadd.f32 %v536, %v1729
      %1731 = vmatprep.mubr.bf16.mxu0 %v376
      %1732 = vmatmul.mubr.bf16.gmra.mrb[0].mxu0 %v375
      %v1733 = vpop.f32.mrb[0].mxu0
      %v1734 = vadd.f32 %v532, %v1733
      %v1735 = vpop.f32.mrb[0].mxu0
      %v1736 = vadd.f32 %v536, %v1735
      %v1737 = vpop.f32.mrb[0].mxu0
      %v1738 = vadd.f32 %v532, %v1737
      %v1739 = vpop.f32.mrb[0].mxu0
      %v1740 = vadd.f32 %v536, %v1739
      %1741 = vmatprep.mubr.bf16.mxu0 %v378
      %1742 = vmatmul.mubr.bf16.gmra.mrb[0].mxu0 %v377
      %v1743 = vpop.f32.mrb[0].mxu0
      %v1744 = vadd.f32 %v532, %v1743
      %v1745 = vpop.f32.mrb[0].mxu0
      %v1746 = vadd.f32 %v536, %v1745
      %v1747 = vpop.f32.mrb[0].mxu0
      %v1748 = vadd.f32 %v532, %v1747
      %v1749 = vpop.f32.mrb[0].mxu0
      %v1750 = vadd.f32 %v536, %v1749
      %1751 = vmatprep.mubr.bf16.mxu0 %v380
      %1752 = vmatmul.mubr.bf16.gmra.mrb[0].mxu0 %v379
      %v1753 = vpop.f32.mrb[0].mxu0
      %v1754 = vadd.f32 %v532, %v1753
      %v1755 = vpop.f32.mrb[0].mxu0
      %v1756 = vadd.f32 %v536, %v1755
      %v1757 = vpop.f32.mrb[0].mxu0
      %v1758 = vadd.f32 %v532, %v1757
      %v1759 = vpop.f32.mrb[0].mxu0
      %v1760 = vadd.f32 %v536, %v1759
      %1761 = vmatprep.mubr.bf16.mxu0 %v382
      %1762 = vmatmul.mubr.bf16.gmra.mrb[0].mxu0 %v381
      %v1763 = vpop.f32.mrb[0].mxu0
      %v1764 = vadd.f32 %v532, %v1763
      %v1765 = vpop.f32.mrb[0].mxu0
      %v1766 = vadd.f32 %v536, %v1765
      %v1767 = vpop.f32.mrb[0].mxu0
      %v1768 = vadd.f32 %v532, %v1767
      %v1769 = vpop.f32.mrb[0].mxu0
      %v1770 = vadd.f32 %v536, %v1769
      %1771 = vdwg.mxu0
      %1772 = vmatprep.subr.bf16.mxu0 %v944
      %1773 = vmatpush1.bf16.msra.mxu0 %v943
      %1774 = vmatprep.subr.bf16.mxu0 %v952
      %1775 = vmatpush1.bf16.msra.mxu0 %v951
      %1776 = vmatprep.subr.bf16.mxu0 %v960
      %1777 = vmatpush1.bf16.msra.mxu0 %v959
      %1778 = vmatprep.subr.bf16.mxu0 %v968
      %1779 = vmatpush1.bf16.msra.mxu0 %v967
      %1780 = vmatprep.subr.bf16.mxu0 %v976
      %1781 = vmatpush1.bf16.msra.mxu0 %v975
      %1782 = vmatprep.subr.bf16.mxu0 %v984
      %1783 = vmatpush1.bf16.msra.mxu0 %v983
      %1784 = vmatprep.subr.bf16.mxu0 %v992
      %1785 = vmatpush1.bf16.msra.mxu0 %v991
      %1786 = vmatprep.subr.bf16.mxu0 %v1000
      %1787 = vmatpush1.bf16.msra.mxu0 %v999
      %1788 = vmatprep.subr.bf16.mxu0 %v1008
      %1789 = vmatpush1.bf16.msra.mxu0 %v1007
      %1790 = vmatprep.subr.bf16.mxu0 %v1016
      %1791 = vmatpush1.bf16.msra.mxu0 %v1015
      %1792 = vmatprep.subr.bf16.mxu0 %v1024
      %1793 = vmatpush1.bf16.msra.mxu0 %v1023
      %1794 = vmatprep.subr.bf16.mxu0 %v1032
      %1795 = vmatpush1.bf16.msra.mxu0 %v1031
      %1796 = vmatprep.subr.bf16.mxu0 %v1040
      %1797 = vmatpush1.bf16.msra.mxu0 %v1039
      %1798 = vmatprep.subr.bf16.mxu0 %v1048
      %1799 = vmatpush1.bf16.msra.mxu0 %v1047
      %1800 = vmatprep.subr.bf16.mxu0 %v1056
      %1801 = vmatpush1.bf16.msra.mxu0 %v1055
      %1802 = vmatprep.subr.bf16.mxu0 %v1064
      %1803 = vmatpush1.bf16.msra.mxu0 %v1063
      %1804 = vmatprep.mubr.bf16.mxu0 %v352
      %1805 = vmatmul.mubr.bf16.gmra.mrb[0].mxu0 %v351
      %v1806 = vpop.f32.mrb[0].mxu0
      %v1807 = vadd.f32 %v540, %v1806
      %v1808 = vpop.f32.mrb[0].mxu0
      %v1809 = vadd.f32 %v544, %v1808
      %v1810 = vpop.f32.mrb[0].mxu0
      %v1811 = vadd.f32 %v540, %v1810
      %v1812 = vpop.f32.mrb[0].mxu0
      %v1813 = vadd.f32 %v544, %v1812
      %1814 = vmatprep.mubr.bf16.mxu0 %v354
      %1815 = vmatmul.mubr.bf16.gmra.mrb[0].mxu0 %v353
      %v1816 = vpop.f32.mrb[0].mxu0
      %v1817 = vadd.f32 %v540, %v1816
      %v1818 = vpop.f32.mrb[0].mxu0
      %v1819 = vadd.f32 %v544, %v1818
      %v1820 = vpop.f32.mrb[0].mxu0
      %v1821 = vadd.f32 %v540, %v1820
      %v1822 = vpop.f32.mrb[0].mxu0
      %v1823 = vadd.f32 %v544, %v1822
      %1824 = vmatprep.mubr.bf16.mxu0 %v356
      %1825 = vmatmul.mubr.bf16.gmra.mrb[0].mxu0 %v355
      %v1826 = vpop.f32.mrb[0].mxu0
      %v1827 = vadd.f32 %v540, %v1826
      %v1828 = vpop.f32.mrb[0].mxu0
      %v1829 = vadd.f32 %v544, %v1828
      %v1830 = vpop.f32.mrb[0].mxu0
      %v1831 = vadd.f32 %v540, %v1830
      %v1832 = vpop.f32.mrb[0].mxu0
      %v1833 = vadd.f32 %v544, %v1832
      %1834 = vmatprep.mubr.bf16.mxu0 %v358
      %1835 = vmatmul.mubr.bf16.gmra.mrb[0].mxu0 %v357
      %v1836 = vpop.f32.mrb[0].mxu0
      %v1837 = vadd.f32 %v540, %v1836
      %v1838 = vpop.f32.mrb[0].mxu0
      %v1839 = vadd.f32 %v544, %v1838
      %v1840 = vpop.f32.mrb[0].mxu0
      %v1841 = vadd.f32 %v540, %v1840
      %v1842 = vpop.f32.mrb[0].mxu0
      %v1843 = vadd.f32 %v544, %v1842
      %1844 = vmatprep.mubr.bf16.mxu0 %v360
      %1845 = vmatmul.mubr.bf16.gmra.mrb[0].mxu0 %v359
      %v1846 = vpop.f32.mrb[0].mxu0
      %v1847 = vadd.f32 %v540, %v1846
      %v1848 = vpop.f32.mrb[0].mxu0
      %v1849 = vadd.f32 %v544, %v1848
      %v1850 = vpop.f32.mrb[0].mxu0
      %v1851 = vadd.f32 %v540, %v1850
      %v1852 = vpop.f32.mrb[0].mxu0
      %v1853 = vadd.f32 %v544, %v1852
      %1854 = vmatprep.mubr.bf16.mxu0 %v362
      %1855 = vmatmul.mubr.bf16.gmra.mrb[0].mxu0 %v361
      %v1856 = vpop.f32.mrb[0].mxu0
      %v1857 = vadd.f32 %v540, %v1856
      %v1858 = vpop.f32.mrb[0].mxu0
      %v1859 = vadd.f32 %v544, %v1858
      %v1860 = vpop.f32.mrb[0].mxu0
      %v1861 = vadd.f32 %v540, %v1860
      %v1862 = vpop.f32.mrb[0].mxu0
      %v1863 = vadd.f32 %v544, %v1862
      %1864 = vmatprep.mubr.bf16.mxu0 %v364
      %1865 = vmatmul.mubr.bf16.gmra.mrb[0].mxu0 %v363
      %v1866 = vpop.f32.mrb[0].mxu0
      %v1867 = vadd.f32 %v540, %v1866
      %v1868 = vpop.f32.mrb[0].mxu0
      %v1869 = vadd.f32 %v544, %v1868
      %v1870 = vpop.f32.mrb[0].mxu0
      %v1871 = vadd.f32 %v540, %v1870
      %v1872 = vpop.f32.mrb[0].mxu0
      %v1873 = vadd.f32 %v544, %v1872
      %1874 = vmatprep.mubr.bf16.mxu0 %v366
      %1875 = vmatmul.mubr.bf16.gmra.mrb[0].mxu0 %v365
      %v1876 = vpop.f32.mrb[0].mxu0
      %v1877 = vadd.f32 %v540, %v1876
      %v1878 = vpop.f32.mrb[0].mxu0
      %v1879 = vadd.f32 %v544, %v1878
      %v1880 = vpop.f32.mrb[0].mxu0
      %v1881 = vadd.f32 %v540, %v1880
      %v1882 = vpop.f32.mrb[0].mxu0
      %v1883 = vadd.f32 %v544, %v1882
      %1884 = vmatprep.mubr.bf16.mxu0 %v368
      %1885 = vmatmul.mubr.bf16.gmra.mrb[0].mxu0 %v367
      %v1886 = vpop.f32.mrb[0].mxu0
      %v1887 = vadd.f32 %v540, %v1886
      %v1888 = vpop.f32.mrb[0].mxu0
      %v1889 = vadd.f32 %v544, %v1888
      %v1890 = vpop.f32.mrb[0].mxu0
      %v1891 = vadd.f32 %v540, %v1890
      %v1892 = vpop.f32.mrb[0].mxu0
      %v1893 = vadd.f32 %v544, %v1892
      %1894 = vmatprep.mubr.bf16.mxu0 %v370
      %1895 = vmatmul.mubr.bf16.gmra.mrb[0].mxu0 %v369
      %v1896 = vpop.f32.mrb[0].mxu0
      %v1897 = vadd.f32 %v540, %v1896
      %v1898 = vpop.f32.mrb[0].mxu0
      %v1899 = vadd.f32 %v544, %v1898
      %v1900 = vpop.f32.mrb[0].mxu0
      %v1901 = vadd.f32 %v540, %v1900
      %v1902 = vpop.f32.mrb[0].mxu0
      %v1903 = vadd.f32 %v544, %v1902
      %1904 = vmatprep.mubr.bf16.mxu0 %v372
      %1905 = vmatmul.mubr.bf16.gmra.mrb[0].mxu0 %v371
      %v1906 = vpop.f32.mrb[0].mxu0
      %v1907 = vadd.f32 %v540, %v1906
      %v1908 = vpop.f32.mrb[0].mxu0
      %v1909 = vadd.f32 %v544, %v1908
      %v1910 = vpop.f32.mrb[0].mxu0
      %v1911 = vadd.f32 %v540, %v1910
      %v1912 = vpop.f32.mrb[0].mxu0
      %v1913 = vadd.f32 %v544, %v1912
      %1914 = vmatprep.mubr.bf16.mxu0 %v374
      %1915 = vmatmul.mubr.bf16.gmra.mrb[0].mxu0 %v373
      %v1916 = vpop.f32.mrb[0].mxu0
      %v1917 = vadd.f32 %v540, %v1916
      %v1918 = vpop.f32.mrb[0].mxu0
      %v1919 = vadd.f32 %v544, %v1918
      %v1920 = vpop.f32.mrb[0].mxu0
      %v1921 = vadd.f32 %v540, %v1920
      %v1922 = vpop.f32.mrb[0].mxu0
      %v1923 = vadd.f32 %v544, %v1922
      %1924 = vmatprep.mubr.bf16.mxu0 %v376
      %1925 = vmatmul.mubr.bf16.gmra.mrb[0].mxu0 %v375
      %v1926 = vpop.f32.mrb[0].mxu0
      %v1927 = vadd.f32 %v540, %v1926
      %v1928 = vpop.f32.mrb[0].mxu0
      %v1929 = vadd.f32 %v544, %v1928
      %v1930 = vpop.f32.mrb[0].mxu0
      %v1931 = vadd.f32 %v540, %v1930
      %v1932 = vpop.f32.mrb[0].mxu0
      %v1933 = vadd.f32 %v544, %v1932
      %1934 = vmatprep.mubr.bf16.mxu0 %v378
      %1935 = vmatmul.mubr.bf16.gmra.mrb[0].mxu0 %v377
      %v1936 = vpop.f32.mrb[0].mxu0
      %v1937 = vadd.f32 %v540, %v1936
      %v1938 = vpop.f32.mrb[0].mxu0
      %v1939 = vadd.f32 %v544, %v1938
      %v1940 = vpop.f32.mrb[0].mxu0
      %v1941 = vadd.f32 %v540, %v1940
      %v1942 = vpop.f32.mrb[0].mxu0
      %v1943 = vadd.f32 %v544, %v1942
      %1944 = vmatprep.mubr.bf16.mxu0 %v380
      %1945 = vmatmul.mubr.bf16.gmra.mrb[0].mxu0 %v379
      %v1946 = vpop.f32.mrb[0].mxu0
      %v1947 = vadd.f32 %v540, %v1946
      %v1948 = vpop.f32.mrb[0].mxu0
      %v1949 = vadd.f32 %v544, %v1948
      %v1950 = vpop.f32.mrb[0].mxu0
      %v1951 = vadd.f32 %v540, %v1950
      %v1952 = vpop.f32.mrb[0].mxu0
      %v1953 = vadd.f32 %v544, %v1952
      %1954 = vmatprep.mubr.bf16.mxu0 %v382
      %1955 = vmatmul.mubr.bf16.gmra.mrb[0].mxu0 %v381
      %v1956 = vpop.f32.mrb[0].mxu0
      %v1957 = vadd.f32 %v540, %v1956
      %v1958 = vpop.f32.mrb[0].mxu0
      %v1959 = vadd.f32 %v544, %v1958
      %v1960 = vpop.f32.mrb[0].mxu0
      %v1961 = vadd.f32 %v540, %v1960
      %v1962 = vpop.f32.mrb[0].mxu0
      %v1963 = vadd.f32 %v544, %v1962
      %1964 = vdwg.mxu0
      %v1965 = vmax.f32 %v1228, 0.0
      %v1966 = vmax.f32 %v1230, 0.0
      %v1967 = vmax.f32 %v1421, 0.0
      %v1968 = vmax.f32 %v1423, 0.0
      %v1969 = vmax.f32 %v1614, 0.0
      %v1970 = vmax.f32 %v1616, 0.0
      %v1971 = vmax.f32 %v1807, 0.0
      %v1972 = vmax.f32 %v1809, 0.0
      %v1973 = vmax.f32 %v1232, 0.0
      %v1974 = vmax.f32 %v1234, 0.0
      %v1975 = vmax.f32 %v1425, 0.0
      %v1976 = vmax.f32 %v1427, 0.0
      %v1977 = vmax.f32 %v1618, 0.0
      %v1978 = vmax.f32 %v1620, 0.0
      %v1979 = vmax.f32 %v1811, 0.0
      %v1980 = vmax.f32 %v1813, 0.0
      %v1981 = vmax.f32 %v1238, 0.0
      %v1982 = vmax.f32 %v1240, 0.0
      %v1983 = vmax.f32 %v1431, 0.0
      %v1984 = vmax.f32 %v1433, 0.0
      %v1985 = vmax.f32 %v1624, 0.0
      %v1986 = vmax.f32 %v1626, 0.0
      %v1987 = vmax.f32 %v1817, 0.0
      %v1988 = vmax.f32 %v1819, 0.0
      %v1989 = vmax.f32 %v1242, 0.0
      %v1990 = vmax.f32 %v1244, 0.0
      %v1991 = vmax.f32 %v1435, 0.0
      %v1992 = vmax.f32 %v1437, 0.0
      %v1993 = vmax.f32 %v1628, 0.0
      %v1994 = vmax.f32 %v1630, 0.0
      %v1995 = vmax.f32 %v1821, 0.0
      %v1996 = vmax.f32 %v1823, 0.0
      %v1997 = vmax.f32 %v1248, 0.0
      %v1998 = vmax.f32 %v1250, 0.0
      %v1999 = vmax.f32 %v1441, 0.0
      %v2000 = vmax.f32 %v1443, 0.0
      %v2001 = vmax.f32 %v1634, 0.0
      %v2002 = vmax.f32 %v1636, 0.0
      %v2003 = vmax.f32 %v1827, 0.0
      %v2004 = vmax.f32 %v1829, 0.0
      %v2005 = vmax.f32 %v1252, 0.0
      %v2006 = vmax.f32 %v1254, 0.0
      %v2007 = vmax.f32 %v1445, 0.0
      %v2008 = vmax.f32 %v1447, 0.0
      %v2009 = vmax.f32 %v1638, 0.0
      %v2010 = vmax.f32 %v1640, 0.0
      %v2011 = vmax.f32 %v1831, 0.0
      %v2012 = vmax.f32 %v1833, 0.0
      %v2013 = vmax.f32 %v1258, 0.0
      %v2014 = vmax.f32 %v1260, 0.0
      %v2015 = vmax.f32 %v1451, 0.0
      %v2016 = vmax.f32 %v1453, 0.0
      %v2017 = vmax.f32 %v1644, 0.0
      %v2018 = vmax.f32 %v1646, 0.0
      %v2019 = vmax.f32 %v1837, 0.0
      %v2020 = vmax.f32 %v1839, 0.0
      %v2021 = vmax.f32 %v1262, 0.0
      %v2022 = vmax.f32 %v1264, 0.0
      %v2023 = vmax.f32 %v1455, 0.0
      %v2024 = vmax.f32 %v1457, 0.0
      %v2025 = vmax.f32 %v1648, 0.0
      %v2026 = vmax.f32 %v1650, 0.0
      %v2027 = vmax.f32 %v1841, 0.0
      %v2028 = vmax.f32 %v1843, 0.0
      %v2029 = vmax.f32 %v1268, 0.0
      %v2030 = vmax.f32 %v1270, 0.0
      %v2031 = vmax.f32 %v1461, 0.0
      %v2032 = vmax.f32 %v1463, 0.0
      %v2033 = vmax.f32 %v1654, 0.0
      %v2034 = vmax.f32 %v1656, 0.0
      %v2035 = vmax.f32 %v1847, 0.0
      %v2036 = vmax.f32 %v1849, 0.0
      %v2037 = vmax.f32 %v1272, 0.0
      %v2038 = vmax.f32 %v1274, 0.0
      %v2039 = vmax.f32 %v1465, 0.0
      %v2040 = vmax.f32 %v1467, 0.0
      %v2041 = vmax.f32 %v1658, 0.0
      %v2042 = vmax.f32 %v1660, 0.0
      %v2043 = vmax.f32 %v1851, 0.0
      %v2044 = vmax.f32 %v1853, 0.0
      %v2045 = vmax.f32 %v1278, 0.0
      %v2046 = vmax.f32 %v1280, 0.0
      %v2047 = vmax.f32 %v1471, 0.0
      %v2048 = vmax.f32 %v1473, 0.0
      %v2049 = vmax.f32 %v1664, 0.0
      %v2050 = vmax.f32 %v1666, 0.0
      %v2051 = vmax.f32 %v1857, 0.0
      %v2052 = vmax.f32 %v1859, 0.0
      %v2053 = vmax.f32 %v1282, 0.0
      %v2054 = vmax.f32 %v1284, 0.0
      %v2055 = vmax.f32 %v1475, 0.0
      %v2056 = vmax.f32 %v1477, 0.0
      %v2057 = vmax.f32 %v1668, 0.0
      %v2058 = vmax.f32 %v1670, 0.0
      %v2059 = vmax.f32 %v1861, 0.0
      %v2060 = vmax.f32 %v1863, 0.0
      %v2061 = vmax.f32 %v1288, 0.0
      %v2062 = vmax.f32 %v1290, 0.0
      %v2063 = vmax.f32 %v1481, 0.0
      %v2064 = vmax.f32 %v1483, 0.0
      %v2065 = vmax.f32 %v1674, 0.0
      %v2066 = vmax.f32 %v1676, 0.0
      %v2067 = vmax.f32 %v1867, 0.0
      %v2068 = vmax.f32 %v1869, 0.0
      %v2069 = vmax.f32 %v1292, 0.0
      %v2070 = vmax.f32 %v1294, 0.0
      %v2071 = vmax.f32 %v1485, 0.0
      %v2072 = vmax.f32 %v1487, 0.0
      %v2073 = vmax.f32 %v1678, 0.0
      %v2074 = vmax.f32 %v1680, 0.0
      %v2075 = vmax.f32 %v1871, 0.0
      %v2076 = vmax.f32 %v1873, 0.0
      %v2077 = vmax.f32 %v1298, 0.0
      %v2078 = vmax.f32 %v1300, 0.0
      %v2079 = vmax.f32 %v1491, 0.0
      %v2080 = vmax.f32 %v1493, 0.0
      %v2081 = vmax.f32 %v1684, 0.0
      %v2082 = vmax.f32 %v1686, 0.0
      %v2083 = vmax.f32 %v1877, 0.0
      %v2084 = vmax.f32 %v1879, 0.0
      %v2085 = vmax.f32 %v1302, 0.0
      %v2086 = vmax.f32 %v1304, 0.0
      %v2087 = vmax.f32 %v1495, 0.0
      %v2088 = vmax.f32 %v1497, 0.0
      %v2089 = vmax.f32 %v1688, 0.0
      %v2090 = vmax.f32 %v1690, 0.0
      %v2091 = vmax.f32 %v1881, 0.0
      %v2092 = vmax.f32 %v1883, 0.0
      %v2093 = vmax.f32 %v1308, 0.0
      %v2094 = vmax.f32 %v1310, 0.0
      %v2095 = vmax.f32 %v1501, 0.0
      %v2096 = vmax.f32 %v1503, 0.0
      %v2097 = vmax.f32 %v1694, 0.0
      %v2098 = vmax.f32 %v1696, 0.0
      %v2099 = vmax.f32 %v1887, 0.0
      %v2100 = vmax.f32 %v1889, 0.0
      %v2101 = vmax.f32 %v1312, 0.0
      %v2102 = vmax.f32 %v1314, 0.0
      %v2103 = vmax.f32 %v1505, 0.0
      %v2104 = vmax.f32 %v1507, 0.0
      %v2105 = vmax.f32 %v1698, 0.0
      %v2106 = vmax.f32 %v1700, 0.0
      %v2107 = vmax.f32 %v1891, 0.0
      %v2108 = vmax.f32 %v1893, 0.0
      %v2109 = vmax.f32 %v1318, 0.0
      %v2110 = vmax.f32 %v1320, 0.0
      %v2111 = vmax.f32 %v1511, 0.0
      %v2112 = vmax.f32 %v1513, 0.0
      %v2113 = vmax.f32 %v1704, 0.0
      %v2114 = vmax.f32 %v1706, 0.0
      %v2115 = vmax.f32 %v1897, 0.0
      %v2116 = vmax.f32 %v1899, 0.0
      %v2117 = vmax.f32 %v1322, 0.0
      %v2118 = vmax.f32 %v1324, 0.0
      %v2119 = vmax.f32 %v1515, 0.0
      %v2120 = vmax.f32 %v1517, 0.0
      %v2121 = vmax.f32 %v1708, 0.0
      %v2122 = vmax.f32 %v1710, 0.0
      %v2123 = vmax.f32 %v1901, 0.0
      %v2124 = vmax.f32 %v1903, 0.0
      %v2125 = vmax.f32 %v1328, 0.0
      %v2126 = vmax.f32 %v1330, 0.0
      %v2127 = vmax.f32 %v1521, 0.0
      %v2128 = vmax.f32 %v1523, 0.0
      %v2129 = vmax.f32 %v1714, 0.0
      %v2130 = vmax.f32 %v1716, 0.0
      %v2131 = vmax.f32 %v1907, 0.0
      %v2132 = vmax.f32 %v1909, 0.0
      %v2133 = vmax.f32 %v1332, 0.0
      %v2134 = vmax.f32 %v1334, 0.0
      %v2135 = vmax.f32 %v1525, 0.0
      %v2136 = vmax.f32 %v1527, 0.0
      %v2137 = vmax.f32 %v1718, 0.0
      %v2138 = vmax.f32 %v1720, 0.0
      %v2139 = vmax.f32 %v1911, 0.0
      %v2140 = vmax.f32 %v1913, 0.0
      %v2141 = vmax.f32 %v1338, 0.0
      %v2142 = vmax.f32 %v1340, 0.0
      %v2143 = vmax.f32 %v1531, 0.0
      %v2144 = vmax.f32 %v1533, 0.0
      %v2145 = vmax.f32 %v1724, 0.0
      %v2146 = vmax.f32 %v1726, 0.0
      %v2147 = vmax.f32 %v1917, 0.0
      %v2148 = vmax.f32 %v1919, 0.0
      %v2149 = vmax.f32 %v1342, 0.0
      %v2150 = vmax.f32 %v1344, 0.0
      %v2151 = vmax.f32 %v1535, 0.0
      %v2152 = vmax.f32 %v1537, 0.0
      %v2153 = vmax.f32 %v1728, 0.0
      %v2154 = vmax.f32 %v1730, 0.0
      %v2155 = vmax.f32 %v1921, 0.0
      %v2156 = vmax.f32 %v1923, 0.0
      %v2157 = vmax.f32 %v1348, 0.0
      %v2158 = vmax.f32 %v1350, 0.0
      %v2159 = vmax.f32 %v1541, 0.0
      %v2160 = vmax.f32 %v1543, 0.0
      %v2161 = vmax.f32 %v1734, 0.0
      %v2162 = vmax.f32 %v1736, 0.0
      %v2163 = vmax.f32 %v1927, 0.0
      %v2164 = vmax.f32 %v1929, 0.0
      %v2165 = vmax.f32 %v1352, 0.0
      %v2166 = vmax.f32 %v1354, 0.0
      %v2167 = vmax.f32 %v1545, 0.0
      %v2168 = vmax.f32 %v1547, 0.0
      %v2169 = vmax.f32 %v1738, 0.0
      %v2170 = vmax.f32 %v1740, 0.0
      %v2171 = vmax.f32 %v1931, 0.0
      %v2172 = vmax.f32 %v1933, 0.0
      %v2173 = vmax.f32 %v1358, 0.0
      %v2174 = vmax.f32 %v1360, 0.0
      %v2175 = vmax.f32 %v1551, 0.0
      %v2176 = vmax.f32 %v1553, 0.0
      %v2177 = vmax.f32 %v1744, 0.0
      %v2178 = vmax.f32 %v1746, 0.0
      %v2179 = vmax.f32 %v1937, 0.0
      %v2180 = vmax.f32 %v1939, 0.0
      %v2181 = vmax.f32 %v1362, 0.0
      %v2182 = vmax.f32 %v1364, 0.0
      %v2183 = vmax.f32 %v1555, 0.0
      %v2184 = vmax.f32 %v1557, 0.0
      %v2185 = vmax.f32 %v1748, 0.0
      %v2186 = vmax.f32 %v1750, 0.0
      %v2187 = vmax.f32 %v1941, 0.0
      %v2188 = vmax.f32 %v1943, 0.0
      %v2189 = vmax.f32 %v1368, 0.0
      %v2190 = vmax.f32 %v1370, 0.0
      %v2191 = vmax.f32 %v1561, 0.0
      %v2192 = vmax.f32 %v1563, 0.0
      %v2193 = vmax.f32 %v1754, 0.0
      %v2194 = vmax.f32 %v1756, 0.0
      %v2195 = vmax.f32 %v1947, 0.0
      %v2196 = vmax.f32 %v1949, 0.0
      %v2197 = vmax.f32 %v1372, 0.0
      %v2198 = vmax.f32 %v1374, 0.0
      %v2199 = vmax.f32 %v1565, 0.0
      %v2200 = vmax.f32 %v1567, 0.0
      %v2201 = vmax.f32 %v1758, 0.0
      %v2202 = vmax.f32 %v1760, 0.0
      %v2203 = vmax.f32 %v1951, 0.0
      %v2204 = vmax.f32 %v1953, 0.0
      %v2205 = vmax.f32 %v1378, 0.0
      %v2206 = vmax.f32 %v1380, 0.0
      %v2207 = vmax.f32 %v1571, 0.0
      %v2208 = vmax.f32 %v1573, 0.0
      %v2209 = vmax.f32 %v1764, 0.0
      %v2210 = vmax.f32 %v1766, 0.0
      %v2211 = vmax.f32 %v1957, 0.0
      %v2212 = vmax.f32 %v1959, 0.0
      %v2213 = vmax.f32 %v1382, 0.0
      %v2214 = vmax.f32 %v1384, 0.0
      %v2215 = vmax.f32 %v1575, 0.0
      %v2216 = vmax.f32 %v1577, 0.0
      %v2217 = vmax.f32 %v1768, 0.0
      %v2218 = vmax.f32 %v1770, 0.0
      %v2219 = vmax.f32 %v1961, 0.0
      %v2220 = vmax.f32 %v1963, 0.0
      %v2221 = vpack.c.bf16 %v1973, %v1965
      %v2222 = vpack.c.bf16 %v1974, %v1966
      %v2223 = vpack.c.bf16 %v1975, %v1967
      %v2224 = vpack.c.bf16 %v1976, %v1968
      %v2225 = vpack.c.bf16 %v1977, %v1969
      %v2226 = vpack.c.bf16 %v1978, %v1970
      %v2227 = vpack.c.bf16 %v1979, %v1971
      %v2228 = vpack.c.bf16 %v1980, %v1972
      %v2229 = vpack.c.bf16 %v1989, %v1981
      %v2230 = vpack.c.bf16 %v1990, %v1982
      %v2231 = vpack.c.bf16 %v1991, %v1983
      %v2232 = vpack.c.bf16 %v1992, %v1984
      %v2233 = vpack.c.bf16 %v1993, %v1985
      %v2234 = vpack.c.bf16 %v1994, %v1986
      %v2235 = vpack.c.bf16 %v1995, %v1987
      %v2236 = vpack.c.bf16 %v1996, %v1988
      %v2237 = vpack.c.bf16 %v2005, %v1997
      %v2238 = vpack.c.bf16 %v2006, %v1998
      %v2239 = vpack.c.bf16 %v2007, %v1999
      %v2240 = vpack.c.bf16 %v2008, %v2000
      %v2241 = vpack.c.bf16 %v2009, %v2001
      %v2242 = vpack.c.bf16 %v2010, %v2002
      %v2243 = vpack.c.bf16 %v2011, %v2003
      %v2244 = vpack.c.bf16 %v2012, %v2004
      %v2245 = vpack.c.bf16 %v2021, %v2013
      %v2246 = vpack.c.bf16 %v2022, %v2014
      %v2247 = vpack.c.bf16 %v2023, %v2015
      %v2248 = vpack.c.bf16 %v2024, %v2016
      %v2249 = vpack.c.bf16 %v2025, %v2017
      %v2250 = vpack.c.bf16 %v2026, %v2018
      %v2251 = vpack.c.bf16 %v2027, %v2019
      %v2252 = vpack.c.bf16 %v2028, %v2020
      %v2253 = vpack.c.bf16 %v2037, %v2029
      %v2254 = vpack.c.bf16 %v2038, %v2030
      %v2255 = vpack.c.bf16 %v2039, %v2031
      %v2256 = vpack.c.bf16 %v2040, %v2032
      %v2257 = vpack.c.bf16 %v2041, %v2033
      %v2258 = vpack.c.bf16 %v2042, %v2034
      %v2259 = vpack.c.bf16 %v2043, %v2035
      %v2260 = vpack.c.bf16 %v2044, %v2036
      %v2261 = vpack.c.bf16 %v2053, %v2045
      %v2262 = vpack.c.bf16 %v2054, %v2046
      %v2263 = vpack.c.bf16 %v2055, %v2047
      %v2264 = vpack.c.bf16 %v2056, %v2048
      %v2265 = vpack.c.bf16 %v2057, %v2049
      %v2266 = vpack.c.bf16 %v2058, %v2050
      %v2267 = vpack.c.bf16 %v2059, %v2051
      %v2268 = vpack.c.bf16 %v2060, %v2052
      %v2269 = vpack.c.bf16 %v2069, %v2061
      %v2270 = vpack.c.bf16 %v2070, %v2062
      %v2271 = vpack.c.bf16 %v2071, %v2063
      %v2272 = vpack.c.bf16 %v2072, %v2064
      %v2273 = vpack.c.bf16 %v2073, %v2065
      %v2274 = vpack.c.bf16 %v2074, %v2066
      %v2275 = vpack.c.bf16 %v2075, %v2067
      %v2276 = vpack.c.bf16 %v2076, %v2068
      %v2277 = vpack.c.bf16 %v2085, %v2077
      %v2278 = vpack.c.bf16 %v2086, %v2078
      %v2279 = vpack.c.bf16 %v2087, %v2079
      %v2280 = vpack.c.bf16 %v2088, %v2080
      %v2281 = vpack.c.bf16 %v2089, %v2081
      %v2282 = vpack.c.bf16 %v2090, %v2082
      %v2283 = vpack.c.bf16 %v2091, %v2083
      %v2284 = vpack.c.bf16 %v2092, %v2084
      %v2285 = vpack.c.bf16 %v2101, %v2093
      %v2286 = vpack.c.bf16 %v2102, %v2094
      %v2287 = vpack.c.bf16 %v2103, %v2095
      %v2288 = vpack.c.bf16 %v2104, %v2096
      %v2289 = vpack.c.bf16 %v2105, %v2097
      %v2290 = vpack.c.bf16 %v2106, %v2098
      %v2291 = vpack.c.bf16 %v2107, %v2099
      %v2292 = vpack.c.bf16 %v2108, %v2100
      %v2293 = vpack.c.bf16 %v2117, %v2109
      %v2294 = vpack.c.bf16 %v2118, %v2110
      %v2295 = vpack.c.bf16 %v2119, %v2111
      %v2296 = vpack.c.bf16 %v2120, %v2112
      %v2297 = vpack.c.bf16 %v2121, %v2113
      %v2298 = vpack.c.bf16 %v2122, %v2114
      %v2299 = vpack.c.bf16 %v2123, %v2115
      %v2300 = vpack.c.bf16 %v2124, %v2116
      %v2301 = vpack.c.bf16 %v2133, %v2125
      %v2302 = vpack.c.bf16 %v2134, %v2126
      %v2303 = vpack.c.bf16 %v2135, %v2127
      %v2304 = vpack.c.bf16 %v2136, %v2128
      %v2305 = vpack.c.bf16 %v2137, %v2129
      %v2306 = vpack.c.bf16 %v2138, %v2130
      %v2307 = vpack.c.bf16 %v2139, %v2131
      %v2308 = vpack.c.bf16 %v2140, %v2132
      %v2309 = vpack.c.bf16 %v2149, %v2141
      %v2310 = vpack.c.bf16 %v2150, %v2142
      %v2311 = vpack.c.bf16 %v2151, %v2143
      %v2312 = vpack.c.bf16 %v2152, %v2144
      %v2313 = vpack.c.bf16 %v2153, %v2145
      %v2314 = vpack.c.bf16 %v2154, %v2146
      %v2315 = vpack.c.bf16 %v2155, %v2147
      %v2316 = vpack.c.bf16 %v2156, %v2148
      %v2317 = vpack.c.bf16 %v2165, %v2157
      %v2318 = vpack.c.bf16 %v2166, %v2158
      %v2319 = vpack.c.bf16 %v2167, %v2159
      %v2320 = vpack.c.bf16 %v2168, %v2160
      %v2321 = vpack.c.bf16 %v2169, %v2161
      %v2322 = vpack.c.bf16 %v2170, %v2162
      %v2323 = vpack.c.bf16 %v2171, %v2163
      %v2324 = vpack.c.bf16 %v2172, %v2164
      %v2325 = vpack.c.bf16 %v2181, %v2173
      %v2326 = vpack.c.bf16 %v2182, %v2174
      %v2327 = vpack.c.bf16 %v2183, %v2175
      %v2328 = vpack.c.bf16 %v2184, %v2176
      %v2329 = vpack.c.bf16 %v2185, %v2177
      %v2330 = vpack.c.bf16 %v2186, %v2178
      %v2331 = vpack.c.bf16 %v2187, %v2179
      %v2332 = vpack.c.bf16 %v2188, %v2180
      %v2333 = vpack.c.bf16 %v2197, %v2189
      %v2334 = vpack.c.bf16 %v2198, %v2190
      %v2335 = vpack.c.bf16 %v2199, %v2191
      %v2336 = vpack.c.bf16 %v2200, %v2192
      %v2337 = vpack.c.bf16 %v2201, %v2193
      %v2338 = vpack.c.bf16 %v2202, %v2194
      %v2339 = vpack.c.bf16 %v2203, %v2195
      %v2340 = vpack.c.bf16 %v2204, %v2196
      %v2341 = vpack.c.bf16 %v2213, %v2205
      %v2342 = vpack.c.bf16 %v2214, %v2206
      %v2343 = vpack.c.bf16 %v2215, %v2207
      %v2344 = vpack.c.bf16 %v2216, %v2208
      %v2345 = vpack.c.bf16 %v2217, %v2209
      %v2346 = vpack.c.bf16 %v2218, %v2210
      %v2347 = vpack.c.bf16 %v2219, %v2211
      %v2348 = vpack.c.bf16 %v2220, %v2212
      %v2349 = vld [vmem:[%s3] sm:$0xff]
      %v2350 = vld [vmem:[%s3 + $0x8] sm:$0xff]
      %v2351 = vld [vmem:[%s3 + $0x10] sm:$0xff]
      %v2352 = vld [vmem:[%s3 + $0x18] sm:$0xff]
      %v2353 = vld [vmem:[%s3 + $0x20] sm:$0xff]
      %v2354 = vld [vmem:[%s3 + $0x28] sm:$0xff]
      %v2355 = vld [vmem:[%s3 + $0x30] sm:$0xff]
      %v2356 = vld [vmem:[%s3 + $0x38] sm:$0xff]
      %v2357 = vld [vmem:[%s3 + $0x40] sm:$0xff]
      %v2358 = vld [vmem:[%s3 + $0x48] sm:$0xff]
      %v2359 = vld [vmem:[%s3 + $0x50] sm:$0xff]
      %v2360 = vld [vmem:[%s3 + $0x58] sm:$0xff]
      %v2361 = vld [vmem:[%s3 + $0x60] sm:$0xff]
      %v2362 = vld [vmem:[%s3 + $0x68] sm:$0xff]
      %v2363 = vld [vmem:[%s3 + $0x70] sm:$0xff]
      %v2364 = vld [vmem:[%s3 + $0x78] sm:$0xff]
      %v2365 = vld [vmem:[%s3 + $0x80] sm:$0xff]
      %v2366 = vld [vmem:[%s3 + $0x88] sm:$0xff]
      %v2367 = vld [vmem:[%s3 + $0x90] sm:$0xff]
      %v2368 = vld [vmem:[%s3 + $0x98] sm:$0xff]
      %v2369 = vld [vmem:[%s3 + $0xa0] sm:$0xff]
      %v2370 = vld [vmem:[%s3 + $0xa8] sm:$0xff]
      %v2371 = vld [vmem:[%s3 + $0xb0] sm:$0xff]
      %v2372 = vld [vmem:[%s3 + $0xb8] sm:$0xff]
      %v2373 = vld [vmem:[%s3 + $0xc0] sm:$0xff]
      %v2374 = vld [vmem:[%s3 + $0xc8] sm:$0xff]
      %v2375 = vld [vmem:[%s3 + $0xd0] sm:$0xff]
      %v2376 = vld [vmem:[%s3 + $0xd8] sm:$0xff]
      %v2377 = vld [vmem:[%s3 + $0xe0] sm:$0xff]
      %v2378 = vld [vmem:[%s3 + $0xe8] sm:$0xff]
      %v2379 = vld [vmem:[%s3 + $0xf0] sm:$0xff]
      %v2380 = vld [vmem:[%s3 + $0xf8] sm:$0xff]
      %v2381 = vld [vmem:[%s3 + $0x100] sm:$0xff]
      %v2382 = vld [vmem:[%s3 + $0x108] sm:$0xff]
      %v2383 = vld [vmem:[%s3 + $0x110] sm:$0xff]
      %v2384 = vld [vmem:[%s3 + $0x118] sm:$0xff]
      %v2385 = vld [vmem:[%s3 + $0x120] sm:$0xff]
      %v2386 = vld [vmem:[%s3 + $0x128] sm:$0xff]
      %v2387 = vld [vmem:[%s3 + $0x130] sm:$0xff]
      %v2388 = vld [vmem:[%s3 + $0x138] sm:$0xff]
      %v2389 = vld [vmem:[%s3 + $0x140] sm:$0xff]
      %v2390 = vld [vmem:[%s3 + $0x148] sm:$0xff]
      %v2391 = vld [vmem:[%s3 + $0x150] sm:$0xff]
      %v2392 = vld [vmem:[%s3 + $0x158] sm:$0xff]
      %v2393 = vld [vmem:[%s3 + $0x160] sm:$0xff]
      %v2394 = vld [vmem:[%s3 + $0x168] sm:$0xff]
      %v2395 = vld [vmem:[%s3 + $0x170] sm:$0xff]
      %v2396 = vld [vmem:[%s3 + $0x178] sm:$0xff]
      %v2397 = vld [vmem:[%s3 + $0x180] sm:$0xff]
      %v2398 = vld [vmem:[%s3 + $0x188] sm:$0xff]
      %v2399 = vld [vmem:[%s3 + $0x190] sm:$0xff]
      %v2400 = vld [vmem:[%s3 + $0x198] sm:$0xff]
      %v2401 = vld [vmem:[%s3 + $0x1a0] sm:$0xff]
      %v2402 = vld [vmem:[%s3 + $0x1a8] sm:$0xff]
      %v2403 = vld [vmem:[%s3 + $0x1b0] sm:$0xff]
      %v2404 = vld [vmem:[%s3 + $0x1b8] sm:$0xff]
      %v2405 = vld [vmem:[%s3 + $0x1c0] sm:$0xff]
      %v2406 = vld [vmem:[%s3 + $0x1c8] sm:$0xff]
      %v2407 = vld [vmem:[%s3 + $0x1d0] sm:$0xff]
      %v2408 = vld [vmem:[%s3 + $0x1d8] sm:$0xff]
      %v2409 = vld [vmem:[%s3 + $0x1e0] sm:$0xff]
      %v2410 = vld [vmem:[%s3 + $0x1e8] sm:$0xff]
      %v2411 = vld [vmem:[%s3 + $0x1f0] sm:$0xff]
      %v2412 = vld [vmem:[%s3 + $0x1f8] sm:$0xff]
      %v2413 = vld [vmem:[%s3 + $0x200] sm:$0xff]
      %v2414 = vld [vmem:[%s3 + $0x208] sm:$0xff]
      %v2415 = vld [vmem:[%s3 + $0x210] sm:$0xff]
      %v2416 = vld [vmem:[%s3 + $0x218] sm:$0xff]
      %v2417 = vld [vmem:[%s3 + $0x220] sm:$0xff]
      %v2418 = vld [vmem:[%s3 + $0x228] sm:$0xff]
      %v2419 = vld [vmem:[%s3 + $0x230] sm:$0xff]
      %v2420 = vld [vmem:[%s3 + $0x238] sm:$0xff]
      %v2421 = vld [vmem:[%s3 + $0x240] sm:$0xff]
      %v2422 = vld [vmem:[%s3 + $0x248] sm:$0xff]
      %v2423 = vld [vmem:[%s3 + $0x250] sm:$0xff]
      %v2424 = vld [vmem:[%s3 + $0x258] sm:$0xff]
      %v2425 = vld [vmem:[%s3 + $0x260] sm:$0xff]
      %v2426 = vld [vmem:[%s3 + $0x268] sm:$0xff]
      %v2427 = vld [vmem:[%s3 + $0x270] sm:$0xff]
      %v2428 = vld [vmem:[%s3 + $0x278] sm:$0xff]
      %v2429 = vld [vmem:[%s3 + $0x280] sm:$0xff]
      %v2430 = vld [vmem:[%s3 + $0x288] sm:$0xff]
      %v2431 = vld [vmem:[%s3 + $0x290] sm:$0xff]
      %v2432 = vld [vmem:[%s3 + $0x298] sm:$0xff]
      %v2433 = vld [vmem:[%s3 + $0x2a0] sm:$0xff]
      %v2434 = vld [vmem:[%s3 + $0x2a8] sm:$0xff]
      %v2435 = vld [vmem:[%s3 + $0x2b0] sm:$0xff]
      %v2436 = vld [vmem:[%s3 + $0x2b8] sm:$0xff]
      %v2437 = vld [vmem:[%s3 + $0x2c0] sm:$0xff]
      %v2438 = vld [vmem:[%s3 + $0x2c8] sm:$0xff]
      %v2439 = vld [vmem:[%s3 + $0x2d0] sm:$0xff]
      %v2440 = vld [vmem:[%s3 + $0x2d8] sm:$0xff]
      %v2441 = vld [vmem:[%s3 + $0x2e0] sm:$0xff]
      %v2442 = vld [vmem:[%s3 + $0x2e8] sm:$0xff]
      %v2443 = vld [vmem:[%s3 + $0x2f0] sm:$0xff]
      %v2444 = vld [vmem:[%s3 + $0x2f8] sm:$0xff]
      %v2445 = vld [vmem:[%s3 + $0x300] sm:$0xff]
      %v2446 = vld [vmem:[%s3 + $0x308] sm:$0xff]
      %v2447 = vld [vmem:[%s3 + $0x310] sm:$0xff]
      %v2448 = vld [vmem:[%s3 + $0x318] sm:$0xff]
      %v2449 = vld [vmem:[%s3 + $0x320] sm:$0xff]
      %v2450 = vld [vmem:[%s3 + $0x328] sm:$0xff]
      %v2451 = vld [vmem:[%s3 + $0x330] sm:$0xff]
      %v2452 = vld [vmem:[%s3 + $0x338] sm:$0xff]
      %v2453 = vld [vmem:[%s3 + $0x340] sm:$0xff]
      %v2454 = vld [vmem:[%s3 + $0x348] sm:$0xff]
      %v2455 = vld [vmem:[%s3 + $0x350] sm:$0xff]
      %v2456 = vld [vmem:[%s3 + $0x358] sm:$0xff]
      %v2457 = vld [vmem:[%s3 + $0x360] sm:$0xff]
      %v2458 = vld [vmem:[%s3 + $0x368] sm:$0xff]
      %v2459 = vld [vmem:[%s3 + $0x370] sm:$0xff]
      %v2460 = vld [vmem:[%s3 + $0x378] sm:$0xff]
      %v2461 = vld [vmem:[%s3 + $0x380] sm:$0xff]
      %v2462 = vld [vmem:[%s3 + $0x388] sm:$0xff]
      %v2463 = vld [vmem:[%s3 + $0x390] sm:$0xff]
      %v2464 = vld [vmem:[%s3 + $0x398] sm:$0xff]
      %v2465 = vld [vmem:[%s3 + $0x3a0] sm:$0xff]
      %v2466 = vld [vmem:[%s3 + $0x3a8] sm:$0xff]
      %v2467 = vld [vmem:[%s3 + $0x3b0] sm:$0xff]
      %v2468 = vld [vmem:[%s3 + $0x3b8] sm:$0xff]
      %v2469 = vld [vmem:[%s3 + $0x3c0] sm:$0xff]
      %v2470 = vld [vmem:[%s3 + $0x3c8] sm:$0xff]
      %v2471 = vld [vmem:[%s3 + $0x3d0] sm:$0xff]
      %v2472 = vld [vmem:[%s3 + $0x3d8] sm:$0xff]
      %v2473 = vld [vmem:[%s3 + $0x3e0] sm:$0xff]
      %v2474 = vld [vmem:[%s3 + $0x3e8] sm:$0xff]
      %v2475 = vld [vmem:[%s3 + $0x3f0] sm:$0xff]
      %v2476 = vld [vmem:[%s3 + $0x3f8] sm:$0xff]
      %v2477 = vld [vmem:[%s4] sm:$0x3]
      %v2479 = vlaneseq
      %v2480 = vshrl.u32 %v2479, 7
      %v2481 = vsub.s32 0, %v2480
      %v2482 = vrot.slane %v2477, %v2481
      %v2483 = vlaneseq
      %v2484 = vshrl.u32 %v2483, 7
      %v2485 = vsub.s32 1, %v2484
      %v2486 = vrot.slane %v2477, %v2485
      %v2617 = vunpack.c.l.b16 %v2349
      %v2618 = vunpack.c.h.b16 %v2349
      %v2619 = vunpack.c.l.b16 %v2350
      %v2620 = vunpack.c.h.b16 %v2350
      %v2621 = vunpack.c.l.b16 %v2351
      %v2622 = vunpack.c.h.b16 %v2351
      %v2623 = vunpack.c.l.b16 %v2352
      %v2624 = vunpack.c.h.b16 %v2352
      %v2625 = vunpack.c.l.b16 %v2353
      %v2626 = vunpack.c.h.b16 %v2353
      %v2627 = vunpack.c.l.b16 %v2354
      %v2628 = vunpack.c.h.b16 %v2354
      %v2629 = vunpack.c.l.b16 %v2355
      %v2630 = vunpack.c.h.b16 %v2355
      %v2631 = vunpack.c.l.b16 %v2356
      %v2632 = vunpack.c.h.b16 %v2356
      %v2633 = vunpack.c.l.b16 %v2357
      %v2634 = vunpack.c.h.b16 %v2357
      %v2635 = vunpack.c.l.b16 %v2358
      %v2636 = vunpack.c.h.b16 %v2358
      %v2637 = vunpack.c.l.b16 %v2359
      %v2638 = vunpack.c.h.b16 %v2359
      %v2639 = vunpack.c.l.b16 %v2360
      %v2640 = vunpack.c.h.b16 %v2360
      %v2641 = vunpack.c.l.b16 %v2361
      %v2642 = vunpack.c.h.b16 %v2361
      %v2643 = vunpack.c.l.b16 %v2362
      %v2644 = vunpack.c.h.b16 %v2362
      %v2645 = vunpack.c.l.b16 %v2363
      %v2646 = vunpack.c.h.b16 %v2363
      %v2647 = vunpack.c.l.b16 %v2364
      %v2648 = vunpack.c.h.b16 %v2364
      %v2649 = vunpack.c.l.b16 %v2365
      %v2650 = vunpack.c.h.b16 %v2365
      %v2651 = vunpack.c.l.b16 %v2366
      %v2652 = vunpack.c.h.b16 %v2366
      %v2653 = vunpack.c.l.b16 %v2367
      %v2654 = vunpack.c.h.b16 %v2367
      %v2655 = vunpack.c.l.b16 %v2368
      %v2656 = vunpack.c.h.b16 %v2368
      %v2657 = vunpack.c.l.b16 %v2369
      %v2658 = vunpack.c.h.b16 %v2369
      %v2659 = vunpack.c.l.b16 %v2370
      %v2660 = vunpack.c.h.b16 %v2370
      %v2661 = vunpack.c.l.b16 %v2371
      %v2662 = vunpack.c.h.b16 %v2371
      %v2663 = vunpack.c.l.b16 %v2372
      %v2664 = vunpack.c.h.b16 %v2372
      %v2665 = vunpack.c.l.b16 %v2373
      %v2666 = vunpack.c.h.b16 %v2373
      %v2667 = vunpack.c.l.b16 %v2374
      %v2668 = vunpack.c.h.b16 %v2374
      %v2669 = vunpack.c.l.b16 %v2375
      %v2670 = vunpack.c.h.b16 %v2375
      %v2671 = vunpack.c.l.b16 %v2376
      %v2672 = vunpack.c.h.b16 %v2376
      %v2673 = vunpack.c.l.b16 %v2377
      %v2674 = vunpack.c.h.b16 %v2377
      %v2675 = vunpack.c.l.b16 %v2378
      %v2676 = vunpack.c.h.b16 %v2378
      %v2677 = vunpack.c.l.b16 %v2379
      %v2678 = vunpack.c.h.b16 %v2379
      %v2679 = vunpack.c.l.b16 %v2380
      %v2680 = vunpack.c.h.b16 %v2380
      %v2681 = vunpack.c.l.b16 %v2381
      %v2682 = vunpack.c.h.b16 %v2381
      %v2683 = vunpack.c.l.b16 %v2382
      %v2684 = vunpack.c.h.b16 %v2382
      %v2685 = vunpack.c.l.b16 %v2383
      %v2686 = vunpack.c.h.b16 %v2383
      %v2687 = vunpack.c.l.b16 %v2384
      %v2688 = vunpack.c.h.b16 %v2384
      %v2689 = vunpack.c.l.b16 %v2385
      %v2690 = vunpack.c.h.b16 %v2385
      %v2691 = vunpack.c.l.b16 %v2386
      %v2692 = vunpack.c.h.b16 %v2386
      %v2693 = vunpack.c.l.b16 %v2387
      %v2694 = vunpack.c.h.b16 %v2387
      %v2695 = vunpack.c.l.b16 %v2388
      %v2696 = vunpack.c.h.b16 %v2388
      %v2697 = vunpack.c.l.b16 %v2389
      %v2698 = vunpack.c.h.b16 %v2389
      %v2699 = vunpack.c.l.b16 %v2390
      %v2700 = vunpack.c.h.b16 %v2390
      %v2701 = vunpack.c.l.b16 %v2391
      %v2702 = vunpack.c.h.b16 %v2391
      %v2703 = vunpack.c.l.b16 %v2392
      %v2704 = vunpack.c.h.b16 %v2392
      %v2705 = vunpack.c.l.b16 %v2393
      %v2706 = vunpack.c.h.b16 %v2393
      %v2707 = vunpack.c.l.b16 %v2394
      %v2708 = vunpack.c.h.b16 %v2394
      %v2709 = vunpack.c.l.b16 %v2395
      %v2710 = vunpack.c.h.b16 %v2395
      %v2711 = vunpack.c.l.b16 %v2396
      %v2712 = vunpack.c.h.b16 %v2396
      %v2713 = vunpack.c.l.b16 %v2397
      %v2714 = vunpack.c.h.b16 %v2397
      %v2715 = vunpack.c.l.b16 %v2398
      %v2716 = vunpack.c.h.b16 %v2398
      %v2717 = vunpack.c.l.b16 %v2399
      %v2718 = vunpack.c.h.b16 %v2399
      %v2719 = vunpack.c.l.b16 %v2400
      %v2720 = vunpack.c.h.b16 %v2400
      %v2721 = vunpack.c.l.b16 %v2401
      %v2722 = vunpack.c.h.b16 %v2401
      %v2723 = vunpack.c.l.b16 %v2402
      %v2724 = vunpack.c.h.b16 %v2402
      %v2725 = vunpack.c.l.b16 %v2403
      %v2726 = vunpack.c.h.b16 %v2403
      %v2727 = vunpack.c.l.b16 %v2404
      %v2728 = vunpack.c.h.b16 %v2404
      %v2729 = vunpack.c.l.b16 %v2405
      %v2730 = vunpack.c.h.b16 %v2405
      %v2731 = vunpack.c.l.b16 %v2406
      %v2732 = vunpack.c.h.b16 %v2406
      %v2733 = vunpack.c.l.b16 %v2407
      %v2734 = vunpack.c.h.b16 %v2407
      %v2735 = vunpack.c.l.b16 %v2408
      %v2736 = vunpack.c.h.b16 %v2408
      %v2737 = vunpack.c.l.b16 %v2409
      %v2738 = vunpack.c.h.b16 %v2409
      %v2739 = vunpack.c.l.b16 %v2410
      %v2740 = vunpack.c.h.b16 %v2410
      %v2741 = vunpack.c.l.b16 %v2411
      %v2742 = vunpack.c.h.b16 %v2411
      %v2743 = vunpack.c.l.b16 %v2412
      %v2744 = vunpack.c.h.b16 %v2412
      %v2745 = vunpack.c.l.b16 %v2413
      %v2746 = vunpack.c.h.b16 %v2413
      %v2747 = vunpack.c.l.b16 %v2414
      %v2748 = vunpack.c.h.b16 %v2414
      %v2749 = vunpack.c.l.b16 %v2415
      %v2750 = vunpack.c.h.b16 %v2415
      %v2751 = vunpack.c.l.b16 %v2416
      %v2752 = vunpack.c.h.b16 %v2416
      %v2753 = vunpack.c.l.b16 %v2417
      %v2754 = vunpack.c.h.b16 %v2417
      %v2755 = vunpack.c.l.b16 %v2418
      %v2756 = vunpack.c.h.b16 %v2418
      %v2757 = vunpack.c.l.b16 %v2419
      %v2758 = vunpack.c.h.b16 %v2419
      %v2759 = vunpack.c.l.b16 %v2420
      %v2760 = vunpack.c.h.b16 %v2420
      %v2761 = vunpack.c.l.b16 %v2421
      %v2762 = vunpack.c.h.b16 %v2421
      %v2763 = vunpack.c.l.b16 %v2422
      %v2764 = vunpack.c.h.b16 %v2422
      %v2765 = vunpack.c.l.b16 %v2423
      %v2766 = vunpack.c.h.b16 %v2423
      %v2767 = vunpack.c.l.b16 %v2424
      %v2768 = vunpack.c.h.b16 %v2424
      %v2769 = vunpack.c.l.b16 %v2425
      %v2770 = vunpack.c.h.b16 %v2425
      %v2771 = vunpack.c.l.b16 %v2426
      %v2772 = vunpack.c.h.b16 %v2426
      %v2773 = vunpack.c.l.b16 %v2427
      %v2774 = vunpack.c.h.b16 %v2427
      %v2775 = vunpack.c.l.b16 %v2428
      %v2776 = vunpack.c.h.b16 %v2428
      %v2777 = vunpack.c.l.b16 %v2429
      %v2778 = vunpack.c.h.b16 %v2429
      %v2779 = vunpack.c.l.b16 %v2430
      %v2780 = vunpack.c.h.b16 %v2430
      %v2781 = vunpack.c.l.b16 %v2431
      %v2782 = vunpack.c.h.b16 %v2431
      %v2783 = vunpack.c.l.b16 %v2432
      %v2784 = vunpack.c.h.b16 %v2432
      %v2785 = vunpack.c.l.b16 %v2433
      %v2786 = vunpack.c.h.b16 %v2433
      %v2787 = vunpack.c.l.b16 %v2434
      %v2788 = vunpack.c.h.b16 %v2434
      %v2789 = vunpack.c.l.b16 %v2435
      %v2790 = vunpack.c.h.b16 %v2435
      %v2791 = vunpack.c.l.b16 %v2436
      %v2792 = vunpack.c.h.b16 %v2436
      %v2793 = vunpack.c.l.b16 %v2437
      %v2794 = vunpack.c.h.b16 %v2437
      %v2795 = vunpack.c.l.b16 %v2438
      %v2796 = vunpack.c.h.b16 %v2438
      %v2797 = vunpack.c.l.b16 %v2439
      %v2798 = vunpack.c.h.b16 %v2439
      %v2799 = vunpack.c.l.b16 %v2440
      %v2800 = vunpack.c.h.b16 %v2440
      %v2801 = vunpack.c.l.b16 %v2441
      %v2802 = vunpack.c.h.b16 %v2441
      %v2803 = vunpack.c.l.b16 %v2442
      %v2804 = vunpack.c.h.b16 %v2442
      %v2805 = vunpack.c.l.b16 %v2443
      %v2806 = vunpack.c.h.b16 %v2443
      %v2807 = vunpack.c.l.b16 %v2444
      %v2808 = vunpack.c.h.b16 %v2444
      %v2809 = vunpack.c.l.b16 %v2445
      %v2810 = vunpack.c.h.b16 %v2445
      %v2811 = vunpack.c.l.b16 %v2446
      %v2812 = vunpack.c.h.b16 %v2446
      %v2813 = vunpack.c.l.b16 %v2447
      %v2814 = vunpack.c.h.b16 %v2447
      %v2815 = vunpack.c.l.b16 %v2448
      %v2816 = vunpack.c.h.b16 %v2448
      %v2817 = vunpack.c.l.b16 %v2449
      %v2818 = vunpack.c.h.b16 %v2449
      %v2819 = vunpack.c.l.b16 %v2450
      %v2820 = vunpack.c.h.b16 %v2450
      %v2821 = vunpack.c.l.b16 %v2451
      %v2822 = vunpack.c.h.b16 %v2451
      %v2823 = vunpack.c.l.b16 %v2452
      %v2824 = vunpack.c.h.b16 %v2452
      %v2825 = vunpack.c.l.b16 %v2453
      %v2826 = vunpack.c.h.b16 %v2453
      %v2827 = vunpack.c.l.b16 %v2454
      %v2828 = vunpack.c.h.b16 %v2454
      %v2829 = vunpack.c.l.b16 %v2455
      %v2830 = vunpack.c.h.b16 %v2455
      %v2831 = vunpack.c.l.b16 %v2456
      %v2832 = vunpack.c.h.b16 %v2456
      %v2833 = vunpack.c.l.b16 %v2457
      %v2834 = vunpack.c.h.b16 %v2457
      %v2835 = vunpack.c.l.b16 %v2458
      %v2836 = vunpack.c.h.b16 %v2458
      %v2837 = vunpack.c.l.b16 %v2459
      %v2838 = vunpack.c.h.b16 %v2459
      %v2839 = vunpack.c.l.b16 %v2460
      %v2840 = vunpack.c.h.b16 %v2460
      %v2841 = vunpack.c.l.b16 %v2461
      %v2842 = vunpack.c.h.b16 %v2461
      %v2843 = vunpack.c.l.b16 %v2462
      %v2844 = vunpack.c.h.b16 %v2462
      %v2845 = vunpack.c.l.b16 %v2463
      %v2846 = vunpack.c.h.b16 %v2463
      %v2847 = vunpack.c.l.b16 %v2464
      %v2848 = vunpack.c.h.b16 %v2464
      %v2849 = vunpack.c.l.b16 %v2465
      %v2850 = vunpack.c.h.b16 %v2465
      %v2851 = vunpack.c.l.b16 %v2466
      %v2852 = vunpack.c.h.b16 %v2466
      %v2853 = vunpack.c.l.b16 %v2467
      %v2854 = vunpack.c.h.b16 %v2467
      %v2855 = vunpack.c.l.b16 %v2468
      %v2856 = vunpack.c.h.b16 %v2468
      %v2857 = vunpack.c.l.b16 %v2469
      %v2858 = vunpack.c.h.b16 %v2469
      %v2859 = vunpack.c.l.b16 %v2470
      %v2860 = vunpack.c.h.b16 %v2470
      %v2861 = vunpack.c.l.b16 %v2471
      %v2862 = vunpack.c.h.b16 %v2471
      %v2863 = vunpack.c.l.b16 %v2472
      %v2864 = vunpack.c.h.b16 %v2472
      %v2865 = vunpack.c.l.b16 %v2473
      %v2866 = vunpack.c.h.b16 %v2473
      %v2867 = vunpack.c.l.b16 %v2474
      %v2868 = vunpack.c.h.b16 %v2474
      %v2869 = vunpack.c.l.b16 %v2475
      %v2870 = vunpack.c.h.b16 %v2475
      %v2871 = vunpack.c.l.b16 %v2476
      %v2872 = vunpack.c.h.b16 %v2476
      %v2873 = vpack.c.b16 %v2619, %v2617
      %v2874 = vpack.c.b16 %v2620, %v2618
      %v2875 = vpack.c.b16 %v2623, %v2621
      %v2876 = vpack.c.b16 %v2624, %v2622
      %v2877 = vpack.c.b16 %v2627, %v2625
      %v2878 = vpack.c.b16 %v2628, %v2626
      %v2879 = vpack.c.b16 %v2631, %v2629
      %v2880 = vpack.c.b16 %v2632, %v2630
      %v2881 = vpack.c.b16 %v2635, %v2633
      %v2882 = vpack.c.b16 %v2636, %v2634
      %v2883 = vpack.c.b16 %v2639, %v2637
      %v2884 = vpack.c.b16 %v2640, %v2638
      %v2885 = vpack.c.b16 %v2643, %v2641
      %v2886 = vpack.c.b16 %v2644, %v2642
      %v2887 = vpack.c.b16 %v2647, %v2645
      %v2888 = vpack.c.b16 %v2648, %v2646
      %v2889 = vpack.c.b16 %v2651, %v2649
      %v2890 = vpack.c.b16 %v2652, %v2650
      %v2891 = vpack.c.b16 %v2655, %v2653
      %v2892 = vpack.c.b16 %v2656, %v2654
      %v2893 = vpack.c.b16 %v2659, %v2657
      %v2894 = vpack.c.b16 %v2660, %v2658
      %v2895 = vpack.c.b16 %v2663, %v2661
      %v2896 = vpack.c.b16 %v2664, %v2662
      %v2897 = vpack.c.b16 %v2667, %v2665
      %v2898 = vpack.c.b16 %v2668, %v2666
      %v2899 = vpack.c.b16 %v2671, %v2669
      %v2900 = vpack.c.b16 %v2672, %v2670
      %v2901 = vpack.c.b16 %v2675, %v2673
      %v2902 = vpack.c.b16 %v2676, %v2674
      %v2903 = vpack.c.b16 %v2679, %v2677
      %v2904 = vpack.c.b16 %v2680, %v2678
      %v2905 = vpack.c.b16 %v2683, %v2681
      %v2906 = vpack.c.b16 %v2684, %v2682
      %v2907 = vpack.c.b16 %v2687, %v2685
      %v2908 = vpack.c.b16 %v2688, %v2686
      %v2909 = vpack.c.b16 %v2691, %v2689
      %v2910 = vpack.c.b16 %v2692, %v2690
      %v2911 = vpack.c.b16 %v2695, %v2693
      %v2912 = vpack.c.b16 %v2696, %v2694
      %v2913 = vpack.c.b16 %v2699, %v2697
      %v2914 = vpack.c.b16 %v2700, %v2698
      %v2915 = vpack.c.b16 %v2703, %v2701
      %v2916 = vpack.c.b16 %v2704, %v2702
      %v2917 = vpack.c.b16 %v2707, %v2705
      %v2918 = vpack.c.b16 %v2708, %v2706
      %v2919 = vpack.c.b16 %v2711, %v2709
      %v2920 = vpack.c.b16 %v2712, %v2710
      %v2921 = vpack.c.b16 %v2715, %v2713
      %v2922 = vpack.c.b16 %v2716, %v2714
      %v2923 = vpack.c.b16 %v2719, %v2717
      %v2924 = vpack.c.b16 %v2720, %v2718
      %v2925 = vpack.c.b16 %v2723, %v2721
      %v2926 = vpack.c.b16 %v2724, %v2722
      %v2927 = vpack.c.b16 %v2727, %v2725
      %v2928 = vpack.c.b16 %v2728, %v2726
      %v2929 = vpack.c.b16 %v2731, %v2729
      %v2930 = vpack.c.b16 %v2732, %v2730
      %v2931 = vpack.c.b16 %v2735, %v2733
      %v2932 = vpack.c.b16 %v2736, %v2734
      %v2933 = vpack.c.b16 %v2739, %v2737
      %v2934 = vpack.c.b16 %v2740, %v2738
      %v2935 = vpack.c.b16 %v2743, %v2741
      %v2936 = vpack.c.b16 %v2744, %v2742
      %v2937 = vpack.c.b16 %v2747, %v2745
      %v2938 = vpack.c.b16 %v2748, %v2746
      %v2939 = vpack.c.b16 %v2751, %v2749
      %v2940 = vpack.c.b16 %v2752, %v2750
      %v2941 = vpack.c.b16 %v2755, %v2753
      %v2942 = vpack.c.b16 %v2756, %v2754
      %v2943 = vpack.c.b16 %v2759, %v2757
      %v2944 = vpack.c.b16 %v2760, %v2758
      %v2945 = vpack.c.b16 %v2763, %v2761
      %v2946 = vpack.c.b16 %v2764, %v2762
      %v2947 = vpack.c.b16 %v2767, %v2765
      %v2948 = vpack.c.b16 %v2768, %v2766
      %v2949 = vpack.c.b16 %v2771, %v2769
      %v2950 = vpack.c.b16 %v2772, %v2770
      %v2951 = vpack.c.b16 %v2775, %v2773
      %v2952 = vpack.c.b16 %v2776, %v2774
      %v2953 = vpack.c.b16 %v2779, %v2777
      %v2954 = vpack.c.b16 %v2780, %v2778
      %v2955 = vpack.c.b16 %v2783, %v2781
      %v2956 = vpack.c.b16 %v2784, %v2782
      %v2957 = vpack.c.b16 %v2787, %v2785
      %v2958 = vpack.c.b16 %v2788, %v2786
      %v2959 = vpack.c.b16 %v2791, %v2789
      %v2960 = vpack.c.b16 %v2792, %v2790
      %v2961 = vpack.c.b16 %v2795, %v2793
      %v2962 = vpack.c.b16 %v2796, %v2794
      %v2963 = vpack.c.b16 %v2799, %v2797
      %v2964 = vpack.c.b16 %v2800, %v2798
      %v2965 = vpack.c.b16 %v2803, %v2801
      %v2966 = vpack.c.b16 %v2804, %v2802
      %v2967 = vpack.c.b16 %v2807, %v2805
      %v2968 = vpack.c.b16 %v2808, %v2806
      %v2969 = vpack.c.b16 %v2811, %v2809
      %v2970 = vpack.c.b16 %v2812, %v2810
      %v2971 = vpack.c.b16 %v2815, %v2813
      %v2972 = vpack.c.b16 %v2816, %v2814
      %v2973 = vpack.c.b16 %v2819, %v2817
      %v2974 = vpack.c.b16 %v2820, %v2818
      %v2975 = vpack.c.b16 %v2823, %v2821
      %v2976 = vpack.c.b16 %v2824, %v2822
      %v2977 = vpack.c.b16 %v2827, %v2825
      %v2978 = vpack.c.b16 %v2828, %v2826
      %v2979 = vpack.c.b16 %v2831, %v2829
      %v2980 = vpack.c.b16 %v2832, %v2830
      %v2981 = vpack.c.b16 %v2835, %v2833
      %v2982 = vpack.c.b16 %v2836, %v2834
      %v2983 = vpack.c.b16 %v2839, %v2837
      %v2984 = vpack.c.b16 %v2840, %v2838
      %v2985 = vpack.c.b16 %v2843, %v2841
      %v2986 = vpack.c.b16 %v2844, %v2842
      %v2987 = vpack.c.b16 %v2847, %v2845
      %v2988 = vpack.c.b16 %v2848, %v2846
      %v2989 = vpack.c.b16 %v2851, %v2849
      %v2990 = vpack.c.b16 %v2852, %v2850
      %v2991 = vpack.c.b16 %v2855, %v2853
      %v2992 = vpack.c.b16 %v2856, %v2854
      %v2993 = vpack.c.b16 %v2859, %v2857
      %v2994 = vpack.c.b16 %v2860, %v2858
      %v2995 = vpack.c.b16 %v2863, %v2861
      %v2996 = vpack.c.b16 %v2864, %v2862
      %v2997 = vpack.c.b16 %v2867, %v2865
      %v2998 = vpack.c.b16 %v2868, %v2866
      %v2999 = vpack.c.b16 %v2871, %v2869
      %v3000 = vpack.c.b16 %v2872, %v2870
      %3129 = vmatprep.subr.bf16.mxu0 %v2874
      %3130 = vmatpush1.bf16.msra.mxu0 %v2873
      %3131 = vmatprep.subr.bf16.mxu0 %v2876
      %3132 = vmatpush1.bf16.msra.mxu0 %v2875
      %3133 = vmatprep.subr.bf16.mxu0 %v2878
      %3134 = vmatpush1.bf16.msra.mxu0 %v2877
      %3135 = vmatprep.subr.bf16.mxu0 %v2880
      %3136 = vmatpush1.bf16.msra.mxu0 %v2879
      %3137 = vmatprep.subr.bf16.mxu0 %v2882
      %3138 = vmatpush1.bf16.msra.mxu0 %v2881
      %3139 = vmatprep.subr.bf16.mxu0 %v2884
      %3140 = vmatpush1.bf16.msra.mxu0 %v2883
      %3141 = vmatprep.subr.bf16.mxu0 %v2886
      %3142 = vmatpush1.bf16.msra.mxu0 %v2885
      %3143 = vmatprep.subr.bf16.mxu0 %v2888
      %3144 = vmatpush1.bf16.msra.mxu0 %v2887
      %3145 = vmatprep.subr.bf16.mxu0 %v2890
      %3146 = vmatpush1.bf16.msra.mxu0 %v2889
      %3147 = vmatprep.subr.bf16.mxu0 %v2892
      %3148 = vmatpush1.bf16.msra.mxu0 %v2891
      %3149 = vmatprep.subr.bf16.mxu0 %v2894
      %3150 = vmatpush1.bf16.msra.mxu0 %v2893
      %3151 = vmatprep.subr.bf16.mxu0 %v2896
      %3152 = vmatpush1.bf16.msra.mxu0 %v2895
      %3153 = vmatprep.subr.bf16.mxu0 %v2898
      %3154 = vmatpush1.bf16.msra.mxu0 %v2897
      %3155 = vmatprep.subr.bf16.mxu0 %v2900
      %3156 = vmatpush1.bf16.msra.mxu0 %v2899
      %3157 = vmatprep.subr.bf16.mxu0 %v2902
      %3158 = vmatpush1.bf16.msra.mxu0 %v2901
      %3159 = vmatprep.subr.bf16.mxu0 %v2904
      %3160 = vmatpush1.bf16.msra.mxu0 %v2903
      %3161 = vmatprep.mubr.bf16.mxu0 %v2222
      %3162 = vmatmul.mubr.bf16.gmra.mrb[0].mxu0 %v2221
      %v3163 = vpop.f32.mrb[0].mxu0
      %v3164 = vadd.f32 %v2482, %v3163
      %v3165 = vpop.f32.mrb[0].mxu0
      %v3166 = vadd.f32 %v2486, %v3165
      %v3167 = vpop.f32.mrb[0].mxu0
      %v3168 = vadd.f32 %v2482, %v3167
      %v3169 = vpop.f32.mrb[0].mxu0
      %v3170 = vadd.f32 %v2486, %v3169
      %3171 = vmatprep.mubr.bf16.mxu0 %v2230
      %3172 = vmatmul.mubr.bf16.gmra.mrb[0].mxu0 %v2229
      %v3173 = vpop.f32.mrb[0].mxu0
      %v3174 = vadd.f32 %v2482, %v3173
      %v3175 = vpop.f32.mrb[0].mxu0
      %v3176 = vadd.f32 %v2486, %v3175
      %v3177 = vpop.f32.mrb[0].mxu0
      %v3178 = vadd.f32 %v2482, %v3177
      %v3179 = vpop.f32.mrb[0].mxu0
      %v3180 = vadd.f32 %v2486, %v3179
      %3181 = vmatprep.mubr.bf16.mxu0 %v2238
      %3182 = vmatmul.mubr.bf16.gmra.mrb[0].mxu0 %v2237
      %v3183 = vpop.f32.mrb[0].mxu0
      %v3184 = vadd.f32 %v2482, %v3183
      %v3185 = vpop.f32.mrb[0].mxu0
      %v3186 = vadd.f32 %v2486, %v3185
      %v3187 = vpop.f32.mrb[0].mxu0
      %v3188 = vadd.f32 %v2482, %v3187
      %v3189 = vpop.f32.mrb[0].mxu0
      %v3190 = vadd.f32 %v2486, %v3189
      %3191 = vmatprep.mubr.bf16.mxu0 %v2246
      %3192 = vmatmul.mubr.bf16.gmra.mrb[0].mxu0 %v2245
      %v3193 = vpop.f32.mrb[0].mxu0
      %v3194 = vadd.f32 %v2482, %v3193
      %v3195 = vpop.f32.mrb[0].mxu0
      %v3196 = vadd.f32 %v2486, %v3195
      %v3197 = vpop.f32.mrb[0].mxu0
      %v3198 = vadd.f32 %v2482, %v3197
      %v3199 = vpop.f32.mrb[0].mxu0
      %v3200 = vadd.f32 %v2486, %v3199
      %3201 = vmatprep.mubr.bf16.mxu0 %v2254
      %3202 = vmatmul.mubr.bf16.gmra.mrb[0].mxu0 %v2253
      %v3203 = vpop.f32.mrb[0].mxu0
      %v3204 = vadd.f32 %v2482, %v3203
      %v3205 = vpop.f32.mrb[0].mxu0
      %v3206 = vadd.f32 %v2486, %v3205
      %v3207 = vpop.f32.mrb[0].mxu0
      %v3208 = vadd.f32 %v2482, %v3207
      %v3209 = vpop.f32.mrb[0].mxu0
      %v3210 = vadd.f32 %v2486, %v3209
      %3211 = vmatprep.mubr.bf16.mxu0 %v2262
      %3212 = vmatmul.mubr.bf16.gmra.mrb[0].mxu0 %v2261
      %v3213 = vpop.f32.mrb[0].mxu0
      %v3214 = vadd.f32 %v2482, %v3213
      %v3215 = vpop.f32.mrb[0].mxu0
      %v3216 = vadd.f32 %v2486, %v3215
      %v3217 = vpop.f32.mrb[0].mxu0
      %v3218 = vadd.f32 %v2482, %v3217
      %v3219 = vpop.f32.mrb[0].mxu0
      %v3220 = vadd.f32 %v2486, %v3219
      %3221 = vmatprep.mubr.bf16.mxu0 %v2270
      %3222 = vmatmul.mubr.bf16.gmra.mrb[0].mxu0 %v2269
      %v3223 = vpop.f32.mrb[0].mxu0
      %v3224 = vadd.f32 %v2482, %v3223
      %v3225 = vpop.f32.mrb[0].mxu0
      %v3226 = vadd.f32 %v2486, %v3225
      %v3227 = vpop.f32.mrb[0].mxu0
      %v3228 = vadd.f32 %v2482, %v3227
      %v3229 = vpop.f32.mrb[0].mxu0
      %v3230 = vadd.f32 %v2486, %v3229
      %3231 = vmatprep.mubr.bf16.mxu0 %v2278
      %3232 = vmatmul.mubr.bf16.gmra.mrb[0].mxu0 %v2277
      %v3233 = vpop.f32.mrb[0].mxu0
      %v3234 = vadd.f32 %v2482, %v3233
      %v3235 = vpop.f32.mrb[0].mxu0
      %v3236 = vadd.f32 %v2486, %v3235
      %v3237 = vpop.f32.mrb[0].mxu0
      %v3238 = vadd.f32 %v2482, %v3237
      %v3239 = vpop.f32.mrb[0].mxu0
      %v3240 = vadd.f32 %v2486, %v3239
      %3241 = vmatprep.mubr.bf16.mxu0 %v2286
      %3242 = vmatmul.mubr.bf16.gmra.mrb[0].mxu0 %v2285
      %v3243 = vpop.f32.mrb[0].mxu0
      %v3244 = vadd.f32 %v2482, %v3243
      %v3245 = vpop.f32.mrb[0].mxu0
      %v3246 = vadd.f32 %v2486, %v3245
      %v3247 = vpop.f32.mrb[0].mxu0
      %v3248 = vadd.f32 %v2482, %v3247
      %v3249 = vpop.f32.mrb[0].mxu0
      %v3250 = vadd.f32 %v2486, %v3249
      %3251 = vmatprep.mubr.bf16.mxu0 %v2294
      %3252 = vmatmul.mubr.bf16.gmra.mrb[0].mxu0 %v2293
      %v3253 = vpop.f32.mrb[0].mxu0
      %v3254 = vadd.f32 %v2482, %v3253
      %v3255 = vpop.f32.mrb[0].mxu0
      %v3256 = vadd.f32 %v2486, %v3255
      %v3257 = vpop.f32.mrb[0].mxu0
      %v3258 = vadd.f32 %v2482, %v3257
      %v3259 = vpop.f32.mrb[0].mxu0
      %v3260 = vadd.f32 %v2486, %v3259
      %3261 = vmatprep.mubr.bf16.mxu0 %v2302
      %3262 = vmatmul.mubr.bf16.gmra.mrb[0].mxu0 %v2301
      %v3263 = vpop.f32.mrb[0].mxu0
      %v3264 = vadd.f32 %v2482, %v3263
      %v3265 = vpop.f32.mrb[0].mxu0
      %v3266 = vadd.f32 %v2486, %v3265
      %v3267 = vpop.f32.mrb[0].mxu0
      %v3268 = vadd.f32 %v2482, %v3267
      %v3269 = vpop.f32.mrb[0].mxu0
      %v3270 = vadd.f32 %v2486, %v3269
      %3271 = vmatprep.mubr.bf16.mxu0 %v2310
      %3272 = vmatmul.mubr.bf16.gmra.mrb[0].mxu0 %v2309
      %v3273 = vpop.f32.mrb[0].mxu0
      %v3274 = vadd.f32 %v2482, %v3273
      %v3275 = vpop.f32.mrb[0].mxu0
      %v3276 = vadd.f32 %v2486, %v3275
      %v3277 = vpop.f32.mrb[0].mxu0
      %v3278 = vadd.f32 %v2482, %v3277
      %v3279 = vpop.f32.mrb[0].mxu0
      %v3280 = vadd.f32 %v2486, %v3279
      %3281 = vmatprep.mubr.bf16.mxu0 %v2318
      %3282 = vmatmul.mubr.bf16.gmra.mrb[0].mxu0 %v2317
      %v3283 = vpop.f32.mrb[0].mxu0
      %v3284 = vadd.f32 %v2482, %v3283
      %v3285 = vpop.f32.mrb[0].mxu0
      %v3286 = vadd.f32 %v2486, %v3285
      %v3287 = vpop.f32.mrb[0].mxu0
      %v3288 = vadd.f32 %v2482, %v3287
      %v3289 = vpop.f32.mrb[0].mxu0
      %v3290 = vadd.f32 %v2486, %v3289
      %3291 = vmatprep.mubr.bf16.mxu0 %v2326
      %3292 = vmatmul.mubr.bf16.gmra.mrb[0].mxu0 %v2325
      %v3293 = vpop.f32.mrb[0].mxu0
      %v3294 = vadd.f32 %v2482, %v3293
      %v3295 = vpop.f32.mrb[0].mxu0
      %v3296 = vadd.f32 %v2486, %v3295
      %v3297 = vpop.f32.mrb[0].mxu0
      %v3298 = vadd.f32 %v2482, %v3297
      %v3299 = vpop.f32.mrb[0].mxu0
      %v3300 = vadd.f32 %v2486, %v3299
      %3301 = vmatprep.mubr.bf16.mxu0 %v2334
      %3302 = vmatmul.mubr.bf16.gmra.mrb[0].mxu0 %v2333
      %v3303 = vpop.f32.mrb[0].mxu0
      %v3304 = vadd.f32 %v2482, %v3303
      %v3305 = vpop.f32.mrb[0].mxu0
      %v3306 = vadd.f32 %v2486, %v3305
      %v3307 = vpop.f32.mrb[0].mxu0
      %v3308 = vadd.f32 %v2482, %v3307
      %v3309 = vpop.f32.mrb[0].mxu0
      %v3310 = vadd.f32 %v2486, %v3309
      %3311 = vmatprep.mubr.bf16.mxu0 %v2342
      %3312 = vmatmul.mubr.bf16.gmra.mrb[0].mxu0 %v2341
      %v3313 = vpop.f32.mrb[0].mxu0
      %v3314 = vadd.f32 %v2482, %v3313
      %v3315 = vpop.f32.mrb[0].mxu0
      %v3316 = vadd.f32 %v2486, %v3315
      %v3317 = vpop.f32.mrb[0].mxu0
      %v3318 = vadd.f32 %v2482, %v3317
      %v3319 = vpop.f32.mrb[0].mxu0
      %v3320 = vadd.f32 %v2486, %v3319
      %3321 = vdwg.mxu0
      %3322 = vmatprep.subr.bf16.mxu0 %v2906
      %3323 = vmatpush1.bf16.msra.mxu0 %v2905
      %3324 = vmatprep.subr.bf16.mxu0 %v2908
      %3325 = vmatpush1.bf16.msra.mxu0 %v2907
      %3326 = vmatprep.subr.bf16.mxu0 %v2910
      %3327 = vmatpush1.bf16.msra.mxu0 %v2909
      %3328 = vmatprep.subr.bf16.mxu0 %v2912
      %3329 = vmatpush1.bf16.msra.mxu0 %v2911
      %3330 = vmatprep.subr.bf16.mxu0 %v2914
      %3331 = vmatpush1.bf16.msra.mxu0 %v2913
      %3332 = vmatprep.subr.bf16.mxu0 %v2916
      %3333 = vmatpush1.bf16.msra.mxu0 %v2915
      %3334 = vmatprep.subr.bf16.mxu0 %v2918
      %3335 = vmatpush1.bf16.msra.mxu0 %v2917
      %3336 = vmatprep.subr.bf16.mxu0 %v2920
      %3337 = vmatpush1.bf16.msra.mxu0 %v2919
      %3338 = vmatprep.subr.bf16.mxu0 %v2922
      %3339 = vmatpush1.bf16.msra.mxu0 %v2921
      %3340 = vmatprep.subr.bf16.mxu0 %v2924
      %3341 = vmatpush1.bf16.msra.mxu0 %v2923
      %3342 = vmatprep.subr.bf16.mxu0 %v2926
      %3343 = vmatpush1.bf16.msra.mxu0 %v2925
      %3344 = vmatprep.subr.bf16.mxu0 %v2928
      %3345 = vmatpush1.bf16.msra.mxu0 %v2927
      %3346 = vmatprep.subr.bf16.mxu0 %v2930
      %3347 = vmatpush1.bf16.msra.mxu0 %v2929
      %3348 = vmatprep.subr.bf16.mxu0 %v2932
      %3349 = vmatpush1.bf16.msra.mxu0 %v2931
      %3350 = vmatprep.subr.bf16.mxu0 %v2934
      %3351 = vmatpush1.bf16.msra.mxu0 %v2933
      %3352 = vmatprep.subr.bf16.mxu0 %v2936
      %3353 = vmatpush1.bf16.msra.mxu0 %v2935
      %3354 = vmatprep.mubr.bf16.mxu0 %v2224
      %3355 = vmatmul.mubr.bf16.gmra.mrb[0].mxu0 %v2223
      %v3356 = vpop.f32.mrb[0].mxu0
      %v3357 = vadd.f32 %v3164, %v3356
      %v3358 = vpop.f32.mrb[0].mxu0
      %v3359 = vadd.f32 %v3166, %v3358
      %v3360 = vpop.f32.mrb[0].mxu0
      %v3361 = vadd.f32 %v3168, %v3360
      %v3362 = vpop.f32.mrb[0].mxu0
      %v3363 = vadd.f32 %v3170, %v3362
      %3364 = vmatprep.mubr.bf16.mxu0 %v2232
      %3365 = vmatmul.mubr.bf16.gmra.mrb[0].mxu0 %v2231
      %v3366 = vpop.f32.mrb[0].mxu0
      %v3367 = vadd.f32 %v3174, %v3366
      %v3368 = vpop.f32.mrb[0].mxu0
      %v3369 = vadd.f32 %v3176, %v3368
      %v3370 = vpop.f32.mrb[0].mxu0
      %v3371 = vadd.f32 %v3178, %v3370
      %v3372 = vpop.f32.mrb[0].mxu0
      %v3373 = vadd.f32 %v3180, %v3372
      %3374 = vmatprep.mubr.bf16.mxu0 %v2240
      %3375 = vmatmul.mubr.bf16.gmra.mrb[0].mxu0 %v2239
      %v3376 = vpop.f32.mrb[0].mxu0
      %v3377 = vadd.f32 %v3184, %v3376
      %v3378 = vpop.f32.mrb[0].mxu0
      %v3379 = vadd.f32 %v3186, %v3378
      %v3380 = vpop.f32.mrb[0].mxu0
      %v3381 = vadd.f32 %v3188, %v3380
      %v3382 = vpop.f32.mrb[0].mxu0
      %v3383 = vadd.f32 %v3190, %v3382
      %3384 = vmatprep.mubr.bf16.mxu0 %v2248
      %3385 = vmatmul.mubr.bf16.gmra.mrb[0].mxu0 %v2247
      %v3386 = vpop.f32.mrb[0].mxu0
      %v3387 = vadd.f32 %v3194, %v3386
      %v3388 = vpop.f32.mrb[0].mxu0
      %v3389 = vadd.f32 %v3196, %v3388
      %v3390 = vpop.f32.mrb[0].mxu0
      %v3391 = vadd.f32 %v3198, %v3390
      %v3392 = vpop.f32.mrb[0].mxu0
      %v3393 = vadd.f32 %v3200, %v3392
      %3394 = vmatprep.mubr.bf16.mxu0 %v2256
      %3395 = vmatmul.mubr.bf16.gmra.mrb[0].mxu0 %v2255
      %v3396 = vpop.f32.mrb[0].mxu0
      %v3397 = vadd.f32 %v3204, %v3396
      %v3398 = vpop.f32.mrb[0].mxu0
      %v3399 = vadd.f32 %v3206, %v3398
      %v3400 = vpop.f32.mrb[0].mxu0
      %v3401 = vadd.f32 %v3208, %v3400
      %v3402 = vpop.f32.mrb[0].mxu0
      %v3403 = vadd.f32 %v3210, %v3402
      %3404 = vmatprep.mubr.bf16.mxu0 %v2264
      %3405 = vmatmul.mubr.bf16.gmra.mrb[0].mxu0 %v2263
      %v3406 = vpop.f32.mrb[0].mxu0
      %v3407 = vadd.f32 %v3214, %v3406
      %v3408 = vpop.f32.mrb[0].mxu0
      %v3409 = vadd.f32 %v3216, %v3408
      %v3410 = vpop.f32.mrb[0].mxu0
      %v3411 = vadd.f32 %v3218, %v3410
      %v3412 = vpop.f32.mrb[0].mxu0
      %v3413 = vadd.f32 %v3220, %v3412
      %3414 = vmatprep.mubr.bf16.mxu0 %v2272
      %3415 = vmatmul.mubr.bf16.gmra.mrb[0].mxu0 %v2271
      %v3416 = vpop.f32.mrb[0].mxu0
      %v3417 = vadd.f32 %v3224, %v3416
      %v3418 = vpop.f32.mrb[0].mxu0
      %v3419 = vadd.f32 %v3226, %v3418
      %v3420 = vpop.f32.mrb[0].mxu0
      %v3421 = vadd.f32 %v3228, %v3420
      %v3422 = vpop.f32.mrb[0].mxu0
      %v3423 = vadd.f32 %v3230, %v3422
      %3424 = vmatprep.mubr.bf16.mxu0 %v2280
      %3425 = vmatmul.mubr.bf16.gmra.mrb[0].mxu0 %v2279
      %v3426 = vpop.f32.mrb[0].mxu0
      %v3427 = vadd.f32 %v3234, %v3426
      %v3428 = vpop.f32.mrb[0].mxu0
      %v3429 = vadd.f32 %v3236, %v3428
      %v3430 = vpop.f32.mrb[0].mxu0
      %v3431 = vadd.f32 %v3238, %v3430
      %v3432 = vpop.f32.mrb[0].mxu0
      %v3433 = vadd.f32 %v3240, %v3432
      %3434 = vmatprep.mubr.bf16.mxu0 %v2288
      %3435 = vmatmul.mubr.bf16.gmra.mrb[0].mxu0 %v2287
      %v3436 = vpop.f32.mrb[0].mxu0
      %v3437 = vadd.f32 %v3244, %v3436
      %v3438 = vpop.f32.mrb[0].mxu0
      %v3439 = vadd.f32 %v3246, %v3438
      %v3440 = vpop.f32.mrb[0].mxu0
      %v3441 = vadd.f32 %v3248, %v3440
      %v3442 = vpop.f32.mrb[0].mxu0
      %v3443 = vadd.f32 %v3250, %v3442
      %3444 = vmatprep.mubr.bf16.mxu0 %v2296
      %3445 = vmatmul.mubr.bf16.gmra.mrb[0].mxu0 %v2295
      %v3446 = vpop.f32.mrb[0].mxu0
      %v3447 = vadd.f32 %v3254, %v3446
      %v3448 = vpop.f32.mrb[0].mxu0
      %v3449 = vadd.f32 %v3256, %v3448
      %v3450 = vpop.f32.mrb[0].mxu0
      %v3451 = vadd.f32 %v3258, %v3450
      %v3452 = vpop.f32.mrb[0].mxu0
      %v3453 = vadd.f32 %v3260, %v3452
      %3454 = vmatprep.mubr.bf16.mxu0 %v2304
      %3455 = vmatmul.mubr.bf16.gmra.mrb[0].mxu0 %v2303
      %v3456 = vpop.f32.mrb[0].mxu0
      %v3457 = vadd.f32 %v3264, %v3456
      %v3458 = vpop.f32.mrb[0].mxu0
      %v3459 = vadd.f32 %v3266, %v3458
      %v3460 = vpop.f32.mrb[0].mxu0
      %v3461 = vadd.f32 %v3268, %v3460
      %v3462 = vpop.f32.mrb[0].mxu0
      %v3463 = vadd.f32 %v3270, %v3462
      %3464 = vmatprep.mubr.bf16.mxu0 %v2312
      %3465 = vmatmul.mubr.bf16.gmra.mrb[0].mxu0 %v2311
      %v3466 = vpop.f32.mrb[0].mxu0
      %v3467 = vadd.f32 %v3274, %v3466
      %v3468 = vpop.f32.mrb[0].mxu0
      %v3469 = vadd.f32 %v3276, %v3468
      %v3470 = vpop.f32.mrb[0].mxu0
      %v3471 = vadd.f32 %v3278, %v3470
      %v3472 = vpop.f32.mrb[0].mxu0
      %v3473 = vadd.f32 %v3280, %v3472
      %3474 = vmatprep.mubr.bf16.mxu0 %v2320
      %3475 = vmatmul.mubr.bf16.gmra.mrb[0].mxu0 %v2319
      %v3476 = vpop.f32.mrb[0].mxu0
      %v3477 = vadd.f32 %v3284, %v3476
      %v3478 = vpop.f32.mrb[0].mxu0
      %v3479 = vadd.f32 %v3286, %v3478
      %v3480 = vpop.f32.mrb[0].mxu0
      %v3481 = vadd.f32 %v3288, %v3480
      %v3482 = vpop.f32.mrb[0].mxu0
      %v3483 = vadd.f32 %v3290, %v3482
      %3484 = vmatprep.mubr.bf16.mxu0 %v2328
      %3485 = vmatmul.mubr.bf16.gmra.mrb[0].mxu0 %v2327
      %v3486 = vpop.f32.mrb[0].mxu0
      %v3487 = vadd.f32 %v3294, %v3486
      %v3488 = vpop.f32.mrb[0].mxu0
      %v3489 = vadd.f32 %v3296, %v3488
      %v3490 = vpop.f32.mrb[0].mxu0
      %v3491 = vadd.f32 %v3298, %v3490
      %v3492 = vpop.f32.mrb[0].mxu0
      %v3493 = vadd.f32 %v3300, %v3492
      %3494 = vmatprep.mubr.bf16.mxu0 %v2336
      %3495 = vmatmul.mubr.bf16.gmra.mrb[0].mxu0 %v2335
      %v3496 = vpop.f32.mrb[0].mxu0
      %v3497 = vadd.f32 %v3304, %v3496
      %v3498 = vpop.f32.mrb[0].mxu0
      %v3499 = vadd.f32 %v3306, %v3498
      %v3500 = vpop.f32.mrb[0].mxu0
      %v3501 = vadd.f32 %v3308, %v3500
      %v3502 = vpop.f32.mrb[0].mxu0
      %v3503 = vadd.f32 %v3310, %v3502
      %3504 = vmatprep.mubr.bf16.mxu0 %v2344
      %3505 = vmatmul.mubr.bf16.gmra.mrb[0].mxu0 %v2343
      %v3506 = vpop.f32.mrb[0].mxu0
      %v3507 = vadd.f32 %v3314, %v3506
      %v3508 = vpop.f32.mrb[0].mxu0
      %v3509 = vadd.f32 %v3316, %v3508
      %v3510 = vpop.f32.mrb[0].mxu0
      %v3511 = vadd.f32 %v3318, %v3510
      %v3512 = vpop.f32.mrb[0].mxu0
      %v3513 = vadd.f32 %v3320, %v3512
      %3514 = vdwg.mxu0
      %3515 = vmatprep.subr.bf16.mxu0 %v2938
      %3516 = vmatpush1.bf16.msra.mxu0 %v2937
      %3517 = vmatprep.subr.bf16.mxu0 %v2940
      %3518 = vmatpush1.bf16.msra.mxu0 %v2939
      %3519 = vmatprep.subr.bf16.mxu0 %v2942
      %3520 = vmatpush1.bf16.msra.mxu0 %v2941
      %3521 = vmatprep.subr.bf16.mxu0 %v2944
      %3522 = vmatpush1.bf16.msra.mxu0 %v2943
      %3523 = vmatprep.subr.bf16.mxu0 %v2946
      %3524 = vmatpush1.bf16.msra.mxu0 %v2945
      %3525 = vmatprep.subr.bf16.mxu0 %v2948
      %3526 = vmatpush1.bf16.msra.mxu0 %v2947
      %3527 = vmatprep.subr.bf16.mxu0 %v2950
      %3528 = vmatpush1.bf16.msra.mxu0 %v2949
      %3529 = vmatprep.subr.bf16.mxu0 %v2952
      %3530 = vmatpush1.bf16.msra.mxu0 %v2951
      %3531 = vmatprep.subr.bf16.mxu0 %v2954
      %3532 = vmatpush1.bf16.msra.mxu0 %v2953
      %3533 = vmatprep.subr.bf16.mxu0 %v2956
      %3534 = vmatpush1.bf16.msra.mxu0 %v2955
      %3535 = vmatprep.subr.bf16.mxu0 %v2958
      %3536 = vmatpush1.bf16.msra.mxu0 %v2957
      %3537 = vmatprep.subr.bf16.mxu0 %v2960
      %3538 = vmatpush1.bf16.msra.mxu0 %v2959
      %3539 = vmatprep.subr.bf16.mxu0 %v2962
      %3540 = vmatpush1.bf16.msra.mxu0 %v2961
      %3541 = vmatprep.subr.bf16.mxu0 %v2964
      %3542 = vmatpush1.bf16.msra.mxu0 %v2963
      %3543 = vmatprep.subr.bf16.mxu0 %v2966
      %3544 = vmatpush1.bf16.msra.mxu0 %v2965
      %3545 = vmatprep.subr.bf16.mxu0 %v2968
      %3546 = vmatpush1.bf16.msra.mxu0 %v2967
      %3547 = vmatprep.mubr.bf16.mxu0 %v2226
      %3548 = vmatmul.mubr.bf16.gmra.mrb[0].mxu0 %v2225
      %v3549 = vpop.f32.mrb[0].mxu0
      %v3550 = vadd.f32 %v3357, %v3549
      %v3551 = vpop.f32.mrb[0].mxu0
      %v3552 = vadd.f32 %v3359, %v3551
      %v3553 = vpop.f32.mrb[0].mxu0
      %v3554 = vadd.f32 %v3361, %v3553
      %v3555 = vpop.f32.mrb[0].mxu0
      %v3556 = vadd.f32 %v3363, %v3555
      %3557 = vmatprep.mubr.bf16.mxu0 %v2234
      %3558 = vmatmul.mubr.bf16.gmra.mrb[0].mxu0 %v2233
      %v3559 = vpop.f32.mrb[0].mxu0
      %v3560 = vadd.f32 %v3367, %v3559
      %v3561 = vpop.f32.mrb[0].mxu0
      %v3562 = vadd.f32 %v3369, %v3561
      %v3563 = vpop.f32.mrb[0].mxu0
      %v3564 = vadd.f32 %v3371, %v3563
      %v3565 = vpop.f32.mrb[0].mxu0
      %v3566 = vadd.f32 %v3373, %v3565
      %3567 = vmatprep.mubr.bf16.mxu0 %v2242
      %3568 = vmatmul.mubr.bf16.gmra.mrb[0].mxu0 %v2241
      %v3569 = vpop.f32.mrb[0].mxu0
      %v3570 = vadd.f32 %v3377, %v3569
      %v3571 = vpop.f32.mrb[0].mxu0
      %v3572 = vadd.f32 %v3379, %v3571
      %v3573 = vpop.f32.mrb[0].mxu0
      %v3574 = vadd.f32 %v3381, %v3573
      %v3575 = vpop.f32.mrb[0].mxu0
      %v3576 = vadd.f32 %v3383, %v3575
      %3577 = vmatprep.mubr.bf16.mxu0 %v2250
      %3578 = vmatmul.mubr.bf16.gmra.mrb[0].mxu0 %v2249
      %v3579 = vpop.f32.mrb[0].mxu0
      %v3580 = vadd.f32 %v3387, %v3579
      %v3581 = vpop.f32.mrb[0].mxu0
      %v3582 = vadd.f32 %v3389, %v3581
      %v3583 = vpop.f32.mrb[0].mxu0
      %v3584 = vadd.f32 %v3391, %v3583
      %v3585 = vpop.f32.mrb[0].mxu0
      %v3586 = vadd.f32 %v3393, %v3585
      %3587 = vmatprep.mubr.bf16.mxu0 %v2258
      %3588 = vmatmul.mubr.bf16.gmra.mrb[0].mxu0 %v2257
      %v3589 = vpop.f32.mrb[0].mxu0
      %v3590 = vadd.f32 %v3397, %v3589
      %v3591 = vpop.f32.mrb[0].mxu0
      %v3592 = vadd.f32 %v3399, %v3591
      %v3593 = vpop.f32.mrb[0].mxu0
      %v3594 = vadd.f32 %v3401, %v3593
      %v3595 = vpop.f32.mrb[0].mxu0
      %v3596 = vadd.f32 %v3403, %v3595
      %3597 = vmatprep.mubr.bf16.mxu0 %v2266
      %3598 = vmatmul.mubr.bf16.gmra.mrb[0].mxu0 %v2265
      %v3599 = vpop.f32.mrb[0].mxu0
      %v3600 = vadd.f32 %v3407, %v3599
      %v3601 = vpop.f32.mrb[0].mxu0
      %v3602 = vadd.f32 %v3409, %v3601
      %v3603 = vpop.f32.mrb[0].mxu0
      %v3604 = vadd.f32 %v3411, %v3603
      %v3605 = vpop.f32.mrb[0].mxu0
      %v3606 = vadd.f32 %v3413, %v3605
      %3607 = vmatprep.mubr.bf16.mxu0 %v2274
      %3608 = vmatmul.mubr.bf16.gmra.mrb[0].mxu0 %v2273
      %v3609 = vpop.f32.mrb[0].mxu0
      %v3610 = vadd.f32 %v3417, %v3609
      %v3611 = vpop.f32.mrb[0].mxu0
      %v3612 = vadd.f32 %v3419, %v3611
      %v3613 = vpop.f32.mrb[0].mxu0
      %v3614 = vadd.f32 %v3421, %v3613
      %v3615 = vpop.f32.mrb[0].mxu0
      %v3616 = vadd.f32 %v3423, %v3615
      %3617 = vmatprep.mubr.bf16.mxu0 %v2282
      %3618 = vmatmul.mubr.bf16.gmra.mrb[0].mxu0 %v2281
      %v3619 = vpop.f32.mrb[0].mxu0
      %v3620 = vadd.f32 %v3427, %v3619
      %v3621 = vpop.f32.mrb[0].mxu0
      %v3622 = vadd.f32 %v3429, %v3621
      %v3623 = vpop.f32.mrb[0].mxu0
      %v3624 = vadd.f32 %v3431, %v3623
      %v3625 = vpop.f32.mrb[0].mxu0
      %v3626 = vadd.f32 %v3433, %v3625
      %3627 = vmatprep.mubr.bf16.mxu0 %v2290
      %3628 = vmatmul.mubr.bf16.gmra.mrb[0].mxu0 %v2289
      %v3629 = vpop.f32.mrb[0].mxu0
      %v3630 = vadd.f32 %v3437, %v3629
      %v3631 = vpop.f32.mrb[0].mxu0
      %v3632 = vadd.f32 %v3439, %v3631
      %v3633 = vpop.f32.mrb[0].mxu0
      %v3634 = vadd.f32 %v3441, %v3633
      %v3635 = vpop.f32.mrb[0].mxu0
      %v3636 = vadd.f32 %v3443, %v3635
      %3637 = vmatprep.mubr.bf16.mxu0 %v2298
      %3638 = vmatmul.mubr.bf16.gmra.mrb[0].mxu0 %v2297
      %v3639 = vpop.f32.mrb[0].mxu0
      %v3640 = vadd.f32 %v3447, %v3639
      %v3641 = vpop.f32.mrb[0].mxu0
      %v3642 = vadd.f32 %v3449, %v3641
      %v3643 = vpop.f32.mrb[0].mxu0
      %v3644 = vadd.f32 %v3451, %v3643
      %v3645 = vpop.f32.mrb[0].mxu0
      %v3646 = vadd.f32 %v3453, %v3645
      %3647 = vmatprep.mubr.bf16.mxu0 %v2306
      %3648 = vmatmul.mubr.bf16.gmra.mrb[0].mxu0 %v2305
      %v3649 = vpop.f32.mrb[0].mxu0
      %v3650 = vadd.f32 %v3457, %v3649
      %v3651 = vpop.f32.mrb[0].mxu0
      %v3652 = vadd.f32 %v3459, %v3651
      %v3653 = vpop.f32.mrb[0].mxu0
      %v3654 = vadd.f32 %v3461, %v3653
      %v3655 = vpop.f32.mrb[0].mxu0
      %v3656 = vadd.f32 %v3463, %v3655
      %3657 = vmatprep.mubr.bf16.mxu0 %v2314
      %3658 = vmatmul.mubr.bf16.gmra.mrb[0].mxu0 %v2313
      %v3659 = vpop.f32.mrb[0].mxu0
      %v3660 = vadd.f32 %v3467, %v3659
      %v3661 = vpop.f32.mrb[0].mxu0
      %v3662 = vadd.f32 %v3469, %v3661
      %v3663 = vpop.f32.mrb[0].mxu0
      %v3664 = vadd.f32 %v3471, %v3663
      %v3665 = vpop.f32.mrb[0].mxu0
      %v3666 = vadd.f32 %v3473, %v3665
      %3667 = vmatprep.mubr.bf16.mxu0 %v2322
      %3668 = vmatmul.mubr.bf16.gmra.mrb[0].mxu0 %v2321
      %v3669 = vpop.f32.mrb[0].mxu0
      %v3670 = vadd.f32 %v3477, %v3669
      %v3671 = vpop.f32.mrb[0].mxu0
      %v3672 = vadd.f32 %v3479, %v3671
      %v3673 = vpop.f32.mrb[0].mxu0
      %v3674 = vadd.f32 %v3481, %v3673
      %v3675 = vpop.f32.mrb[0].mxu0
      %v3676 = vadd.f32 %v3483, %v3675
      %3677 = vmatprep.mubr.bf16.mxu0 %v2330
      %3678 = vmatmul.mubr.bf16.gmra.mrb[0].mxu0 %v2329
      %v3679 = vpop.f32.mrb[0].mxu0
      %v3680 = vadd.f32 %v3487, %v3679
      %v3681 = vpop.f32.mrb[0].mxu0
      %v3682 = vadd.f32 %v3489, %v3681
      %v3683 = vpop.f32.mrb[0].mxu0
      %v3684 = vadd.f32 %v3491, %v3683
      %v3685 = vpop.f32.mrb[0].mxu0
      %v3686 = vadd.f32 %v3493, %v3685
      %3687 = vmatprep.mubr.bf16.mxu0 %v2338
      %3688 = vmatmul.mubr.bf16.gmra.mrb[0].mxu0 %v2337
      %v3689 = vpop.f32.mrb[0].mxu0
      %v3690 = vadd.f32 %v3497, %v3689
      %v3691 = vpop.f32.mrb[0].mxu0
      %v3692 = vadd.f32 %v3499, %v3691
      %v3693 = vpop.f32.mrb[0].mxu0
      %v3694 = vadd.f32 %v3501, %v3693
      %v3695 = vpop.f32.mrb[0].mxu0
      %v3696 = vadd.f32 %v3503, %v3695
      %3697 = vmatprep.mubr.bf16.mxu0 %v2346
      %3698 = vmatmul.mubr.bf16.gmra.mrb[0].mxu0 %v2345
      %v3699 = vpop.f32.mrb[0].mxu0
      %v3700 = vadd.f32 %v3507, %v3699
      %v3701 = vpop.f32.mrb[0].mxu0
      %v3702 = vadd.f32 %v3509, %v3701
      %v3703 = vpop.f32.mrb[0].mxu0
      %v3704 = vadd.f32 %v3511, %v3703
      %v3705 = vpop.f32.mrb[0].mxu0
      %v3706 = vadd.f32 %v3513, %v3705
      %3707 = vdwg.mxu0
      %3708 = vmatprep.subr.bf16.mxu0 %v2970
      %3709 = vmatpush1.bf16.msra.mxu0 %v2969
      %3710 = vmatprep.subr.bf16.mxu0 %v2972
      %3711 = vmatpush1.bf16.msra.mxu0 %v2971
      %3712 = vmatprep.subr.bf16.mxu0 %v2974
      %3713 = vmatpush1.bf16.msra.mxu0 %v2973
      %3714 = vmatprep.subr.bf16.mxu0 %v2976
      %3715 = vmatpush1.bf16.msra.mxu0 %v2975
      %3716 = vmatprep.subr.bf16.mxu0 %v2978
      %3717 = vmatpush1.bf16.msra.mxu0 %v2977
      %3718 = vmatprep.subr.bf16.mxu0 %v2980
      %3719 = vmatpush1.bf16.msra.mxu0 %v2979
      %3720 = vmatprep.subr.bf16.mxu0 %v2982
      %3721 = vmatpush1.bf16.msra.mxu0 %v2981
      %3722 = vmatprep.subr.bf16.mxu0 %v2984
      %3723 = vmatpush1.bf16.msra.mxu0 %v2983
      %3724 = vmatprep.subr.bf16.mxu0 %v2986
      %3725 = vmatpush1.bf16.msra.mxu0 %v2985
      %3726 = vmatprep.subr.bf16.mxu0 %v2988
      %3727 = vmatpush1.bf16.msra.mxu0 %v2987
      %3728 = vmatprep.subr.bf16.mxu0 %v2990
      %3729 = vmatpush1.bf16.msra.mxu0 %v2989
      %3730 = vmatprep.subr.bf16.mxu0 %v2992
      %3731 = vmatpush1.bf16.msra.mxu0 %v2991
      %3732 = vmatprep.subr.bf16.mxu0 %v2994
      %3733 = vmatpush1.bf16.msra.mxu0 %v2993
      %3734 = vmatprep.subr.bf16.mxu0 %v2996
      %3735 = vmatpush1.bf16.msra.mxu0 %v2995
      %3736 = vmatprep.subr.bf16.mxu0 %v2998
      %3737 = vmatpush1.bf16.msra.mxu0 %v2997
      %3738 = vmatprep.subr.bf16.mxu0 %v3000
      %3739 = vmatpush1.bf16.msra.mxu0 %v2999
      %3740 = vmatprep.mubr.bf16.mxu0 %v2228
      %3741 = vmatmul.mubr.bf16.gmra.mrb[0].mxu0 %v2227
      %v3742 = vpop.f32.mrb[0].mxu0
      %v3743 = vadd.f32 %v3550, %v3742
      %v3744 = vpop.f32.mrb[0].mxu0
      %v3745 = vadd.f32 %v3552, %v3744
      %v3746 = vpop.f32.mrb[0].mxu0
      %v3747 = vadd.f32 %v3554, %v3746
      %v3748 = vpop.f32.mrb[0].mxu0
      %v3749 = vadd.f32 %v3556, %v3748
      %3750 = vmatprep.mubr.bf16.mxu0 %v2236
      %3751 = vmatmul.mubr.bf16.gmra.mrb[0].mxu0 %v2235
      %v3752 = vpop.f32.mrb[0].mxu0
      %v3753 = vadd.f32 %v3560, %v3752
      %v3754 = vpop.f32.mrb[0].mxu0
      %v3755 = vadd.f32 %v3562, %v3754
      %v3756 = vpop.f32.mrb[0].mxu0
      %v3757 = vadd.f32 %v3564, %v3756
      %v3758 = vpop.f32.mrb[0].mxu0
      %v3759 = vadd.f32 %v3566, %v3758
      %3760 = vmatprep.mubr.bf16.mxu0 %v2244
      %3761 = vmatmul.mubr.bf16.gmra.mrb[0].mxu0 %v2243
      %v3762 = vpop.f32.mrb[0].mxu0
      %v3763 = vadd.f32 %v3570, %v3762
      %v3764 = vpop.f32.mrb[0].mxu0
      %v3765 = vadd.f32 %v3572, %v3764
      %v3766 = vpop.f32.mrb[0].mxu0
      %v3767 = vadd.f32 %v3574, %v3766
      %v3768 = vpop.f32.mrb[0].mxu0
      %v3769 = vadd.f32 %v3576, %v3768
      %3770 = vmatprep.mubr.bf16.mxu0 %v2252
      %3771 = vmatmul.mubr.bf16.gmra.mrb[0].mxu0 %v2251
      %v3772 = vpop.f32.mrb[0].mxu0
      %v3773 = vadd.f32 %v3580, %v3772
      %v3774 = vpop.f32.mrb[0].mxu0
      %v3775 = vadd.f32 %v3582, %v3774
      %v3776 = vpop.f32.mrb[0].mxu0
      %v3777 = vadd.f32 %v3584, %v3776
      %v3778 = vpop.f32.mrb[0].mxu0
      %v3779 = vadd.f32 %v3586, %v3778
      %3780 = vmatprep.mubr.bf16.mxu0 %v2260
      %3781 = vmatmul.mubr.bf16.gmra.mrb[0].mxu0 %v2259
      %v3782 = vpop.f32.mrb[0].mxu0
      %v3783 = vadd.f32 %v3590, %v3782
      %v3784 = vpop.f32.mrb[0].mxu0
      %v3785 = vadd.f32 %v3592, %v3784
      %v3786 = vpop.f32.mrb[0].mxu0
      %v3787 = vadd.f32 %v3594, %v3786
      %v3788 = vpop.f32.mrb[0].mxu0
      %v3789 = vadd.f32 %v3596, %v3788
      %3790 = vmatprep.mubr.bf16.mxu0 %v2268
      %3791 = vmatmul.mubr.bf16.gmra.mrb[0].mxu0 %v2267
      %v3792 = vpop.f32.mrb[0].mxu0
      %v3793 = vadd.f32 %v3600, %v3792
      %v3794 = vpop.f32.mrb[0].mxu0
      %v3795 = vadd.f32 %v3602, %v3794
      %v3796 = vpop.f32.mrb[0].mxu0
      %v3797 = vadd.f32 %v3604, %v3796
      %v3798 = vpop.f32.mrb[0].mxu0
      %v3799 = vadd.f32 %v3606, %v3798
      %3800 = vmatprep.mubr.bf16.mxu0 %v2276
      %3801 = vmatmul.mubr.bf16.gmra.mrb[0].mxu0 %v2275
      %v3802 = vpop.f32.mrb[0].mxu0
      %v3803 = vadd.f32 %v3610, %v3802
      %v3804 = vpop.f32.mrb[0].mxu0
      %v3805 = vadd.f32 %v3612, %v3804
      %v3806 = vpop.f32.mrb[0].mxu0
      %v3807 = vadd.f32 %v3614, %v3806
      %v3808 = vpop.f32.mrb[0].mxu0
      %v3809 = vadd.f32 %v3616, %v3808
      %3810 = vmatprep.mubr.bf16.mxu0 %v2284
      %3811 = vmatmul.mubr.bf16.gmra.mrb[0].mxu0 %v2283
      %v3812 = vpop.f32.mrb[0].mxu0
      %v3813 = vadd.f32 %v3620, %v3812
      %v3814 = vpop.f32.mrb[0].mxu0
      %v3815 = vadd.f32 %v3622, %v3814
      %v3816 = vpop.f32.mrb[0].mxu0
      %v3817 = vadd.f32 %v3624, %v3816
      %v3818 = vpop.f32.mrb[0].mxu0
      %v3819 = vadd.f32 %v3626, %v3818
      %3820 = vmatprep.mubr.bf16.mxu0 %v2292
      %3821 = vmatmul.mubr.bf16.gmra.mrb[0].mxu0 %v2291
      %v3822 = vpop.f32.mrb[0].mxu0
      %v3823 = vadd.f32 %v3630, %v3822
      %v3824 = vpop.f32.mrb[0].mxu0
      %v3825 = vadd.f32 %v3632, %v3824
      %v3826 = vpop.f32.mrb[0].mxu0
      %v3827 = vadd.f32 %v3634, %v3826
      %v3828 = vpop.f32.mrb[0].mxu0
      %v3829 = vadd.f32 %v3636, %v3828
      %3830 = vmatprep.mubr.bf16.mxu0 %v2300
      %3831 = vmatmul.mubr.bf16.gmra.mrb[0].mxu0 %v2299
      %v3832 = vpop.f32.mrb[0].mxu0
      %v3833 = vadd.f32 %v3640, %v3832
      %v3834 = vpop.f32.mrb[0].mxu0
      %v3835 = vadd.f32 %v3642, %v3834
      %v3836 = vpop.f32.mrb[0].mxu0
      %v3837 = vadd.f32 %v3644, %v3836
      %v3838 = vpop.f32.mrb[0].mxu0
      %v3839 = vadd.f32 %v3646, %v3838
      %3840 = vmatprep.mubr.bf16.mxu0 %v2308
      %3841 = vmatmul.mubr.bf16.gmra.mrb[0].mxu0 %v2307
      %v3842 = vpop.f32.mrb[0].mxu0
      %v3843 = vadd.f32 %v3650, %v3842
      %v3844 = vpop.f32.mrb[0].mxu0
      %v3845 = vadd.f32 %v3652, %v3844
      %v3846 = vpop.f32.mrb[0].mxu0
      %v3847 = vadd.f32 %v3654, %v3846
      %v3848 = vpop.f32.mrb[0].mxu0
      %v3849 = vadd.f32 %v3656, %v3848
      %3850 = vmatprep.mubr.bf16.mxu0 %v2316
      %3851 = vmatmul.mubr.bf16.gmra.mrb[0].mxu0 %v2315
      %v3852 = vpop.f32.mrb[0].mxu0
      %v3853 = vadd.f32 %v3660, %v3852
      %v3854 = vpop.f32.mrb[0].mxu0
      %v3855 = vadd.f32 %v3662, %v3854
      %v3856 = vpop.f32.mrb[0].mxu0
      %v3857 = vadd.f32 %v3664, %v3856
      %v3858 = vpop.f32.mrb[0].mxu0
      %v3859 = vadd.f32 %v3666, %v3858
      %3860 = vmatprep.mubr.bf16.mxu0 %v2324
      %3861 = vmatmul.mubr.bf16.gmra.mrb[0].mxu0 %v2323
      %v3862 = vpop.f32.mrb[0].mxu0
      %v3863 = vadd.f32 %v3670, %v3862
      %v3864 = vpop.f32.mrb[0].mxu0
      %v3865 = vadd.f32 %v3672, %v3864
      %v3866 = vpop.f32.mrb[0].mxu0
      %v3867 = vadd.f32 %v3674, %v3866
      %v3868 = vpop.f32.mrb[0].mxu0
      %v3869 = vadd.f32 %v3676, %v3868
      %3870 = vmatprep.mubr.bf16.mxu0 %v2332
      %3871 = vmatmul.mubr.bf16.gmra.mrb[0].mxu0 %v2331
      %v3872 = vpop.f32.mrb[0].mxu0
      %v3873 = vadd.f32 %v3680, %v3872
      %v3874 = vpop.f32.mrb[0].mxu0
      %v3875 = vadd.f32 %v3682, %v3874
      %v3876 = vpop.f32.mrb[0].mxu0
      %v3877 = vadd.f32 %v3684, %v3876
      %v3878 = vpop.f32.mrb[0].mxu0
      %v3879 = vadd.f32 %v3686, %v3878
      %3880 = vmatprep.mubr.bf16.mxu0 %v2340
      %3881 = vmatmul.mubr.bf16.gmra.mrb[0].mxu0 %v2339
      %v3882 = vpop.f32.mrb[0].mxu0
      %v3883 = vadd.f32 %v3690, %v3882
      %v3884 = vpop.f32.mrb[0].mxu0
      %v3885 = vadd.f32 %v3692, %v3884
      %v3886 = vpop.f32.mrb[0].mxu0
      %v3887 = vadd.f32 %v3694, %v3886
      %v3888 = vpop.f32.mrb[0].mxu0
      %v3889 = vadd.f32 %v3696, %v3888
      %3890 = vmatprep.mubr.bf16.mxu0 %v2348
      %3891 = vmatmul.mubr.bf16.gmra.mrb[0].mxu0 %v2347
      %v3892 = vpop.f32.mrb[0].mxu0
      %v3893 = vadd.f32 %v3700, %v3892
      %v3894 = vpop.f32.mrb[0].mxu0
      %v3895 = vadd.f32 %v3702, %v3894
      %v3896 = vpop.f32.mrb[0].mxu0
      %v3897 = vadd.f32 %v3704, %v3896
      %v3898 = vpop.f32.mrb[0].mxu0
      %v3899 = vadd.f32 %v3706, %v3898
      %3900 = vdwg.mxu0
      %v3901 = vadd.f32 %v3743, %v287
      %v3902 = vadd.f32 %v3745, %v288
      %v3903 = vadd.f32 %v3747, %v289
      %v3904 = vadd.f32 %v3749, %v290
      %v3905 = vadd.f32 %v3753, %v291
      %v3906 = vadd.f32 %v3755, %v292
      %v3907 = vadd.f32 %v3757, %v293
      %v3908 = vadd.f32 %v3759, %v294
      %v3909 = vadd.f32 %v3763, %v295
      %v3910 = vadd.f32 %v3765, %v296
      %v3911 = vadd.f32 %v3767, %v297
      %v3912 = vadd.f32 %v3769, %v298
      %v3913 = vadd.f32 %v3773, %v299
      %v3914 = vadd.f32 %v3775, %v300
      %v3915 = vadd.f32 %v3777, %v301
      %v3916 = vadd.f32 %v3779, %v302
      %v3917 = vadd.f32 %v3783, %v303
      %v3918 = vadd.f32 %v3785, %v304
      %v3919 = vadd.f32 %v3787, %v305
      %v3920 = vadd.f32 %v3789, %v306
      %v3921 = vadd.f32 %v3793, %v307
      %v3922 = vadd.f32 %v3795, %v308
      %v3923 = vadd.f32 %v3797, %v309
      %v3924 = vadd.f32 %v3799, %v310
      %v3925 = vadd.f32 %v3803, %v311
      %v3926 = vadd.f32 %v3805, %v312
      %v3927 = vadd.f32 %v3807, %v313
      %v3928 = vadd.f32 %v3809, %v314
      %v3929 = vadd.f32 %v3813, %v315
      %v3930 = vadd.f32 %v3815, %v316
      %v3931 = vadd.f32 %v3817, %v317
      %v3932 = vadd.f32 %v3819, %v318
      %v3933 = vadd.f32 %v3823, %v319
      %v3934 = vadd.f32 %v3825, %v320
      %v3935 = vadd.f32 %v3827, %v321
      %v3936 = vadd.f32 %v3829, %v322
      %v3937 = vadd.f32 %v3833, %v323
      %v3938 = vadd.f32 %v3835, %v324
      %v3939 = vadd.f32 %v3837, %v325
      %v3940 = vadd.f32 %v3839, %v326
      %v3941 = vadd.f32 %v3843, %v327
      %v3942 = vadd.f32 %v3845, %v328
      %v3943 = vadd.f32 %v3847, %v329
      %v3944 = vadd.f32 %v3849, %v330
      %v3945 = vadd.f32 %v3853, %v331
      %v3946 = vadd.f32 %v3855, %v332
      %v3947 = vadd.f32 %v3857, %v333
      %v3948 = vadd.f32 %v3859, %v334
      %v3949 = vadd.f32 %v3863, %v335
      %v3950 = vadd.f32 %v3865, %v336
      %v3951 = vadd.f32 %v3867, %v337
      %v3952 = vadd.f32 %v3869, %v338
      %v3953 = vadd.f32 %v3873, %v339
      %v3954 = vadd.f32 %v3875, %v340
      %v3955 = vadd.f32 %v3877, %v341
      %v3956 = vadd.f32 %v3879, %v342
      %v3957 = vadd.f32 %v3883, %v343
      %v3958 = vadd.f32 %v3885, %v344
      %v3959 = vadd.f32 %v3887, %v345
      %v3960 = vadd.f32 %v3889, %v346
      %v3961 = vadd.f32 %v3893, %v347
      %v3962 = vadd.f32 %v3895, %v348
      %v3963 = vadd.f32 %v3897, %v349
      %v3964 = vadd.f32 %v3899, %v350
      %v3965 = vadd.f32 %v3901, %v3902
      %3966 = vadd.xlane.f32.xlu0 %v3965
      %v3967 = vpop.xlane.xlu0 %3966
      %v3968 = vadd.f32 %v3903, %v3904
      %3969 = vadd.xlane.f32.xlu0 %v3968
      %v3970 = vpop.xlane.xlu0 %3969
      %v3971 = vadd.f32 %v3905, %v3906
      %3972 = vadd.xlane.f32.xlu0 %v3971
      %v3973 = vpop.xlane.xlu0 %3972
      %v3974 = vadd.f32 %v3907, %v3908
      %3975 = vadd.xlane.f32.xlu0 %v3974
      %v3976 = vpop.xlane.xlu0 %3975
      %v3977 = vadd.f32 %v3909, %v3910
      %3978 = vadd.xlane.f32.xlu0 %v3977
      %v3979 = vpop.xlane.xlu0 %3978
      %v3980 = vadd.f32 %v3911, %v3912
      %3981 = vadd.xlane.f32.xlu0 %v3980
      %v3982 = vpop.xlane.xlu0 %3981
      %v3983 = vadd.f32 %v3913, %v3914
      %3984 = vadd.xlane.f32.xlu0 %v3983
      %v3985 = vpop.xlane.xlu0 %3984
      %v3986 = vadd.f32 %v3915, %v3916
      %3987 = vadd.xlane.f32.xlu0 %v3986
      %v3988 = vpop.xlane.xlu0 %3987
      %v3989 = vadd.f32 %v3917, %v3918
      %3990 = vadd.xlane.f32.xlu0 %v3989
      %v3991 = vpop.xlane.xlu0 %3990
      %v3992 = vadd.f32 %v3919, %v3920
      %3993 = vadd.xlane.f32.xlu0 %v3992
      %v3994 = vpop.xlane.xlu0 %3993
      %v3995 = vadd.f32 %v3921, %v3922
      %3996 = vadd.xlane.f32.xlu0 %v3995
      %v3997 = vpop.xlane.xlu0 %3996
      %v3998 = vadd.f32 %v3923, %v3924
      %3999 = vadd.xlane.f32.xlu0 %v3998
      %v4000 = vpop.xlane.xlu0 %3999
      %v4001 = vadd.f32 %v3925, %v3926
      %4002 = vadd.xlane.f32.xlu0 %v4001
      %v4003 = vpop.xlane.xlu0 %4002
      %v4004 = vadd.f32 %v3927, %v3928
      %4005 = vadd.xlane.f32.xlu0 %v4004
      %v4006 = vpop.xlane.xlu0 %4005
      %v4007 = vadd.f32 %v3929, %v3930
      %4008 = vadd.xlane.f32.xlu0 %v4007
      %v4009 = vpop.xlane.xlu0 %4008
      %v4010 = vadd.f32 %v3931, %v3932
      %4011 = vadd.xlane.f32.xlu0 %v4010
      %v4012 = vpop.xlane.xlu0 %4011
      %v4013 = vadd.f32 %v3933, %v3934
      %4014 = vadd.xlane.f32.xlu0 %v4013
      %v4015 = vpop.xlane.xlu0 %4014
      %v4016 = vadd.f32 %v3935, %v3936
      %4017 = vadd.xlane.f32.xlu0 %v4016
      %v4018 = vpop.xlane.xlu0 %4017
      %v4019 = vadd.f32 %v3937, %v3938
      %4020 = vadd.xlane.f32.xlu0 %v4019
      %v4021 = vpop.xlane.xlu0 %4020
      %v4022 = vadd.f32 %v3939, %v3940
      %4023 = vadd.xlane.f32.xlu0 %v4022
      %v4024 = vpop.xlane.xlu0 %4023
      %v4025 = vadd.f32 %v3941, %v3942
      %4026 = vadd.xlane.f32.xlu0 %v4025
      %v4027 = vpop.xlane.xlu0 %4026
      %v4028 = vadd.f32 %v3943, %v3944
      %4029 = vadd.xlane.f32.xlu0 %v4028
      %v4030 = vpop.xlane.xlu0 %4029
      %v4031 = vadd.f32 %v3945, %v3946
      %4032 = vadd.xlane.f32.xlu0 %v4031
      %v4033 = vpop.xlane.xlu0 %4032
      %v4034 = vadd.f32 %v3947, %v3948
      %4035 = vadd.xlane.f32.xlu0 %v4034
      %v4036 = vpop.xlane.xlu0 %4035
      %v4037 = vadd.f32 %v3949, %v3950
      %4038 = vadd.xlane.f32.xlu0 %v4037
      %v4039 = vpop.xlane.xlu0 %4038
      %v4040 = vadd.f32 %v3951, %v3952
      %4041 = vadd.xlane.f32.xlu0 %v4040
      %v4042 = vpop.xlane.xlu0 %4041
      %v4043 = vadd.f32 %v3953, %v3954
      %4044 = vadd.xlane.f32.xlu0 %v4043
      %v4045 = vpop.xlane.xlu0 %4044
      %v4046 = vadd.f32 %v3955, %v3956
      %4047 = vadd.xlane.f32.xlu0 %v4046
      %v4048 = vpop.xlane.xlu0 %4047
      %v4049 = vadd.f32 %v3957, %v3958
      %4050 = vadd.xlane.f32.xlu0 %v4049
      %v4051 = vpop.xlane.xlu0 %4050
      %v4052 = vadd.f32 %v3959, %v3960
      %4053 = vadd.xlane.f32.xlu0 %v4052
      %v4054 = vpop.xlane.xlu0 %4053
      %v4055 = vadd.f32 %v3961, %v3962
      %4056 = vadd.xlane.f32.xlu0 %v4055
      %v4057 = vpop.xlane.xlu0 %4056
      %v4058 = vadd.f32 %v3963, %v3964
      %4059 = vadd.xlane.f32.xlu0 %v4058
      %v4060 = vpop.xlane.xlu0 %4059
      %v4061 = vrcp.pop 256.0
      %v4062 = vmul.f32 %v3967, %v4061
      %v4063 = vmul.f32 %v3970, %v4061
      %v4064 = vmul.f32 %v3973, %v4061
      %v4065 = vmul.f32 %v3976, %v4061
      %v4066 = vmul.f32 %v3979, %v4061
      %v4067 = vmul.f32 %v3982, %v4061
      %v4068 = vmul.f32 %v3985, %v4061
      %v4069 = vmul.f32 %v3988, %v4061
      %v4070 = vmul.f32 %v3991, %v4061
      %v4071 = vmul.f32 %v3994, %v4061
      %v4072 = vmul.f32 %v3997, %v4061
      %v4073 = vmul.f32 %v4000, %v4061
      %v4074 = vmul.f32 %v4003, %v4061
      %v4075 = vmul.f32 %v4006, %v4061
      %v4076 = vmul.f32 %v4009, %v4061
      %v4077 = vmul.f32 %v4012, %v4061
      %v4078 = vmul.f32 %v4015, %v4061
      %v4079 = vmul.f32 %v4018, %v4061
      %v4080 = vmul.f32 %v4021, %v4061
      %v4081 = vmul.f32 %v4024, %v4061
      %v4082 = vmul.f32 %v4027, %v4061
      %v4083 = vmul.f32 %v4030, %v4061
      %v4084 = vmul.f32 %v4033, %v4061
      %v4085 = vmul.f32 %v4036, %v4061
      %v4086 = vmul.f32 %v4039, %v4061
      %v4087 = vmul.f32 %v4042, %v4061
      %v4088 = vmul.f32 %v4045, %v4061
      %v4089 = vmul.f32 %v4048, %v4061
      %v4090 = vmul.f32 %v4051, %v4061
      %v4091 = vmul.f32 %v4054, %v4061
      %v4092 = vmul.f32 %v4057, %v4061
      %v4093 = vmul.f32 %v4060, %v4061
      %v4094 = vsub.f32 %v3901, %v4062
      %v4095 = vsub.f32 %v3902, %v4062
      %v4096 = vsub.f32 %v3903, %v4063
      %v4097 = vsub.f32 %v3904, %v4063
      %v4098 = vsub.f32 %v3905, %v4064
      %v4099 = vsub.f32 %v3906, %v4064
      %v4100 = vsub.f32 %v3907, %v4065
      %v4101 = vsub.f32 %v3908, %v4065
      %v4102 = vsub.f32 %v3909, %v4066
      %v4103 = vsub.f32 %v3910, %v4066
      %v4104 = vsub.f32 %v3911, %v4067
      %v4105 = vsub.f32 %v3912, %v4067
      %v4106 = vsub.f32 %v3913, %v4068
      %v4107 = vsub.f32 %v3914, %v4068
      %v4108 = vsub.f32 %v3915, %v4069
      %v4109 = vsub.f32 %v3916, %v4069
      %v4110 = vsub.f32 %v3917, %v4070
      %v4111 = vsub.f32 %v3918, %v4070
      %v4112 = vsub.f32 %v3919, %v4071
      %v4113 = vsub.f32 %v3920, %v4071
      %v4114 = vsub.f32 %v3921, %v4072
      %v4115 = vsub.f32 %v3922, %v4072
      %v4116 = vsub.f32 %v3923, %v4073
      %v4117 = vsub.f32 %v3924, %v4073
      %v4118 = vsub.f32 %v3925, %v4074
      %v4119 = vsub.f32 %v3926, %v4074
      %v4120 = vsub.f32 %v3927, %v4075
      %v4121 = vsub.f32 %v3928, %v4075
      %v4122 = vsub.f32 %v3929, %v4076
      %v4123 = vsub.f32 %v3930, %v4076
      %v4124 = vsub.f32 %v3931, %v4077
      %v4125 = vsub.f32 %v3932, %v4077
      %v4126 = vsub.f32 %v3933, %v4078
      %v4127 = vsub.f32 %v3934, %v4078
      %v4128 = vsub.f32 %v3935, %v4079
      %v4129 = vsub.f32 %v3936, %v4079
      %v4130 = vsub.f32 %v3937, %v4080
      %v4131 = vsub.f32 %v3938, %v4080
      %v4132 = vsub.f32 %v3939, %v4081
      %v4133 = vsub.f32 %v3940, %v4081
      %v4134 = vsub.f32 %v3941, %v4082
      %v4135 = vsub.f32 %v3942, %v4082
      %v4136 = vsub.f32 %v3943, %v4083
      %v4137 = vsub.f32 %v3944, %v4083
      %v4138 = vsub.f32 %v3945, %v4084
      %v4139 = vsub.f32 %v3946, %v4084
      %v4140 = vsub.f32 %v3947, %v4085
      %v4141 = vsub.f32 %v3948, %v4085
      %v4142 = vsub.f32 %v3949, %v4086
      %v4143 = vsub.f32 %v3950, %v4086
      %v4144 = vsub.f32 %v3951, %v4087
      %v4145 = vsub.f32 %v3952, %v4087
      %v4146 = vsub.f32 %v3953, %v4088
      %v4147 = vsub.f32 %v3954, %v4088
      %v4148 = vsub.f32 %v3955, %v4089
      %v4149 = vsub.f32 %v3956, %v4089
      %v4150 = vsub.f32 %v3957, %v4090
      %v4151 = vsub.f32 %v3958, %v4090
      %v4152 = vsub.f32 %v3959, %v4091
      %v4153 = vsub.f32 %v3960, %v4091
      %v4154 = vsub.f32 %v3961, %v4092
      %v4155 = vsub.f32 %v3962, %v4092
      %v4156 = vsub.f32 %v3963, %v4093
      %v4157 = vsub.f32 %v3964, %v4093
      %v4158 = vmul.f32 %v4094, %v4094
      %v4159 = vmul.f32 %v4095, %v4095
      %v4160 = vmul.f32 %v4096, %v4096
      %v4161 = vmul.f32 %v4097, %v4097
      %v4162 = vmul.f32 %v4098, %v4098
      %v4163 = vmul.f32 %v4099, %v4099
      %v4164 = vmul.f32 %v4100, %v4100
      %v4165 = vmul.f32 %v4101, %v4101
      %v4166 = vmul.f32 %v4102, %v4102
      %v4167 = vmul.f32 %v4103, %v4103
      %v4168 = vmul.f32 %v4104, %v4104
      %v4169 = vmul.f32 %v4105, %v4105
      %v4170 = vmul.f32 %v4106, %v4106
      %v4171 = vmul.f32 %v4107, %v4107
      %v4172 = vmul.f32 %v4108, %v4108
      %v4173 = vmul.f32 %v4109, %v4109
      %v4174 = vmul.f32 %v4110, %v4110
      %v4175 = vmul.f32 %v4111, %v4111
      %v4176 = vmul.f32 %v4112, %v4112
      %v4177 = vmul.f32 %v4113, %v4113
      %v4178 = vmul.f32 %v4114, %v4114
      %v4179 = vmul.f32 %v4115, %v4115
      %v4180 = vmul.f32 %v4116, %v4116
      %v4181 = vmul.f32 %v4117, %v4117
      %v4182 = vmul.f32 %v4118, %v4118
      %v4183 = vmul.f32 %v4119, %v4119
      %v4184 = vmul.f32 %v4120, %v4120
      %v4185 = vmul.f32 %v4121, %v4121
      %v4186 = vmul.f32 %v4122, %v4122
      %v4187 = vmul.f32 %v4123, %v4123
      %v4188 = vmul.f32 %v4124, %v4124
      %v4189 = vmul.f32 %v4125, %v4125
      %v4190 = vmul.f32 %v4126, %v4126
      %v4191 = vmul.f32 %v4127, %v4127
      %v4192 = vmul.f32 %v4128, %v4128
      %v4193 = vmul.f32 %v4129, %v4129
      %v4194 = vmul.f32 %v4130, %v4130
      %v4195 = vmul.f32 %v4131, %v4131
      %v4196 = vmul.f32 %v4132, %v4132
      %v4197 = vmul.f32 %v4133, %v4133
      %v4198 = vmul.f32 %v4134, %v4134
      %v4199 = vmul.f32 %v4135, %v4135
      %v4200 = vmul.f32 %v4136, %v4136
      %v4201 = vmul.f32 %v4137, %v4137
      %v4202 = vmul.f32 %v4138, %v4138
      %v4203 = vmul.f32 %v4139, %v4139
      %v4204 = vmul.f32 %v4140, %v4140
      %v4205 = vmul.f32 %v4141, %v4141
      %v4206 = vmul.f32 %v4142, %v4142
      %v4207 = vmul.f32 %v4143, %v4143
      %v4208 = vmul.f32 %v4144, %v4144
      %v4209 = vmul.f32 %v4145, %v4145
      %v4210 = vmul.f32 %v4146, %v4146
      %v4211 = vmul.f32 %v4147, %v4147
      %v4212 = vmul.f32 %v4148, %v4148
      %v4213 = vmul.f32 %v4149, %v4149
      %v4214 = vmul.f32 %v4150, %v4150
      %v4215 = vmul.f32 %v4151, %v4151
      %v4216 = vmul.f32 %v4152, %v4152
      %v4217 = vmul.f32 %v4153, %v4153
      %v4218 = vmul.f32 %v4154, %v4154
      %v4219 = vmul.f32 %v4155, %v4155
      %v4220 = vmul.f32 %v4156, %v4156
      %v4221 = vmul.f32 %v4157, %v4157
      %v4222 = vadd.f32 %v4158, %v4159
      %4223 = vadd.xlane.f32.xlu0 %v4222
      %v4224 = vpop.xlane.xlu0 %4223
      %v4225 = vadd.f32 %v4160, %v4161
      %4226 = vadd.xlane.f32.xlu0 %v4225
      %v4227 = vpop.xlane.xlu0 %4226
      %v4228 = vadd.f32 %v4162, %v4163
      %4229 = vadd.xlane.f32.xlu0 %v4228
      %v4230 = vpop.xlane.xlu0 %4229
      %v4231 = vadd.f32 %v4164, %v4165
      %4232 = vadd.xlane.f32.xlu0 %v4231
      %v4233 = vpop.xlane.xlu0 %4232
      %v4234 = vadd.f32 %v4166, %v4167
      %4235 = vadd.xlane.f32.xlu0 %v4234
      %v4236 = vpop.xlane.xlu0 %4235
      %v4237 = vadd.f32 %v4168, %v4169
      %4238 = vadd.xlane.f32.xlu0 %v4237
      %v4239 = vpop.xlane.xlu0 %4238
      %v4240 = vadd.f32 %v4170, %v4171
      %4241 = vadd.xlane.f32.xlu0 %v4240
      %v4242 = vpop.xlane.xlu0 %4241
      %v4243 = vadd.f32 %v4172, %v4173
      %4244 = vadd.xlane.f32.xlu0 %v4243
      %v4245 = vpop.xlane.xlu0 %4244
      %v4246 = vadd.f32 %v4174, %v4175
      %4247 = vadd.xlane.f32.xlu0 %v4246
      %v4248 = vpop.xlane.xlu0 %4247
      %v4249 = vadd.f32 %v4176, %v4177
      %4250 = vadd.xlane.f32.xlu0 %v4249
      %v4251 = vpop.xlane.xlu0 %4250
      %v4252 = vadd.f32 %v4178, %v4179
      %4253 = vadd.xlane.f32.xlu0 %v4252
      %v4254 = vpop.xlane.xlu0 %4253
      %v4255 = vadd.f32 %v4180, %v4181
      %4256 = vadd.xlane.f32.xlu0 %v4255
      %v4257 = vpop.xlane.xlu0 %4256
      %v4258 = vadd.f32 %v4182, %v4183
      %4259 = vadd.xlane.f32.xlu0 %v4258
      %v4260 = vpop.xlane.xlu0 %4259
      %v4261 = vadd.f32 %v4184, %v4185
      %4262 = vadd.xlane.f32.xlu0 %v4261
      %v4263 = vpop.xlane.xlu0 %4262
      %v4264 = vadd.f32 %v4186, %v4187
      %4265 = vadd.xlane.f32.xlu0 %v4264
      %v4266 = vpop.xlane.xlu0 %4265
      %v4267 = vadd.f32 %v4188, %v4189
      %4268 = vadd.xlane.f32.xlu0 %v4267
      %v4269 = vpop.xlane.xlu0 %4268
      %v4270 = vadd.f32 %v4190, %v4191
      %4271 = vadd.xlane.f32.xlu0 %v4270
      %v4272 = vpop.xlane.xlu0 %4271
      %v4273 = vadd.f32 %v4192, %v4193
      %4274 = vadd.xlane.f32.xlu0 %v4273
      %v4275 = vpop.xlane.xlu0 %4274
      %v4276 = vadd.f32 %v4194, %v4195
      %4277 = vadd.xlane.f32.xlu0 %v4276
      %v4278 = vpop.xlane.xlu0 %4277
      %v4279 = vadd.f32 %v4196, %v4197
      %4280 = vadd.xlane.f32.xlu0 %v4279
      %v4281 = vpop.xlane.xlu0 %4280
      %v4282 = vadd.f32 %v4198, %v4199
      %4283 = vadd.xlane.f32.xlu0 %v4282
      %v4284 = vpop.xlane.xlu0 %4283
      %v4285 = vadd.f32 %v4200, %v4201
      %4286 = vadd.xlane.f32.xlu0 %v4285
      %v4287 = vpop.xlane.xlu0 %4286
      %v4288 = vadd.f32 %v4202, %v4203
      %4289 = vadd.xlane.f32.xlu0 %v4288
      %v4290 = vpop.xlane.xlu0 %4289
      %v4291 = vadd.f32 %v4204, %v4205
      %4292 = vadd.xlane.f32.xlu0 %v4291
      %v4293 = vpop.xlane.xlu0 %4292
      %v4294 = vadd.f32 %v4206, %v4207
      %4295 = vadd.xlane.f32.xlu0 %v4294
      %v4296 = vpop.xlane.xlu0 %4295
      %v4297 = vadd.f32 %v4208, %v4209
      %4298 = vadd.xlane.f32.xlu0 %v4297
      %v4299 = vpop.xlane.xlu0 %4298
      %v4300 = vadd.f32 %v4210, %v4211
      %4301 = vadd.xlane.f32.xlu0 %v4300
      %v4302 = vpop.xlane.xlu0 %4301
      %v4303 = vadd.f32 %v4212, %v4213
      %4304 = vadd.xlane.f32.xlu0 %v4303
      %v4305 = vpop.xlane.xlu0 %4304
      %v4306 = vadd.f32 %v4214, %v4215
      %4307 = vadd.xlane.f32.xlu0 %v4306
      %v4308 = vpop.xlane.xlu0 %4307
      %v4309 = vadd.f32 %v4216, %v4217
      %4310 = vadd.xlane.f32.xlu0 %v4309
      %v4311 = vpop.xlane.xlu0 %4310
      %v4312 = vadd.f32 %v4218, %v4219
      %4313 = vadd.xlane.f32.xlu0 %v4312
      %v4314 = vpop.xlane.xlu0 %4313
      %v4315 = vadd.f32 %v4220, %v4221
      %4316 = vadd.xlane.f32.xlu0 %v4315
      %v4317 = vpop.xlane.xlu0 %4316
      %v4318 = vmul.f32 %v4224, %v4061
      %v4319 = vmul.f32 %v4227, %v4061
      %v4320 = vmul.f32 %v4230, %v4061
      %v4321 = vmul.f32 %v4233, %v4061
      %v4322 = vmul.f32 %v4236, %v4061
      %v4323 = vmul.f32 %v4239, %v4061
      %v4324 = vmul.f32 %v4242, %v4061
      %v4325 = vmul.f32 %v4245, %v4061
      %v4326 = vmul.f32 %v4248, %v4061
      %v4327 = vmul.f32 %v4251, %v4061
      %v4328 = vmul.f32 %v4254, %v4061
      %v4329 = vmul.f32 %v4257, %v4061
      %v4330 = vmul.f32 %v4260, %v4061
      %v4331 = vmul.f32 %v4263, %v4061
      %v4332 = vmul.f32 %v4266, %v4061
      %v4333 = vmul.f32 %v4269, %v4061
      %v4334 = vmul.f32 %v4272, %v4061
      %v4335 = vmul.f32 %v4275, %v4061
      %v4336 = vmul.f32 %v4278, %v4061
      %v4337 = vmul.f32 %v4281, %v4061
      %v4338 = vmul.f32 %v4284, %v4061
      %v4339 = vmul.f32 %v4287, %v4061
      %v4340 = vmul.f32 %v4290, %v4061
      %v4341 = vmul.f32 %v4293, %v4061
      %v4342 = vmul.f32 %v4296, %v4061
      %v4343 = vmul.f32 %v4299, %v4061
      %v4344 = vmul.f32 %v4302, %v4061
      %v4345 = vmul.f32 %v4305, %v4061
      %v4346 = vmul.f32 %v4308, %v4061
      %v4347 = vmul.f32 %v4311, %v4061
      %v4348 = vmul.f32 %v4314, %v4061
      %v4349 = vmul.f32 %v4317, %v4061
      %v4350 = vadd.f32 %v4318, 1e-05
      %v4351 = vadd.f32 %v4319, 1e-05
      %v4352 = vadd.f32 %v4320, 1e-05
      %v4353 = vadd.f32 %v4321, 1e-05
      %v4354 = vadd.f32 %v4322, 1e-05
      %v4355 = vadd.f32 %v4323, 1e-05
      %v4356 = vadd.f32 %v4324, 1e-05
      %v4357 = vadd.f32 %v4325, 1e-05
      %v4358 = vadd.f32 %v4326, 1e-05
      %v4359 = vadd.f32 %v4327, 1e-05
      %v4360 = vadd.f32 %v4328, 1e-05
      %v4361 = vadd.f32 %v4329, 1e-05
      %v4362 = vadd.f32 %v4330, 1e-05
      %v4363 = vadd.f32 %v4331, 1e-05
      %v4364 = vadd.f32 %v4332, 1e-05
      %v4365 = vadd.f32 %v4333, 1e-05
      %v4366 = vadd.f32 %v4334, 1e-05
      %v4367 = vadd.f32 %v4335, 1e-05
      %v4368 = vadd.f32 %v4336, 1e-05
      %v4369 = vadd.f32 %v4337, 1e-05
      %v4370 = vadd.f32 %v4338, 1e-05
      %v4371 = vadd.f32 %v4339, 1e-05
      %v4372 = vadd.f32 %v4340, 1e-05
      %v4373 = vadd.f32 %v4341, 1e-05
      %v4374 = vadd.f32 %v4342, 1e-05
      %v4375 = vadd.f32 %v4343, 1e-05
      %v4376 = vadd.f32 %v4344, 1e-05
      %v4377 = vadd.f32 %v4345, 1e-05
      %v4378 = vadd.f32 %v4346, 1e-05
      %v4379 = vadd.f32 %v4347, 1e-05
      %v4380 = vadd.f32 %v4348, 1e-05
      %v4381 = vadd.f32 %v4349, 1e-05
      %v4382 = vrsqrt.pop %v4350
      %v4383 = vrsqrt.pop %v4351
      %v4384 = vrsqrt.pop %v4352
      %v4385 = vrsqrt.pop %v4353
      %v4386 = vrsqrt.pop %v4354
      %v4387 = vrsqrt.pop %v4355
      %v4388 = vrsqrt.pop %v4356
      %v4389 = vrsqrt.pop %v4357
      %v4390 = vrsqrt.pop %v4358
      %v4391 = vrsqrt.pop %v4359
      %v4392 = vrsqrt.pop %v4360
      %v4393 = vrsqrt.pop %v4361
      %v4394 = vrsqrt.pop %v4362
      %v4395 = vrsqrt.pop %v4363
      %v4396 = vrsqrt.pop %v4364
      %v4397 = vrsqrt.pop %v4365
      %v4398 = vrsqrt.pop %v4366
      %v4399 = vrsqrt.pop %v4367
      %v4400 = vrsqrt.pop %v4368
      %v4401 = vrsqrt.pop %v4369
      %v4402 = vrsqrt.pop %v4370
      %v4403 = vrsqrt.pop %v4371
      %v4404 = vrsqrt.pop %v4372
      %v4405 = vrsqrt.pop %v4373
      %v4406 = vrsqrt.pop %v4374
      %v4407 = vrsqrt.pop %v4375
      %v4408 = vrsqrt.pop %v4376
      %v4409 = vrsqrt.pop %v4377
      %v4410 = vrsqrt.pop %v4378
      %v4411 = vrsqrt.pop %v4379
      %v4412 = vrsqrt.pop %v4380
      %v4413 = vrsqrt.pop %v4381
      %v4414 = vmul.f32 %v4094, %v4382
      %v4415 = vmul.f32 %v4095, %v4382
      %v4416 = vmul.f32 %v4096, %v4383
      %v4417 = vmul.f32 %v4097, %v4383
      %v4418 = vmul.f32 %v4098, %v4384
      %v4419 = vmul.f32 %v4099, %v4384
      %v4420 = vmul.f32 %v4100, %v4385
      %v4421 = vmul.f32 %v4101, %v4385
      %v4422 = vmul.f32 %v4102, %v4386
      %v4423 = vmul.f32 %v4103, %v4386
      %v4424 = vmul.f32 %v4104, %v4387
      %v4425 = vmul.f32 %v4105, %v4387
      %v4426 = vmul.f32 %v4106, %v4388
      %v4427 = vmul.f32 %v4107, %v4388
      %v4428 = vmul.f32 %v4108, %v4389
      %v4429 = vmul.f32 %v4109, %v4389
      %v4430 = vmul.f32 %v4110, %v4390
      %v4431 = vmul.f32 %v4111, %v4390
      %v4432 = vmul.f32 %v4112, %v4391
      %v4433 = vmul.f32 %v4113, %v4391
      %v4434 = vmul.f32 %v4114, %v4392
      %v4435 = vmul.f32 %v4115, %v4392
      %v4436 = vmul.f32 %v4116, %v4393
      %v4437 = vmul.f32 %v4117, %v4393
      %v4438 = vmul.f32 %v4118, %v4394
      %v4439 = vmul.f32 %v4119, %v4394
      %v4440 = vmul.f32 %v4120, %v4395
      %v4441 = vmul.f32 %v4121, %v4395
      %v4442 = vmul.f32 %v4122, %v4396
      %v4443 = vmul.f32 %v4123, %v4396
      %v4444 = vmul.f32 %v4124, %v4397
      %v4445 = vmul.f32 %v4125, %v4397
      %v4446 = vmul.f32 %v4126, %v4398
      %v4447 = vmul.f32 %v4127, %v4398
      %v4448 = vmul.f32 %v4128, %v4399
      %v4449 = vmul.f32 %v4129, %v4399
      %v4450 = vmul.f32 %v4130, %v4400
      %v4451 = vmul.f32 %v4131, %v4400
      %v4452 = vmul.f32 %v4132, %v4401
      %v4453 = vmul.f32 %v4133, %v4401
      %v4454 = vmul.f32 %v4134, %v4402
      %v4455 = vmul.f32 %v4135, %v4402
      %v4456 = vmul.f32 %v4136, %v4403
      %v4457 = vmul.f32 %v4137, %v4403
      %v4458 = vmul.f32 %v4138, %v4404
      %v4459 = vmul.f32 %v4139, %v4404
      %v4460 = vmul.f32 %v4140, %v4405
      %v4461 = vmul.f32 %v4141, %v4405
      %v4462 = vmul.f32 %v4142, %v4406
      %v4463 = vmul.f32 %v4143, %v4406
      %v4464 = vmul.f32 %v4144, %v4407
      %v4465 = vmul.f32 %v4145, %v4407
      %v4466 = vmul.f32 %v4146, %v4408
      %v4467 = vmul.f32 %v4147, %v4408
      %v4468 = vmul.f32 %v4148, %v4409
      %v4469 = vmul.f32 %v4149, %v4409
      %v4470 = vmul.f32 %v4150, %v4410
      %v4471 = vmul.f32 %v4151, %v4410
      %v4472 = vmul.f32 %v4152, %v4411
      %v4473 = vmul.f32 %v4153, %v4411
      %v4474 = vmul.f32 %v4154, %v4412
      %v4475 = vmul.f32 %v4155, %v4412
      %v4476 = vmul.f32 %v4156, %v4413
      %v4477 = vmul.f32 %v4157, %v4413
      %v4478 = vld [vmem:[%s5] sm:$0x3]
      %v4480 = vlaneseq
      %v4481 = vshrl.u32 %v4480, 7
      %v4482 = vsub.s32 0, %v4481
      %v4483 = vrot.slane %v4478, %v4482
      %v4484 = vlaneseq
      %v4485 = vshrl.u32 %v4484, 7
      %v4486 = vsub.s32 1, %v4485
      %v4487 = vrot.slane %v4478, %v4486
      %v4490 = vmul.f32 %v4414, %v4483
      %v4491 = vmul.f32 %v4415, %v4487
      %v4492 = vmul.f32 %v4416, %v4483
      %v4493 = vmul.f32 %v4417, %v4487
      %v4494 = vmul.f32 %v4418, %v4483
      %v4495 = vmul.f32 %v4419, %v4487
      %v4496 = vmul.f32 %v4420, %v4483
      %v4497 = vmul.f32 %v4421, %v4487
      %v4498 = vmul.f32 %v4422, %v4483
      %v4499 = vmul.f32 %v4423, %v4487
      %v4500 = vmul.f32 %v4424, %v4483
      %v4501 = vmul.f32 %v4425, %v4487
      %v4502 = vmul.f32 %v4426, %v4483
      %v4503 = vmul.f32 %v4427, %v4487
      %v4504 = vmul.f32 %v4428, %v4483
      %v4505 = vmul.f32 %v4429, %v4487
      %v4506 = vmul.f32 %v4430, %v4483
      %v4507 = vmul.f32 %v4431, %v4487
      %v4508 = vmul.f32 %v4432, %v4483
      %v4509 = vmul.f32 %v4433, %v4487
      %v4510 = vmul.f32 %v4434, %v4483
      %v4511 = vmul.f32 %v4435, %v4487
      %v4512 = vmul.f32 %v4436, %v4483
      %v4513 = vmul.f32 %v4437, %v4487
      %v4514 = vmul.f32 %v4438, %v4483
      %v4515 = vmul.f32 %v4439, %v4487
      %v4516 = vmul.f32 %v4440, %v4483
      %v4517 = vmul.f32 %v4441, %v4487
      %v4518 = vmul.f32 %v4442, %v4483
      %v4519 = vmul.f32 %v4443, %v4487
      %v4520 = vmul.f32 %v4444, %v4483
      %v4521 = vmul.f32 %v4445, %v4487
      %v4522 = vmul.f32 %v4446, %v4483
      %v4523 = vmul.f32 %v4447, %v4487
      %v4524 = vmul.f32 %v4448, %v4483
      %v4525 = vmul.f32 %v4449, %v4487
      %v4526 = vmul.f32 %v4450, %v4483
      %v4527 = vmul.f32 %v4451, %v4487
      %v4528 = vmul.f32 %v4452, %v4483
      %v4529 = vmul.f32 %v4453, %v4487
      %v4530 = vmul.f32 %v4454, %v4483
      %v4531 = vmul.f32 %v4455, %v4487
      %v4532 = vmul.f32 %v4456, %v4483
      %v4533 = vmul.f32 %v4457, %v4487
      %v4534 = vmul.f32 %v4458, %v4483
      %v4535 = vmul.f32 %v4459, %v4487
      %v4536 = vmul.f32 %v4460, %v4483
      %v4537 = vmul.f32 %v4461, %v4487
      %v4538 = vmul.f32 %v4462, %v4483
      %v4539 = vmul.f32 %v4463, %v4487
      %v4540 = vmul.f32 %v4464, %v4483
      %v4541 = vmul.f32 %v4465, %v4487
      %v4542 = vmul.f32 %v4466, %v4483
      %v4543 = vmul.f32 %v4467, %v4487
      %v4544 = vmul.f32 %v4468, %v4483
      %v4545 = vmul.f32 %v4469, %v4487
      %v4546 = vmul.f32 %v4470, %v4483
      %v4547 = vmul.f32 %v4471, %v4487
      %v4548 = vmul.f32 %v4472, %v4483
      %v4549 = vmul.f32 %v4473, %v4487
      %v4550 = vmul.f32 %v4474, %v4483
      %v4551 = vmul.f32 %v4475, %v4487
      %v4552 = vmul.f32 %v4476, %v4483
      %v4553 = vmul.f32 %v4477, %v4487
      %v4554 = vld [vmem:[%s6] sm:$0x3]
      %v4556 = vlaneseq
      %v4557 = vshrl.u32 %v4556, 7
      %v4558 = vsub.s32 0, %v4557
      %v4559 = vrot.slane %v4554, %v4558
      %v4560 = vlaneseq
      %v4561 = vshrl.u32 %v4560, 7
      %v4562 = vsub.s32 1, %v4561
      %v4563 = vrot.slane %v4554, %v4562
      %v4566 = vadd.f32 %v4490, %v4559
      %v4567 = vadd.f32 %v4491, %v4563
      %v4568 = vadd.f32 %v4492, %v4559
      %v4569 = vadd.f32 %v4493, %v4563
      %v4570 = vadd.f32 %v4494, %v4559
      %v4571 = vadd.f32 %v4495, %v4563
      %v4572 = vadd.f32 %v4496, %v4559
      %v4573 = vadd.f32 %v4497, %v4563
      %v4574 = vadd.f32 %v4498, %v4559
      %v4575 = vadd.f32 %v4499, %v4563
      %v4576 = vadd.f32 %v4500, %v4559
      %v4577 = vadd.f32 %v4501, %v4563
      %v4578 = vadd.f32 %v4502, %v4559
      %v4579 = vadd.f32 %v4503, %v4563
      %v4580 = vadd.f32 %v4504, %v4559
      %v4581 = vadd.f32 %v4505, %v4563
      %v4582 = vadd.f32 %v4506, %v4559
      %v4583 = vadd.f32 %v4507, %v4563
      %v4584 = vadd.f32 %v4508, %v4559
      %v4585 = vadd.f32 %v4509, %v4563
      %v4586 = vadd.f32 %v4510, %v4559
      %v4587 = vadd.f32 %v4511, %v4563
      %v4588 = vadd.f32 %v4512, %v4559
      %v4589 = vadd.f32 %v4513, %v4563
      %v4590 = vadd.f32 %v4514, %v4559
      %v4591 = vadd.f32 %v4515, %v4563
      %v4592 = vadd.f32 %v4516, %v4559
      %v4593 = vadd.f32 %v4517, %v4563
      %v4594 = vadd.f32 %v4518, %v4559
      %v4595 = vadd.f32 %v4519, %v4563
      %v4596 = vadd.f32 %v4520, %v4559
      %v4597 = vadd.f32 %v4521, %v4563
      %v4598 = vadd.f32 %v4522, %v4559
      %v4599 = vadd.f32 %v4523, %v4563
      %v4600 = vadd.f32 %v4524, %v4559
      %v4601 = vadd.f32 %v4525, %v4563
      %v4602 = vadd.f32 %v4526, %v4559
      %v4603 = vadd.f32 %v4527, %v4563
      %v4604 = vadd.f32 %v4528, %v4559
      %v4605 = vadd.f32 %v4529, %v4563
      %v4606 = vadd.f32 %v4530, %v4559
      %v4607 = vadd.f32 %v4531, %v4563
      %v4608 = vadd.f32 %v4532, %v4559
      %v4609 = vadd.f32 %v4533, %v4563
      %v4610 = vadd.f32 %v4534, %v4559
      %v4611 = vadd.f32 %v4535, %v4563
      %v4612 = vadd.f32 %v4536, %v4559
      %v4613 = vadd.f32 %v4537, %v4563
      %v4614 = vadd.f32 %v4538, %v4559
      %v4615 = vadd.f32 %v4539, %v4563
      %v4616 = vadd.f32 %v4540, %v4559
      %v4617 = vadd.f32 %v4541, %v4563
      %v4618 = vadd.f32 %v4542, %v4559
      %v4619 = vadd.f32 %v4543, %v4563
      %v4620 = vadd.f32 %v4544, %v4559
      %v4621 = vadd.f32 %v4545, %v4563
      %v4622 = vadd.f32 %v4546, %v4559
      %v4623 = vadd.f32 %v4547, %v4563
      %v4624 = vadd.f32 %v4548, %v4559
      %v4625 = vadd.f32 %v4549, %v4563
      %v4626 = vadd.f32 %v4550, %v4559
      %v4627 = vadd.f32 %v4551, %v4563
      %v4628 = vadd.f32 %v4552, %v4559
      %v4629 = vadd.f32 %v4553, %v4563
      %4630 = vst [vmem:[%s285] sm:$0xff] %v4566
      %4631 = vst [vmem:[%s285 + $0x8] sm:$0xff] %v4567
      %4632 = vst [vmem:[%s285 + $0x10] sm:$0xff] %v4568
      %4633 = vst [vmem:[%s285 + $0x18] sm:$0xff] %v4569
      %4634 = vst [vmem:[%s285 + $0x20] sm:$0xff] %v4570
      %4635 = vst [vmem:[%s285 + $0x28] sm:$0xff] %v4571
      %4636 = vst [vmem:[%s285 + $0x30] sm:$0xff] %v4572
      %4637 = vst [vmem:[%s285 + $0x38] sm:$0xff] %v4573
      %4638 = vst [vmem:[%s285 + $0x40] sm:$0xff] %v4574
      %4639 = vst [vmem:[%s285 + $0x48] sm:$0xff] %v4575
      %4640 = vst [vmem:[%s285 + $0x50] sm:$0xff] %v4576
      %4641 = vst [vmem:[%s285 + $0x58] sm:$0xff] %v4577
      %4642 = vst [vmem:[%s285 + $0x60] sm:$0xff] %v4578
      %4643 = vst [vmem:[%s285 + $0x68] sm:$0xff] %v4579
      %4644 = vst [vmem:[%s285 + $0x70] sm:$0xff] %v4580
      %4645 = vst [vmem:[%s285 + $0x78] sm:$0xff] %v4581
      %4646 = vst [vmem:[%s285 + $0x80] sm:$0xff] %v4582
      %4647 = vst [vmem:[%s285 + $0x88] sm:$0xff] %v4583
      %4648 = vst [vmem:[%s285 + $0x90] sm:$0xff] %v4584
      %4649 = vst [vmem:[%s285 + $0x98] sm:$0xff] %v4585
      %4650 = vst [vmem:[%s285 + $0xa0] sm:$0xff] %v4586
      %4651 = vst [vmem:[%s285 + $0xa8] sm:$0xff] %v4587
      %4652 = vst [vmem:[%s285 + $0xb0] sm:$0xff] %v4588
      %4653 = vst [vmem:[%s285 + $0xb8] sm:$0xff] %v4589
      %4654 = vst [vmem:[%s285 + $0xc0] sm:$0xff] %v4590
      %4655 = vst [vmem:[%s285 + $0xc8] sm:$0xff] %v4591
      %4656 = vst [vmem:[%s285 + $0xd0] sm:$0xff] %v4592
      %4657 = vst [vmem:[%s285 + $0xd8] sm:$0xff] %v4593
      %4658 = vst [vmem:[%s285 + $0xe0] sm:$0xff] %v4594
      %4659 = vst [vmem:[%s285 + $0xe8] sm:$0xff] %v4595
      %4660 = vst [vmem:[%s285 + $0xf0] sm:$0xff] %v4596
      %4661 = vst [vmem:[%s285 + $0xf8] sm:$0xff] %v4597
      %4662 = vst [vmem:[%s285 + $0x100] sm:$0xff] %v4598
      %4663 = vst [vmem:[%s285 + $0x108] sm:$0xff] %v4599
      %4664 = vst [vmem:[%s285 + $0x110] sm:$0xff] %v4600
      %4665 = vst [vmem:[%s285 + $0x118] sm:$0xff] %v4601
      %4666 = vst [vmem:[%s285 + $0x120] sm:$0xff] %v4602
      %4667 = vst [vmem:[%s285 + $0x128] sm:$0xff] %v4603
      %4668 = vst [vmem:[%s285 + $0x130] sm:$0xff] %v4604
      %4669 = vst [vmem:[%s285 + $0x138] sm:$0xff] %v4605
      %4670 = vst [vmem:[%s285 + $0x140] sm:$0xff] %v4606
      %4671 = vst [vmem:[%s285 + $0x148] sm:$0xff] %v4607
      %4672 = vst [vmem:[%s285 + $0x150] sm:$0xff] %v4608
      %4673 = vst [vmem:[%s285 + $0x158] sm:$0xff] %v4609
      %4674 = vst [vmem:[%s285 + $0x160] sm:$0xff] %v4610
      %4675 = vst [vmem:[%s285 + $0x168] sm:$0xff] %v4611
      %4676 = vst [vmem:[%s285 + $0x170] sm:$0xff] %v4612
      %4677 = vst [vmem:[%s285 + $0x178] sm:$0xff] %v4613
      %4678 = vst [vmem:[%s285 + $0x180] sm:$0xff] %v4614
      %4679 = vst [vmem:[%s285 + $0x188] sm:$0xff] %v4615
      %4680 = vst [vmem:[%s285 + $0x190] sm:$0xff] %v4616
      %4681 = vst [vmem:[%s285 + $0x198] sm:$0xff] %v4617
      %4682 = vst [vmem:[%s285 + $0x1a0] sm:$0xff] %v4618
      %4683 = vst [vmem:[%s285 + $0x1a8] sm:$0xff] %v4619
      %4684 = vst [vmem:[%s285 + $0x1b0] sm:$0xff] %v4620
      %4685 = vst [vmem:[%s285 + $0x1b8] sm:$0xff] %v4621
      %4686 = vst [vmem:[%s285 + $0x1c0] sm:$0xff] %v4622
      %4687 = vst [vmem:[%s285 + $0x1c8] sm:$0xff] %v4623
      %4688 = vst [vmem:[%s285 + $0x1d0] sm:$0xff] %v4624
      %4689 = vst [vmem:[%s285 + $0x1d8] sm:$0xff] %v4625
      %4690 = vst [vmem:[%s285 + $0x1e0] sm:$0xff] %v4626
      %4691 = vst [vmem:[%s285 + $0x1e8] sm:$0xff] %v4627
      %4692 = vst [vmem:[%s285 + $0x1f0] sm:$0xff] %v4628
      %4693 = vst [vmem:[%s285 + $0x1f8] sm:$0xff] %v4629
      %s4694 = smul.u32 32, %s18
      %p4695 = scmp.lt.s32.totalorder %s4694, 63
      %s4696 = scalar_select %p4695, %s4694, 63
      %s4697 = smul.addr %s4696, 2
      %s4698 = smul.addr %s4697, 8
      %s4699 = scalar_lea.vmem %s7, %s4698
      // Predicated region
      $region49: #{positionwise_feed_forward.1} parent=47 // pred_check
        %p4700 = pneg %p188
      $region50: #{positionwise_feed_forward.1} parent=47 // pred_check_branch
        %4702 = sbr.rel (%p4700) target = $region52
      $region51: #{positionwise_feed_forward.1} parent=47 // pred_region
        %s4703 = smul.u32 32, %s18
      $region52: #{positionwise_feed_forward.1} parent=47 // pred_fallthru
        _
    $region48: #{positionwise_feed_forward.1} parent=5 // pred_fallthru
      _
    %p4704 = scmp.le.s32.totalorder 2, %s13
    // Predicated region
    $region53: #{positionwise_feed_forward.1} parent=5 // pred_check
      %p4705 = pneg %p4704
    $region54: #{positionwise_feed_forward.1} parent=5 // pred_check_branch
      %4707 = sbr.rel (%p4705) target = $region56
    $region55: #{positionwise_feed_forward.1} parent=5 // pred_region
      %s4708 = ssub.s32 %s13, 2
      // Predicated region
      $region57: #{positionwise_feed_forward.1} parent=55 // pred_check
        %p4709 = pneg %p194
      $region58: #{positionwise_feed_forward.1} parent=55 // pred_check_branch
        %4711 = sbr.rel (%p4709) target = $region60
      $region59: #{positionwise_feed_forward.1} parent=55 // pred_region
        %s4712 = smul.u32 32, %s19
        %p4713 = scmp.lt.s32.totalorder %s4712, 63
        %s4714 = scalar_select %p4713, %s4712, 63
        %s4715 = smul.addr %s4714, 2
        %s4716 = smul.addr %s4715, 8
        %s4717 = scalar_lea.vmem %s7, %s4716
      $region60: #{positionwise_feed_forward.1} parent=55 // pred_fallthru
        _
    $region56: #{positionwise_feed_forward.1} parent=5 // pred_fallthru
      _
  $region6: #{positionwise_feed_forward.1} parent=0 // loop_footer
    %s17 = sadd.s32 1, %s13
  $region7: #{positionwise_feed_forward.1} parent=0 // loop_footer_branch
    %12 = sbr.rel target = $region3
  $region8: #{positionwise_feed_forward.1} parent=0 // loop_exit
    _

</llo_original>
